<compile_context>
chip_gen: v7x
topology: tpu7x:2x2x1
jax: 0.10.0
libtpu: 0.0.40
codegen_flags: <defaults>
</compile_context>

<pallas_src>
import functools
import math

import jax
import jax.numpy as jnp
from jax.experimental import pallas as pl
from jax.experimental.pallas import tpu as pltpu

_BF16 = jnp.bfloat16


# ---------------------------------------------------------------------------
# In-kernel helpers
# ---------------------------------------------------------------------------

def _mm(a, w):
    """MXU matmul: bf16 operands, f32 accumulation."""
    return jnp.dot(a.astype(_BF16), w.astype(_BF16),
                   preferred_element_type=jnp.float32)


def _mm_nt(a, b):
    """a @ b.T without materializing the transpose (contract last dims)."""
    return jax.lax.dot_general(
        a.astype(_BF16), b.astype(_BF16),
        dimension_numbers=(((1,), (1,)), ((), ())),
        preferred_element_type=jnp.float32)


def _layernorm(x, g, b, eps):
    x = x.astype(jnp.float32)
    mu = jnp.mean(x, axis=-1, keepdims=True)
    var = jnp.mean((x - mu) ** 2, axis=-1, keepdims=True)
    return (x - mu) * jax.lax.rsqrt(var + eps) * g + b


# ---------------------------------------------------------------------------
# Fused forward kernel (one grid step == one batch element)
# ---------------------------------------------------------------------------

def _dino_fused_kernel(
        x_ref, pos_ref,
        pw_ref, pb_ref,
        ln1g_ref, ln1b_ref,
        wq_ref, bq_ref, wk_ref, bk_ref, wv_ref, bv_ref,
        wo_ref, bo_ref,
        ln2g_ref, ln2b_ref,
        w1_ref, b1_ref, w2_ref, b2_ref,
        c1w_ref, c1b_ref, c2aw_ref, c2ab_ref, c2bw_ref, c2bb_ref,
        o_ref,
        *, num_heads, eps):
    # -- patch embedding (Conv2d(C,D,P,P) as matmul) + pos-embed (folded) --
    patches = x_ref[0]                                       # (N, C*P*P) f32
    tok = _mm(patches, pw_ref[...]) + pb_ref[...] + pos_ref[...]   # (N, D)

    # -- attention block (pre-LN), per-head weight slices, proj + residual --
    y = _layernorm(tok, ln1g_ref[...], ln1b_ref[...], eps)
    proj_acc = None
    for h in range(num_heads):                    # static unroll (nh small)
        q = _mm(y, wq_ref[h]) + bq_ref[h]         # 1/sqrt(hd) folded into Wq
        k = _mm(y, wk_ref[h]) + bk_ref[h]
        v = _mm(y, wv_ref[h]) + bv_ref[h]
        s = _mm_nt(q, k)                          # (N, N) f32
        s = s - jnp.max(s, axis=-1, keepdims=True)
        p = jnp.exp(s)
        inv_l = pl.reciprocal(jnp.sum(p, axis=-1, keepdims=True), approx=True)
        o_h = _mm(p, v) * inv_l                   # (N, hd) f32
        contrib = _mm(o_h, wo_ref[h])             # per-head slice of proj
        proj_acc = contrib if proj_acc is None else proj_acc + contrib
    tok = tok + proj_acc + bo_ref[...]

    # -- MLP block (pre-LN) + residual --
    y2 = _layernorm(tok, ln2g_ref[...], ln2b_ref[...], eps)
    hdn = _mm(y2, w1_ref[...]) + b1_ref[...]
    # tanh-approx GELU (PyTorch nn.GELU default is erf-exact; ~1e-3 delta).
    c = math.sqrt(2.0 / math.pi)
    hdn = 0.5 * hdn * (1.0 + jnp.tanh(c * (hdn + 0.044715 * hdn * hdn * hdn)))
    tok = tok + _mm(hdn, w2_ref[...]) + b2_ref[...]

    # -- STEGO segmentation head: Conv1x1 linear + [Conv1x1, ReLU, Conv1x1] --
    lin = _mm(tok, c1w_ref[...]) + c1b_ref[...]
    hcl = jnp.maximum(_mm(tok, c2aw_ref[...]) + c2ab_ref[...], 0.0)
    nl = _mm(hcl, c2bw_ref[...]) + c2bb_ref[...]
    code = lin + nl                                           # (N, CODE) f32

    # Lane-dense store: tokens (large dim at real scale) on the lane axis.
    o_ref[0] = code.T.astype(o_ref.dtype)                     # (CODE, N)


# ---------------------------------------------------------------------------
# Wrapper: single fused pallas_call, grid over batch
# ---------------------------------------------------------------------------

def dino_with_lora_forward(x_nchw, kp):
    B, C, H, W = x_nchw.shape
    P = kp["patch_size"]
    D = kp["dim"]
    nh = kp["num_heads"]
    hd = D // nh
    hg, wg = H // P, W // P
    N = hg * wg
    CPP = C * P * P
    Hm = kp["fc1_w"].shape[1]
    CODE = kp["c1_w"].shape[1]

    # im2col patchification (single XLA pass over the input image).
    patches = x_nchw.reshape(B, C, hg, P, wg, P)
    patches = patches.transpose(0, 2, 4, 1, 3, 5).reshape(B, N, CPP)

    def resident(shape):
        # Full-array block with a constant index_map -> stays in VMEM across
        # the batch grid (weights are DMA'd once, not per grid step).
        nd = len(shape)
        return pl.BlockSpec(shape, lambda b, _nd=nd: (0,) * _nd)

    in_specs = [
        pl.BlockSpec((1, N, CPP), lambda b: (b, 0, 0)),   # patches (streamed)
        resident((N, D)),                                 # pos embed
        resident((CPP, D)), resident((1, D)),             # patch w / b
        resident((1, D)), resident((1, D)),               # ln1 g / b
        resident((nh, D, hd)), resident((nh, 1, hd)),     # Wq / bq (pre-scaled)
        resident((nh, D, hd)), resident((nh, 1, hd)),     # Wk / bk
        resident((nh, D, hd)), resident((nh, 1, hd)),     # Wv / bv
        resident((nh, hd, D)), resident((1, D)),          # Wproj / bproj
        resident((1, D)), resident((1, D)),               # ln2 g / b
        resident((D, Hm)), resident((1, Hm)),             # fc1
        resident((Hm, D)), resident((1, D)),              # fc2
        resident((D, CODE)), resident((1, CODE)),         # seg linear
        resident((D, D)), resident((1, D)),               # seg nonlinear a
        resident((D, CODE)), resident((1, CODE)),         # seg nonlinear b
    ]
    out_spec = pl.BlockSpec((1, CODE, N), lambda b: (b, 0, 0))

    code = pl.pallas_call(
        functools.partial(_dino_fused_kernel, num_heads=nh, eps=1e-6),
        out_shape=jax.ShapeDtypeStruct((B, CODE, N), jnp.float32),
        grid=(B,),
        in_specs=in_specs,
        out_specs=out_spec,
        compiler_params=pltpu.CompilerParams(
            dimension_semantics=("parallel",),
            vmem_limit_bytes=64 * 1024 * 1024),
    )(patches, kp["pos"],
      kp["patch_w"], kp["patch_b"],
      kp["ln1_g"], kp["ln1_b"],
      kp["wq"], kp["bq"], kp["wk"], kp["bk"], kp["wv"], kp["bv"],
      kp["wo"], kp["bo"],
      kp["ln2_g"], kp["ln2_b"],
      kp["fc1_w"], kp["fc1_b"], kp["fc2_w"], kp["fc2_b"],
      kp["c1_w"], kp["c1_b"], kp["c2a_w"], kp["c2a_b"],
      kp["c2b_w"], kp["c2b_b"])

    # (B, CODE, N) -> (B, CODE, h, w): metadata-only reshape, already NCHW.
    return code.reshape(B, CODE, hg, wg)


# ---------------------------------------------------------------------------
# Parameter init (logical / PyTorch-like layout) and kernel-layout prep
# ---------------------------------------------------------------------------

def init_params(key, *, in_chans=3, patch_size=8, dim=32, num_heads=2,
                mlp_hidden=64, code_dim=16, n_tokens=4):
    ks = jax.random.split(key, 16)

    def nrm(k, shape, s=0.02):
        return s * jax.random.normal(k, shape, jnp.float32)

    D, Hm, CODE, P, C = dim, mlp_hidden, code_dim, patch_size, in_chans
    return dict(
        patch_size=P, dim=D, num_heads=num_heads,
        patch_w=nrm(ks[0], (C * P * P, D)), patch_b=jnp.zeros((D,), jnp.float32),
        pos_embed=nrm(ks[1], (n_tokens, D)),
        ln1_g=jnp.ones((D,), jnp.float32), ln1_b=jnp.zeros((D,), jnp.float32),
        qkv_w=nrm(ks[2], (D, 3 * D)), qkv_b=jnp.zeros((3 * D,), jnp.float32),
        proj_w=nrm(ks[3], (D, D)), proj_b=jnp.zeros((D,), jnp.float32),
        ln2_g=jnp.ones((D,), jnp.float32), ln2_b=jnp.zeros((D,), jnp.float32),
        fc1_w=nrm(ks[4], (D, Hm)), fc1_b=jnp.zeros((Hm,), jnp.float32),
        fc2_w=nrm(ks[5], (Hm, D)), fc2_b=jnp.zeros((D,), jnp.float32),
        c1_w=nrm(ks[6], (D, CODE)), c1_b=jnp.zeros((CODE,), jnp.float32),
        c2a_w=nrm(ks[7], (D, D)), c2a_b=jnp.zeros((D,), jnp.float32),
        c2b_w=nrm(ks[8], (D, CODE)), c2b_b=jnp.zeros((CODE,), jnp.float32),
    )


def prepare_params(p):
    """Split QKV/proj per head, fold the attention scale into Wq/bq, cast
    matmul weights to bf16, reshape biases/LN params to (1, dim) rows."""
    D = p["dim"]
    nh = p["num_heads"]
    hd = D // nh
    scale = 1.0 / math.sqrt(hd)

    def heads_in(wcols, s=1.0):          # (D, D) -> (nh, D, hd)
        return (wcols * s).reshape(D, nh, hd).transpose(1, 0, 2)

    def heads_b(bcols, s=1.0):           # (D,) -> (nh, 1, hd)
        return (bcols * s).reshape(nh, 1, hd)

    qkv_w, qkv_b = p["qkv_w"], p["qkv_b"]
    bf = lambda a: a.astype(_BF16)
    row = lambda a: a.reshape(1, -1)

    return dict(
        patch_size=p["patch_size"], dim=D, num_heads=nh,
        pos=p["pos_embed"],
        patch_w=bf(p["patch_w"]), patch_b=row(p["patch_b"]),
        ln1_g=row(p["ln1_g"]), ln1_b=row(p["ln1_b"]),
        wq=bf(heads_in(qkv_w[:, 0:D], scale)), bq=heads_b(qkv_b[0:D], scale),
        wk=bf(heads_in(qkv_w[:, D:2 * D])),    bk=heads_b(qkv_b[D:2 * D]),
        wv=bf(heads_in(qkv_w[:, 2 * D:3 * D])), bv=heads_b(qkv_b[2 * D:3 * D]),
        wo=bf(p["proj_w"].reshape(nh, hd, D)), bo=row(p["proj_b"]),
        ln2_g=row(p["ln2_g"]), ln2_b=row(p["ln2_b"]),
        fc1_w=bf(p["fc1_w"]), fc1_b=row(p["fc1_b"]),
        fc2_w=bf(p["fc2_w"]), fc2_b=row(p["fc2_b"]),
        c1_w=bf(p["c1_w"]), c1_b=row(p["c1_b"]),
        c2a_w=bf(p["c2a_w"]), c2a_b=row(p["c2a_b"]),
        c2b_w=bf(p["c2b_w"]), c2b_b=row(p["c2b_b"]),
    )


if __name__ == "__main__":
    key = jax.random.PRNGKey(0)
    k_param, k_x = jax.random.split(key)
    params = init_params(k_param)
    kp = prepare_params(params)

    x = jax.random.normal(k_x, (2, 3, 16, 16), jnp.float32)  # NCHW input

    fwd = jax.jit(lambda xx: dino_with_lora_forward(xx, kp))
    code = fwd(x)
    jax.block_until_ready(code)
    assert code.shape == (2, 16, 2, 2), code.shape
    print("KERNEL_OK")
</pallas_src>

<mosaic_0001>
module attributes {stable_mosaic.version = 11 : i64} {
  func.func @_dino_fused_kernel(%arg0: i32, %arg1: memref<1x4x192xf32, #tpu.memory_space<vmem>>, %arg2: memref<4x32xf32, #tpu.memory_space<vmem>>, %arg3: memref<192x32xbf16, #tpu.memory_space<vmem>>, %arg4: memref<1x32xf32, #tpu.memory_space<vmem>>, %arg5: memref<1x32xf32, #tpu.memory_space<vmem>>, %arg6: memref<1x32xf32, #tpu.memory_space<vmem>>, %arg7: memref<2x32x16xbf16, #tpu.memory_space<vmem>>, %arg8: memref<2x1x16xf32, #tpu.memory_space<vmem>>, %arg9: memref<2x32x16xbf16, #tpu.memory_space<vmem>>, %arg10: memref<2x1x16xf32, #tpu.memory_space<vmem>>, %arg11: memref<2x32x16xbf16, #tpu.memory_space<vmem>>, %arg12: memref<2x1x16xf32, #tpu.memory_space<vmem>>, %arg13: memref<2x16x32xbf16, #tpu.memory_space<vmem>>, %arg14: memref<1x32xf32, #tpu.memory_space<vmem>>, %arg15: memref<1x32xf32, #tpu.memory_space<vmem>>, %arg16: memref<1x32xf32, #tpu.memory_space<vmem>>, %arg17: memref<32x64xbf16, #tpu.memory_space<vmem>>, %arg18: memref<1x64xf32, #tpu.memory_space<vmem>>, %arg19: memref<64x32xbf16, #tpu.memory_space<vmem>>, %arg20: memref<1x32xf32, #tpu.memory_space<vmem>>, %arg21: memref<32x16xbf16, #tpu.memory_space<vmem>>, %arg22: memref<1x16xf32, #tpu.memory_space<vmem>>, %arg23: memref<32x32xbf16, #tpu.memory_space<vmem>>, %arg24: memref<1x32xf32, #tpu.memory_space<vmem>>, %arg25: memref<32x16xbf16, #tpu.memory_space<vmem>>, %arg26: memref<1x16xf32, #tpu.memory_space<vmem>>, %arg27: memref<1x16x4xf32, #tpu.memory_space<vmem>>) attributes {dimension_semantics = [#tpu.dimension_semantics<parallel>], iteration_bounds = array<i64: 2>, scalar_prefetch = 0 : i64, scratch_operands = 0 : i64, tpu.core_type = #tpu.core_type<tc>, window_params = [{transform_indices = @transform_0, window_bounds = array<i64: 1, 4, 192>}, {pipeline_mode = #tpu.pipeline_mode<synchronous>, transform_indices = @transform_1, window_bounds = array<i64: 4, 32>}, {pipeline_mode = #tpu.pipeline_mode<synchronous>, transform_indices = @transform_2, window_bounds = array<i64: 192, 32>}, {pipeline_mode = #tpu.pipeline_mode<synchronous>, transform_indices = @transform_3, window_bounds = array<i64: 1, 32>}, {pipeline_mode = #tpu.pipeline_mode<synchronous>, transform_indices = @transform_4, window_bounds = array<i64: 1, 32>}, {pipeline_mode = #tpu.pipeline_mode<synchronous>, transform_indices = @transform_5, window_bounds = array<i64: 1, 32>}, {pipeline_mode = #tpu.pipeline_mode<synchronous>, transform_indices = @transform_6, window_bounds = array<i64: 2, 32, 16>}, {pipeline_mode = #tpu.pipeline_mode<synchronous>, transform_indices = @transform_7, window_bounds = array<i64: 2, 1, 16>}, {pipeline_mode = #tpu.pipeline_mode<synchronous>, transform_indices = @transform_8, window_bounds = array<i64: 2, 32, 16>}, {pipeline_mode = #tpu.pipeline_mode<synchronous>, transform_indices = @transform_9, window_bounds = array<i64: 2, 1, 16>}, {pipeline_mode = #tpu.pipeline_mode<synchronous>, transform_indices = @transform_10, window_bounds = array<i64: 2, 32, 16>}, {pipeline_mode = #tpu.pipeline_mode<synchronous>, transform_indices = @transform_11, window_bounds = array<i64: 2, 1, 16>}, {pipeline_mode = #tpu.pipeline_mode<synchronous>, transform_indices = @transform_12, window_bounds = array<i64: 2, 16, 32>}, {pipeline_mode = #tpu.pipeline_mode<synchronous>, transform_indices = @transform_13, window_bounds = array<i64: 1, 32>}, {pipeline_mode = #tpu.pipeline_mode<synchronous>, transform_indices = @transform_14, window_bounds = array<i64: 1, 32>}, {pipeline_mode = #tpu.pipeline_mode<synchronous>, transform_indices = @transform_15, window_bounds = array<i64: 1, 32>}, {pipeline_mode = #tpu.pipeline_mode<synchronous>, transform_indices = @transform_16, window_bounds = array<i64: 32, 64>}, {pipeline_mode = #tpu.pipeline_mode<synchronous>, transform_indices = @transform_17, window_bounds = array<i64: 1, 64>}, {pipeline_mode = #tpu.pipeline_mode<synchronous>, transform_indices = @transform_18, window_bounds = array<i64: 64, 32>}, {pipeline_mode = #tpu.pipeline_mode<synchronous>, transform_indices = @transform_19, window_bounds = array<i64: 1, 32>}, {pipeline_mode = #tpu.pipeline_mode<synchronous>, transform_indices = @transform_20, window_bounds = array<i64: 32, 16>}, {pipeline_mode = #tpu.pipeline_mode<synchronous>, transform_indices = @transform_21, window_bounds = array<i64: 1, 16>}, {pipeline_mode = #tpu.pipeline_mode<synchronous>, transform_indices = @transform_22, window_bounds = array<i64: 32, 32>}, {pipeline_mode = #tpu.pipeline_mode<synchronous>, transform_indices = @transform_23, window_bounds = array<i64: 1, 32>}, {pipeline_mode = #tpu.pipeline_mode<synchronous>, transform_indices = @transform_24, window_bounds = array<i64: 32, 16>}, {pipeline_mode = #tpu.pipeline_mode<synchronous>, transform_indices = @transform_25, window_bounds = array<i64: 1, 16>}, {transform_indices = @transform_26, window_bounds = array<i64: 1, 16, 4>}]} {
    %c0 = arith.constant 0 : index
    %c0_0 = arith.constant 0 : index
    %c0_1 = arith.constant 0 : index
    %0 = vector.load %arg1[%c0, %c0_0, %c0_1] : memref<1x4x192xf32, #tpu.memory_space<vmem>>, vector<1x4x192xf32>
    %1 = vector.shape_cast %0 : vector<1x4x192xf32> to vector<4x192xf32>
    %c0_2 = arith.constant 0 : index
    %c0_3 = arith.constant 0 : index
    %2 = vector.load %arg3[%c0_2, %c0_3] : memref<192x32xbf16, #tpu.memory_space<vmem>>, vector<192x32xbf16>
    %3 = arith.truncf %1 : vector<4x192xf32> to vector<4x192xbf16>
    %cst = arith.constant dense<0.000000e+00> : vector<4x32xf32>
    %4 = tpu.matmul %3, %2, %cst {dimension_numbers = #tpu.dot_dimension_numbers<[1], [0], [0], [1], [0, 0, 1, 1], [], []>} : vector<4x192xbf16>, vector<192x32xbf16>, vector<4x32xf32> -> vector<4x32xf32>
    %c0_4 = arith.constant 0 : index
    %c0_5 = arith.constant 0 : index
    %5 = vector.load %arg4[%c0_4, %c0_5] : memref<1x32xf32, #tpu.memory_space<vmem>>, vector<1x32xf32>
    %6 = vector.broadcast %5 : vector<1x32xf32> to vector<4x32xf32>
    %7 = arith.addf %4, %6 : vector<4x32xf32>
    %c0_6 = arith.constant 0 : index
    %c0_7 = arith.constant 0 : index
    %8 = vector.load %arg2[%c0_6, %c0_7] : memref<4x32xf32, #tpu.memory_space<vmem>>, vector<4x32xf32>
    %9 = arith.addf %7, %8 : vector<4x32xf32>
    %c0_8 = arith.constant 0 : index
    %c0_9 = arith.constant 0 : index
    %10 = vector.load %arg5[%c0_8, %c0_9] : memref<1x32xf32, #tpu.memory_space<vmem>>, vector<1x32xf32>
    %c0_10 = arith.constant 0 : index
    %c0_11 = arith.constant 0 : index
    %11 = vector.load %arg6[%c0_10, %c0_11] : memref<1x32xf32, #tpu.memory_space<vmem>>, vector<1x32xf32>
    %cst_12 = arith.constant dense<0.000000e+00> : vector<4xf32>
    %12 = vector.multi_reduction <add>, %9, %cst_12 [1] : vector<4x32xf32> to vector<4xf32>
    %13 = vector.shape_cast %12 : vector<4xf32> to vector<4x1xf32>
    %cst_13 = arith.constant 3.200000e+01 : f32
    %14 = vector.broadcast %cst_13 : f32 to vector<4x1xf32>
    %15 = arith.divf %13, %14 : vector<4x1xf32>
    %16 = vector.broadcast %15 : vector<4x1xf32> to vector<4x32xf32>
    %17 = arith.subf %9, %16 : vector<4x32xf32>
    %18 = arith.mulf %17, %17 : vector<4x32xf32>
    %cst_14 = arith.constant dense<0.000000e+00> : vector<4xf32>
    %19 = vector.multi_reduction <add>, %18, %cst_14 [1] : vector<4x32xf32> to vector<4xf32>
    %20 = vector.shape_cast %19 : vector<4xf32> to vector<4x1xf32>
    %cst_15 = arith.constant 3.200000e+01 : f32
    %21 = vector.broadcast %cst_15 : f32 to vector<4x1xf32>
    %22 = arith.divf %20, %21 : vector<4x1xf32>
    %23 = vector.broadcast %15 : vector<4x1xf32> to vector<4x32xf32>
    %24 = arith.subf %9, %23 : vector<4x32xf32>
    %cst_16 = arith.constant 9.99999997E-7 : f32
    %25 = vector.broadcast %cst_16 : f32 to vector<4x1xf32>
    %26 = arith.addf %22, %25 : vector<4x1xf32>
    %27 = math.rsqrt %26 : vector<4x1xf32>
    %28 = vector.broadcast %27 : vector<4x1xf32> to vector<4x32xf32>
    %29 = arith.mulf %24, %28 : vector<4x32xf32>
    %30 = vector.broadcast %10 : vector<1x32xf32> to vector<4x32xf32>
    %31 = arith.mulf %29, %30 : vector<4x32xf32>
    %32 = vector.broadcast %11 : vector<1x32xf32> to vector<4x32xf32>
    %33 = arith.addf %31, %32 : vector<4x32xf32>
    %c0_17 = arith.constant 0 : index
    %c0_18 = arith.constant 0 : index
    %c0_19 = arith.constant 0 : index
    %34 = vector.load %arg7[%c0_17, %c0_18, %c0_19] : memref<2x32x16xbf16, #tpu.memory_space<vmem>>, vector<1x32x16xbf16>
    %35 = vector.shape_cast %34 : vector<1x32x16xbf16> to vector<32x16xbf16>
    %36 = arith.truncf %33 : vector<4x32xf32> to vector<4x32xbf16>
    %cst_20 = arith.constant dense<0.000000e+00> : vector<4x16xf32>
    %37 = tpu.matmul %36, %35, %cst_20 {dimension_numbers = #tpu.dot_dimension_numbers<[1], [0], [0], [1], [0, 0, 1, 1], [], []>} : vector<4x32xbf16>, vector<32x16xbf16>, vector<4x16xf32> -> vector<4x16xf32>
    %c0_21 = arith.constant 0 : index
    %c0_22 = arith.constant 0 : index
    %c0_23 = arith.constant 0 : index
    %38 = vector.load %arg8[%c0_21, %c0_22, %c0_23] : memref<2x1x16xf32, #tpu.memory_space<vmem>>, vector<1x1x16xf32>
    %39 = vector.shape_cast %38 : vector<1x1x16xf32> to vector<1x16xf32>
    %40 = vector.broadcast %39 : vector<1x16xf32> to vector<4x16xf32>
    %41 = arith.addf %37, %40 : vector<4x16xf32>
    %c0_24 = arith.constant 0 : index
    %c0_25 = arith.constant 0 : index
    %c0_26 = arith.constant 0 : index
    %42 = vector.load %arg9[%c0_24, %c0_25, %c0_26] : memref<2x32x16xbf16, #tpu.memory_space<vmem>>, vector<1x32x16xbf16>
    %43 = vector.shape_cast %42 : vector<1x32x16xbf16> to vector<32x16xbf16>
    %44 = arith.truncf %33 : vector<4x32xf32> to vector<4x32xbf16>
    %cst_27 = arith.constant dense<0.000000e+00> : vector<4x16xf32>
    %45 = tpu.matmul %44, %43, %cst_27 {dimension_numbers = #tpu.dot_dimension_numbers<[1], [0], [0], [1], [0, 0, 1, 1], [], []>} : vector<4x32xbf16>, vector<32x16xbf16>, vector<4x16xf32> -> vector<4x16xf32>
    %c0_28 = arith.constant 0 : index
    %c0_29 = arith.constant 0 : index
    %c0_30 = arith.constant 0 : index
    %46 = vector.load %arg10[%c0_28, %c0_29, %c0_30] : memref<2x1x16xf32, #tpu.memory_space<vmem>>, vector<1x1x16xf32>
    %47 = vector.shape_cast %46 : vector<1x1x16xf32> to vector<1x16xf32>
    %48 = vector.broadcast %47 : vector<1x16xf32> to vector<4x16xf32>
    %49 = arith.addf %45, %48 : vector<4x16xf32>
    %c0_31 = arith.constant 0 : index
    %c0_32 = arith.constant 0 : index
    %c0_33 = arith.constant 0 : index
    %50 = vector.load %arg11[%c0_31, %c0_32, %c0_33] : memref<2x32x16xbf16, #tpu.memory_space<vmem>>, vector<1x32x16xbf16>
    %51 = vector.shape_cast %50 : vector<1x32x16xbf16> to vector<32x16xbf16>
    %52 = arith.truncf %33 : vector<4x32xf32> to vector<4x32xbf16>
    %cst_34 = arith.constant dense<0.000000e+00> : vector<4x16xf32>
    %53 = tpu.matmul %52, %51, %cst_34 {dimension_numbers = #tpu.dot_dimension_numbers<[1], [0], [0], [1], [0, 0, 1, 1], [], []>} : vector<4x32xbf16>, vector<32x16xbf16>, vector<4x16xf32> -> vector<4x16xf32>
    %c0_35 = arith.constant 0 : index
    %c0_36 = arith.constant 0 : index
    %c0_37 = arith.constant 0 : index
    %54 = vector.load %arg12[%c0_35, %c0_36, %c0_37] : memref<2x1x16xf32, #tpu.memory_space<vmem>>, vector<1x1x16xf32>
    %55 = vector.shape_cast %54 : vector<1x1x16xf32> to vector<1x16xf32>
    %56 = vector.broadcast %55 : vector<1x16xf32> to vector<4x16xf32>
    %57 = arith.addf %53, %56 : vector<4x16xf32>
    %58 = arith.truncf %41 : vector<4x16xf32> to vector<4x16xbf16>
    %59 = arith.truncf %49 : vector<4x16xf32> to vector<4x16xbf16>
    %cst_38 = arith.constant dense<0.000000e+00> : vector<4x4xf32>
    %60 = tpu.matmul %58, %59, %cst_38 {dimension_numbers = #tpu.dot_dimension_numbers<[1], [1], [0], [0], [0, 0, 1, 0], [], []>} : vector<4x16xbf16>, vector<4x16xbf16>, vector<4x4xf32> -> vector<4x4xf32>
    %cst_39 = arith.constant dense<0xFF800000> : vector<4xf32>
    %61 = vector.multi_reduction <maximumf>, %60, %cst_39 [1] : vector<4x4xf32> to vector<4xf32>
    %62 = vector.shape_cast %61 : vector<4xf32> to vector<4x1xf32>
    %63 = vector.broadcast %62 : vector<4x1xf32> to vector<4x4xf32>
    %64 = arith.subf %60, %63 : vector<4x4xf32>
    %65 = math.exp %64 : vector<4x4xf32>
    %cst_40 = arith.constant dense<0.000000e+00> : vector<4xf32>
    %66 = vector.multi_reduction <add>, %65, %cst_40 [1] : vector<4x4xf32> to vector<4xf32>
    %67 = vector.shape_cast %66 : vector<4xf32> to vector<4x1xf32>
    %68 = tpu.reciprocal %67 {approx = true} : vector<4x1xf32> -> vector<4x1xf32>
    %69 = arith.truncf %65 : vector<4x4xf32> to vector<4x4xbf16>
    %70 = arith.truncf %57 : vector<4x16xf32> to vector<4x16xbf16>
    %cst_41 = arith.constant dense<0.000000e+00> : vector<4x16xf32>
    %71 = tpu.matmul %69, %70, %cst_41 {dimension_numbers = #tpu.dot_dimension_numbers<[1], [0], [0], [1], [0, 0, 1, 1], [], []>} : vector<4x4xbf16>, vector<4x16xbf16>, vector<4x16xf32> -> vector<4x16xf32>
    %72 = vector.broadcast %68 : vector<4x1xf32> to vector<4x16xf32>
    %73 = arith.mulf %71, %72 : vector<4x16xf32>
    %c0_42 = arith.constant 0 : index
    %c0_43 = arith.constant 0 : index
    %c0_44 = arith.constant 0 : index
    %74 = vector.load %arg13[%c0_42, %c0_43, %c0_44] : memref<2x16x32xbf16, #tpu.memory_space<vmem>>, vector<1x16x32xbf16>
    %75 = vector.shape_cast %74 : vector<1x16x32xbf16> to vector<16x32xbf16>
    %76 = arith.truncf %73 : vector<4x16xf32> to vector<4x16xbf16>
    %cst_45 = arith.constant dense<0.000000e+00> : vector<4x32xf32>
    %77 = tpu.matmul %76, %75, %cst_45 {dimension_numbers = #tpu.dot_dimension_numbers<[1], [0], [0], [1], [0, 0, 1, 1], [], []>} : vector<4x16xbf16>, vector<16x32xbf16>, vector<4x32xf32> -> vector<4x32xf32>
    %c1 = arith.constant 1 : index
    %c0_46 = arith.constant 0 : index
    %c0_47 = arith.constant 0 : index
    %78 = vector.load %arg7[%c1, %c0_46, %c0_47] : memref<2x32x16xbf16, #tpu.memory_space<vmem>>, vector<1x32x16xbf16>
    %79 = vector.shape_cast %78 : vector<1x32x16xbf16> to vector<32x16xbf16>
    %80 = arith.truncf %33 : vector<4x32xf32> to vector<4x32xbf16>
    %cst_48 = arith.constant dense<0.000000e+00> : vector<4x16xf32>
    %81 = tpu.matmul %80, %79, %cst_48 {dimension_numbers = #tpu.dot_dimension_numbers<[1], [0], [0], [1], [0, 0, 1, 1], [], []>} : vector<4x32xbf16>, vector<32x16xbf16>, vector<4x16xf32> -> vector<4x16xf32>
    %c1_49 = arith.constant 1 : index
    %c0_50 = arith.constant 0 : index
    %c0_51 = arith.constant 0 : index
    %82 = vector.load %arg8[%c1_49, %c0_50, %c0_51] : memref<2x1x16xf32, #tpu.memory_space<vmem>>, vector<1x1x16xf32>
    %83 = vector.shape_cast %82 : vector<1x1x16xf32> to vector<1x16xf32>
    %84 = vector.broadcast %83 : vector<1x16xf32> to vector<4x16xf32>
    %85 = arith.addf %81, %84 : vector<4x16xf32>
    %c1_52 = arith.constant 1 : index
    %c0_53 = arith.constant 0 : index
    %c0_54 = arith.constant 0 : index
    %86 = vector.load %arg9[%c1_52, %c0_53, %c0_54] : memref<2x32x16xbf16, #tpu.memory_space<vmem>>, vector<1x32x16xbf16>
    %87 = vector.shape_cast %86 : vector<1x32x16xbf16> to vector<32x16xbf16>
    %88 = arith.truncf %33 : vector<4x32xf32> to vector<4x32xbf16>
    %cst_55 = arith.constant dense<0.000000e+00> : vector<4x16xf32>
    %89 = tpu.matmul %88, %87, %cst_55 {dimension_numbers = #tpu.dot_dimension_numbers<[1], [0], [0], [1], [0, 0, 1, 1], [], []>} : vector<4x32xbf16>, vector<32x16xbf16>, vector<4x16xf32> -> vector<4x16xf32>
    %c1_56 = arith.constant 1 : index
    %c0_57 = arith.constant 0 : index
    %c0_58 = arith.constant 0 : index
    %90 = vector.load %arg10[%c1_56, %c0_57, %c0_58] : memref<2x1x16xf32, #tpu.memory_space<vmem>>, vector<1x1x16xf32>
    %91 = vector.shape_cast %90 : vector<1x1x16xf32> to vector<1x16xf32>
    %92 = vector.broadcast %91 : vector<1x16xf32> to vector<4x16xf32>
    %93 = arith.addf %89, %92 : vector<4x16xf32>
    %c1_59 = arith.constant 1 : index
    %c0_60 = arith.constant 0 : index
    %c0_61 = arith.constant 0 : index
    %94 = vector.load %arg11[%c1_59, %c0_60, %c0_61] : memref<2x32x16xbf16, #tpu.memory_space<vmem>>, vector<1x32x16xbf16>
    %95 = vector.shape_cast %94 : vector<1x32x16xbf16> to vector<32x16xbf16>
    %96 = arith.truncf %33 : vector<4x32xf32> to vector<4x32xbf16>
    %cst_62 = arith.constant dense<0.000000e+00> : vector<4x16xf32>
    %97 = tpu.matmul %96, %95, %cst_62 {dimension_numbers = #tpu.dot_dimension_numbers<[1], [0], [0], [1], [0, 0, 1, 1], [], []>} : vector<4x32xbf16>, vector<32x16xbf16>, vector<4x16xf32> -> vector<4x16xf32>
    %c1_63 = arith.constant 1 : index
    %c0_64 = arith.constant 0 : index
    %c0_65 = arith.constant 0 : index
    %98 = vector.load %arg12[%c1_63, %c0_64, %c0_65] : memref<2x1x16xf32, #tpu.memory_space<vmem>>, vector<1x1x16xf32>
    %99 = vector.shape_cast %98 : vector<1x1x16xf32> to vector<1x16xf32>
    %100 = vector.broadcast %99 : vector<1x16xf32> to vector<4x16xf32>
    %101 = arith.addf %97, %100 : vector<4x16xf32>
    %102 = arith.truncf %85 : vector<4x16xf32> to vector<4x16xbf16>
    %103 = arith.truncf %93 : vector<4x16xf32> to vector<4x16xbf16>
    %cst_66 = arith.constant dense<0.000000e+00> : vector<4x4xf32>
    %104 = tpu.matmul %102, %103, %cst_66 {dimension_numbers = #tpu.dot_dimension_numbers<[1], [1], [0], [0], [0, 0, 1, 0], [], []>} : vector<4x16xbf16>, vector<4x16xbf16>, vector<4x4xf32> -> vector<4x4xf32>
    %cst_67 = arith.constant dense<0xFF800000> : vector<4xf32>
    %105 = vector.multi_reduction <maximumf>, %104, %cst_67 [1] : vector<4x4xf32> to vector<4xf32>
    %106 = vector.shape_cast %105 : vector<4xf32> to vector<4x1xf32>
    %107 = vector.broadcast %106 : vector<4x1xf32> to vector<4x4xf32>
    %108 = arith.subf %104, %107 : vector<4x4xf32>
    %109 = math.exp %108 : vector<4x4xf32>
    %cst_68 = arith.constant dense<0.000000e+00> : vector<4xf32>
    %110 = vector.multi_reduction <add>, %109, %cst_68 [1] : vector<4x4xf32> to vector<4xf32>
    %111 = vector.shape_cast %110 : vector<4xf32> to vector<4x1xf32>
    %112 = tpu.reciprocal %111 {approx = true} : vector<4x1xf32> -> vector<4x1xf32>
    %113 = arith.truncf %109 : vector<4x4xf32> to vector<4x4xbf16>
    %114 = arith.truncf %101 : vector<4x16xf32> to vector<4x16xbf16>
    %cst_69 = arith.constant dense<0.000000e+00> : vector<4x16xf32>
    %115 = tpu.matmul %113, %114, %cst_69 {dimension_numbers = #tpu.dot_dimension_numbers<[1], [0], [0], [1], [0, 0, 1, 1], [], []>} : vector<4x4xbf16>, vector<4x16xbf16>, vector<4x16xf32> -> vector<4x16xf32>
    %116 = vector.broadcast %112 : vector<4x1xf32> to vector<4x16xf32>
    %117 = arith.mulf %115, %116 : vector<4x16xf32>
    %c1_70 = arith.constant 1 : index
    %c0_71 = arith.constant 0 : index
    %c0_72 = arith.constant 0 : index
    %118 = vector.load %arg13[%c1_70, %c0_71, %c0_72] : memref<2x16x32xbf16, #tpu.memory_space<vmem>>, vector<1x16x32xbf16>
    %119 = vector.shape_cast %118 : vector<1x16x32xbf16> to vector<16x32xbf16>
    %120 = arith.truncf %117 : vector<4x16xf32> to vector<4x16xbf16>
    %cst_73 = arith.constant dense<0.000000e+00> : vector<4x32xf32>
    %121 = tpu.matmul %120, %119, %cst_73 {dimension_numbers = #tpu.dot_dimension_numbers<[1], [0], [0], [1], [0, 0, 1, 1], [], []>} : vector<4x16xbf16>, vector<16x32xbf16>, vector<4x32xf32> -> vector<4x32xf32>
    %122 = arith.addf %77, %121 : vector<4x32xf32>
    %123 = arith.addf %9, %122 : vector<4x32xf32>
    %c0_74 = arith.constant 0 : index
    %c0_75 = arith.constant 0 : index
    %124 = vector.load %arg14[%c0_74, %c0_75] : memref<1x32xf32, #tpu.memory_space<vmem>>, vector<1x32xf32>
    %125 = vector.broadcast %124 : vector<1x32xf32> to vector<4x32xf32>
    %126 = arith.addf %123, %125 : vector<4x32xf32>
    %c0_76 = arith.constant 0 : index
    %c0_77 = arith.constant 0 : index
    %127 = vector.load %arg15[%c0_76, %c0_77] : memref<1x32xf32, #tpu.memory_space<vmem>>, vector<1x32xf32>
    %c0_78 = arith.constant 0 : index
    %c0_79 = arith.constant 0 : index
    %128 = vector.load %arg16[%c0_78, %c0_79] : memref<1x32xf32, #tpu.memory_space<vmem>>, vector<1x32xf32>
    %cst_80 = arith.constant dense<0.000000e+00> : vector<4xf32>
    %129 = vector.multi_reduction <add>, %126, %cst_80 [1] : vector<4x32xf32> to vector<4xf32>
    %130 = vector.shape_cast %129 : vector<4xf32> to vector<4x1xf32>
    %cst_81 = arith.constant 3.200000e+01 : f32
    %131 = vector.broadcast %cst_81 : f32 to vector<4x1xf32>
    %132 = arith.divf %130, %131 : vector<4x1xf32>
    %133 = vector.broadcast %132 : vector<4x1xf32> to vector<4x32xf32>
    %134 = arith.subf %126, %133 : vector<4x32xf32>
    %135 = arith.mulf %134, %134 : vector<4x32xf32>
    %cst_82 = arith.constant dense<0.000000e+00> : vector<4xf32>
    %136 = vector.multi_reduction <add>, %135, %cst_82 [1] : vector<4x32xf32> to vector<4xf32>
    %137 = vector.shape_cast %136 : vector<4xf32> to vector<4x1xf32>
    %cst_83 = arith.constant 3.200000e+01 : f32
    %138 = vector.broadcast %cst_83 : f32 to vector<4x1xf32>
    %139 = arith.divf %137, %138 : vector<4x1xf32>
    %140 = vector.broadcast %132 : vector<4x1xf32> to vector<4x32xf32>
    %141 = arith.subf %126, %140 : vector<4x32xf32>
    %cst_84 = arith.constant 9.99999997E-7 : f32
    %142 = vector.broadcast %cst_84 : f32 to vector<4x1xf32>
    %143 = arith.addf %139, %142 : vector<4x1xf32>
    %144 = math.rsqrt %143 : vector<4x1xf32>
    %145 = vector.broadcast %144 : vector<4x1xf32> to vector<4x32xf32>
    %146 = arith.mulf %141, %145 : vector<4x32xf32>
    %147 = vector.broadcast %127 : vector<1x32xf32> to vector<4x32xf32>
    %148 = arith.mulf %146, %147 : vector<4x32xf32>
    %149 = vector.broadcast %128 : vector<1x32xf32> to vector<4x32xf32>
    %150 = arith.addf %148, %149 : vector<4x32xf32>
    %c0_85 = arith.constant 0 : index
    %c0_86 = arith.constant 0 : index
    %151 = vector.load %arg17[%c0_85, %c0_86] : memref<32x64xbf16, #tpu.memory_space<vmem>>, vector<32x64xbf16>
    %152 = arith.truncf %150 : vector<4x32xf32> to vector<4x32xbf16>
    %cst_87 = arith.constant dense<0.000000e+00> : vector<4x64xf32>
    %153 = tpu.matmul %152, %151, %cst_87 {dimension_numbers = #tpu.dot_dimension_numbers<[1], [0], [0], [1], [0, 0, 1, 1], [], []>} : vector<4x32xbf16>, vector<32x64xbf16>, vector<4x64xf32> -> vector<4x64xf32>
    %c0_88 = arith.constant 0 : index
    %c0_89 = arith.constant 0 : index
    %154 = vector.load %arg18[%c0_88, %c0_89] : memref<1x64xf32, #tpu.memory_space<vmem>>, vector<1x64xf32>
    %155 = vector.broadcast %154 : vector<1x64xf32> to vector<4x64xf32>
    %156 = arith.addf %153, %155 : vector<4x64xf32>
    %cst_90 = arith.constant 5.000000e-01 : f32
    %157 = vector.broadcast %cst_90 : f32 to vector<4x64xf32>
    %158 = arith.mulf %157, %156 : vector<4x64xf32>
    %cst_91 = arith.constant 4.471500e-02 : f32
    %159 = vector.broadcast %cst_91 : f32 to vector<4x64xf32>
    %160 = arith.mulf %159, %156 : vector<4x64xf32>
    %161 = arith.mulf %160, %156 : vector<4x64xf32>
    %162 = arith.mulf %161, %156 : vector<4x64xf32>
    %163 = arith.addf %156, %162 : vector<4x64xf32>
    %cst_92 = arith.constant 0.797884583 : f32
    %164 = vector.broadcast %cst_92 : f32 to vector<4x64xf32>
    %165 = arith.mulf %164, %163 : vector<4x64xf32>
    %166 = math.tanh %165 : vector<4x64xf32>
    %cst_93 = arith.constant 1.000000e+00 : f32
    %167 = vector.broadcast %cst_93 : f32 to vector<4x64xf32>
    %168 = arith.addf %167, %166 : vector<4x64xf32>
    %169 = arith.mulf %158, %168 : vector<4x64xf32>
    %c0_94 = arith.constant 0 : index
    %c0_95 = arith.constant 0 : index
    %170 = vector.load %arg19[%c0_94, %c0_95] : memref<64x32xbf16, #tpu.memory_space<vmem>>, vector<64x32xbf16>
    %171 = arith.truncf %169 : vector<4x64xf32> to vector<4x64xbf16>
    %cst_96 = arith.constant dense<0.000000e+00> : vector<4x32xf32>
    %172 = tpu.matmul %171, %170, %cst_96 {dimension_numbers = #tpu.dot_dimension_numbers<[1], [0], [0], [1], [0, 0, 1, 1], [], []>} : vector<4x64xbf16>, vector<64x32xbf16>, vector<4x32xf32> -> vector<4x32xf32>
    %173 = arith.addf %126, %172 : vector<4x32xf32>
    %c0_97 = arith.constant 0 : index
    %c0_98 = arith.constant 0 : index
    %174 = vector.load %arg20[%c0_97, %c0_98] : memref<1x32xf32, #tpu.memory_space<vmem>>, vector<1x32xf32>
    %175 = vector.broadcast %174 : vector<1x32xf32> to vector<4x32xf32>
    %176 = arith.addf %173, %175 : vector<4x32xf32>
    %c0_99 = arith.constant 0 : index
    %c0_100 = arith.constant 0 : index
    %177 = vector.load %arg21[%c0_99, %c0_100] : memref<32x16xbf16, #tpu.memory_space<vmem>>, vector<32x16xbf16>
    %178 = arith.truncf %176 : vector<4x32xf32> to vector<4x32xbf16>
    %cst_101 = arith.constant dense<0.000000e+00> : vector<4x16xf32>
    %179 = tpu.matmul %178, %177, %cst_101 {dimension_numbers = #tpu.dot_dimension_numbers<[1], [0], [0], [1], [0, 0, 1, 1], [], []>} : vector<4x32xbf16>, vector<32x16xbf16>, vector<4x16xf32> -> vector<4x16xf32>
    %c0_102 = arith.constant 0 : index
    %c0_103 = arith.constant 0 : index
    %180 = vector.load %arg22[%c0_102, %c0_103] : memref<1x16xf32, #tpu.memory_space<vmem>>, vector<1x16xf32>
    %181 = vector.broadcast %180 : vector<1x16xf32> to vector<4x16xf32>
    %182 = arith.addf %179, %181 : vector<4x16xf32>
    %c0_104 = arith.constant 0 : index
    %c0_105 = arith.constant 0 : index
    %183 = vector.load %arg23[%c0_104, %c0_105] : memref<32x32xbf16, #tpu.memory_space<vmem>>, vector<32x32xbf16>
    %184 = arith.truncf %176 : vector<4x32xf32> to vector<4x32xbf16>
    %cst_106 = arith.constant dense<0.000000e+00> : vector<4x32xf32>
    %185 = tpu.matmul %184, %183, %cst_106 {dimension_numbers = #tpu.dot_dimension_numbers<[1], [0], [0], [1], [0, 0, 1, 1], [], []>} : vector<4x32xbf16>, vector<32x32xbf16>, vector<4x32xf32> -> vector<4x32xf32>
    %c0_107 = arith.constant 0 : index
    %c0_108 = arith.constant 0 : index
    %186 = vector.load %arg24[%c0_107, %c0_108] : memref<1x32xf32, #tpu.memory_space<vmem>>, vector<1x32xf32>
    %187 = vector.broadcast %186 : vector<1x32xf32> to vector<4x32xf32>
    %188 = arith.addf %185, %187 : vector<4x32xf32>
    %cst_109 = arith.constant 0.000000e+00 : f32
    %189 = vector.broadcast %cst_109 : f32 to vector<4x32xf32>
    %190 = arith.maximumf %188, %189 : vector<4x32xf32>
    %c0_110 = arith.constant 0 : index
    %c0_111 = arith.constant 0 : index
    %191 = vector.load %arg25[%c0_110, %c0_111] : memref<32x16xbf16, #tpu.memory_space<vmem>>, vector<32x16xbf16>
    %192 = arith.truncf %190 : vector<4x32xf32> to vector<4x32xbf16>
    %cst_112 = arith.constant dense<0.000000e+00> : vector<4x16xf32>
    %193 = tpu.matmul %192, %191, %cst_112 {dimension_numbers = #tpu.dot_dimension_numbers<[1], [0], [0], [1], [0, 0, 1, 1], [], []>} : vector<4x32xbf16>, vector<32x16xbf16>, vector<4x16xf32> -> vector<4x16xf32>
    %c0_113 = arith.constant 0 : index
    %c0_114 = arith.constant 0 : index
    %194 = vector.load %arg26[%c0_113, %c0_114] : memref<1x16xf32, #tpu.memory_space<vmem>>, vector<1x16xf32>
    %195 = vector.broadcast %194 : vector<1x16xf32> to vector<4x16xf32>
    %196 = arith.addf %193, %195 : vector<4x16xf32>
    %197 = arith.addf %182, %196 : vector<4x16xf32>
    %198 = tpu.transpose %197, [1, 0] : vector<4x16xf32> -> vector<16x4xf32>
    %c0_115 = arith.constant 0 : index
    %c0_116 = arith.constant 0 : index
    %c0_117 = arith.constant 0 : index
    %199 = vector.load %arg27[%c0_115, %c0_116, %c0_117] : memref<1x16x4xf32, #tpu.memory_space<vmem>>, vector<1x16x4xf32>
    %200 = vector.shape_cast %199 : vector<1x16x4xf32> to vector<16x4xf32>
    %201 = vector.shape_cast %198 : vector<16x4xf32> to vector<1x16x4xf32>
    tpu.vector_store %arg27[%c0_115, %c0_116, %c0_117], %201 {strides = array<i32>} : memref<1x16x4xf32, #tpu.memory_space<vmem>>, vector<1x16x4xf32>,
    return
  }
  func.func @transform_0(%arg0: i32) -> (i32, i32, i32) {
    %c0_i32 = arith.constant 0 : i32
    %c0_i32_0 = arith.constant 0 : i32
    %c0_i32_1 = arith.constant 0 : i32
    return %arg0, %c0_i32, %c0_i32_0 : i32, i32, i32
  }
  func.func @transform_1(%arg0: i32) -> (i32, i32) {
    %c0_i32 = arith.constant 0 : i32
    %c0_i32_0 = arith.constant 0 : i32
    %c0_i32_1 = arith.constant 0 : i32
    return %c0_i32, %c0_i32_0 : i32, i32
  }
  func.func @transform_2(%arg0: i32) -> (i32, i32) {
    %c0_i32 = arith.constant 0 : i32
    %c0_i32_0 = arith.constant 0 : i32
    %c0_i32_1 = arith.constant 0 : i32
    return %c0_i32, %c0_i32_0 : i32, i32
  }
  func.func @transform_3(%arg0: i32) -> (i32, i32) {
    %c0_i32 = arith.constant 0 : i32
    %c0_i32_0 = arith.constant 0 : i32
    %c0_i32_1 = arith.constant 0 : i32
    return %c0_i32, %c0_i32_0 : i32, i32
  }
  func.func @transform_4(%arg0: i32) -> (i32, i32) {
    %c0_i32 = arith.constant 0 : i32
    %c0_i32_0 = arith.constant 0 : i32
    %c0_i32_1 = arith.constant 0 : i32
    return %c0_i32, %c0_i32_0 : i32, i32
  }
  func.func @transform_5(%arg0: i32) -> (i32, i32) {
    %c0_i32 = arith.constant 0 : i32
    %c0_i32_0 = arith.constant 0 : i32
    %c0_i32_1 = arith.constant 0 : i32
    return %c0_i32, %c0_i32_0 : i32, i32
  }
  func.func @transform_6(%arg0: i32) -> (i32, i32, i32) {
    %c0_i32 = arith.constant 0 : i32
    %c0_i32_0 = arith.constant 0 : i32
    %c0_i32_1 = arith.constant 0 : i32
    %c0_i32_2 = arith.constant 0 : i32
    return %c0_i32, %c0_i32_0, %c0_i32_1 : i32, i32, i32
  }
  func.func @transform_7(%arg0: i32) -> (i32, i32, i32) {
    %c0_i32 = arith.constant 0 : i32
    %c0_i32_0 = arith.constant 0 : i32
    %c0_i32_1 = arith.constant 0 : i32
    %c0_i32_2 = arith.constant 0 : i32
    return %c0_i32, %c0_i32_0, %c0_i32_1 : i32, i32, i32
  }
  func.func @transform_8(%arg0: i32) -> (i32, i32, i32) {
    %c0_i32 = arith.constant 0 : i32
    %c0_i32_0 = arith.constant 0 : i32
    %c0_i32_1 = arith.constant 0 : i32
    %c0_i32_2 = arith.constant 0 : i32
    return %c0_i32, %c0_i32_0, %c0_i32_1 : i32, i32, i32
  }
  func.func @transform_9(%arg0: i32) -> (i32, i32, i32) {
    %c0_i32 = arith.constant 0 : i32
    %c0_i32_0 = arith.constant 0 : i32
    %c0_i32_1 = arith.constant 0 : i32
    %c0_i32_2 = arith.constant 0 : i32
    return %c0_i32, %c0_i32_0, %c0_i32_1 : i32, i32, i32
  }
  func.func @transform_10(%arg0: i32) -> (i32, i32, i32) {
    %c0_i32 = arith.constant 0 : i32
    %c0_i32_0 = arith.constant 0 : i32
    %c0_i32_1 = arith.constant 0 : i32
    %c0_i32_2 = arith.constant 0 : i32
    return %c0_i32, %c0_i32_0, %c0_i32_1 : i32, i32, i32
  }
  func.func @transform_11(%arg0: i32) -> (i32, i32, i32) {
    %c0_i32 = arith.constant 0 : i32
    %c0_i32_0 = arith.constant 0 : i32
    %c0_i32_1 = arith.constant 0 : i32
    %c0_i32_2 = arith.constant 0 : i32
    return %c0_i32, %c0_i32_0, %c0_i32_1 : i32, i32, i32
  }
  func.func @transform_12(%arg0: i32) -> (i32, i32, i32) {
    %c0_i32 = arith.constant 0 : i32
    %c0_i32_0 = arith.constant 0 : i32
    %c0_i32_1 = arith.constant 0 : i32
    %c0_i32_2 = arith.constant 0 : i32
    return %c0_i32, %c0_i32_0, %c0_i32_1 : i32, i32, i32
  }
  func.func @transform_13(%arg0: i32) -> (i32, i32) {
    %c0_i32 = arith.constant 0 : i32
    %c0_i32_0 = arith.constant 0 : i32
    %c0_i32_1 = arith.constant 0 : i32
    return %c0_i32, %c0_i32_0 : i32, i32
  }
  func.func @transform_14(%arg0: i32) -> (i32, i32) {
    %c0_i32 = arith.constant 0 : i32
    %c0_i32_0 = arith.constant 0 : i32
    %c0_i32_1 = arith.constant 0 : i32
    return %c0_i32, %c0_i32_0 : i32, i32
  }
  func.func @transform_15(%arg0: i32) -> (i32, i32) {
    %c0_i32 = arith.constant 0 : i32
    %c0_i32_0 = arith.constant 0 : i32
    %c0_i32_1 = arith.constant 0 : i32
    return %c0_i32, %c0_i32_0 : i32, i32
  }
  func.func @transform_16(%arg0: i32) -> (i32, i32) {
    %c0_i32 = arith.constant 0 : i32
    %c0_i32_0 = arith.constant 0 : i32
    %c0_i32_1 = arith.constant 0 : i32
    return %c0_i32, %c0_i32_0 : i32, i32
  }
  func.func @transform_17(%arg0: i32) -> (i32, i32) {
    %c0_i32 = arith.constant 0 : i32
    %c0_i32_0 = arith.constant 0 : i32
    %c0_i32_1 = arith.constant 0 : i32
    return %c0_i32, %c0_i32_0 : i32, i32
  }
  func.func @transform_18(%arg0: i32) -> (i32, i32) {
    %c0_i32 = arith.constant 0 : i32
    %c0_i32_0 = arith.constant 0 : i32
    %c0_i32_1 = arith.constant 0 : i32
    return %c0_i32, %c0_i32_0 : i32, i32
  }
  func.func @transform_19(%arg0: i32) -> (i32, i32) {
    %c0_i32 = arith.constant 0 : i32
    %c0_i32_0 = arith.constant 0 : i32
    %c0_i32_1 = arith.constant 0 : i32
    return %c0_i32, %c0_i32_0 : i32, i32
  }
  func.func @transform_20(%arg0: i32) -> (i32, i32) {
    %c0_i32 = arith.constant 0 : i32
    %c0_i32_0 = arith.constant 0 : i32
    %c0_i32_1 = arith.constant 0 : i32
    return %c0_i32, %c0_i32_0 : i32, i32
  }
  func.func @transform_21(%arg0: i32) -> (i32, i32) {
    %c0_i32 = arith.constant 0 : i32
    %c0_i32_0 = arith.constant 0 : i32
    %c0_i32_1 = arith.constant 0 : i32
    return %c0_i32, %c0_i32_0 : i32, i32
  }
  func.func @transform_22(%arg0: i32) -> (i32, i32) {
    %c0_i32 = arith.constant 0 : i32
    %c0_i32_0 = arith.constant 0 : i32
    %c0_i32_1 = arith.constant 0 : i32
    return %c0_i32, %c0_i32_0 : i32, i32
  }
  func.func @transform_23(%arg0: i32) -> (i32, i32) {
    %c0_i32 = arith.constant 0 : i32
    %c0_i32_0 = arith.constant 0 : i32
    %c0_i32_1 = arith.constant 0 : i32
    return %c0_i32, %c0_i32_0 : i32, i32
  }
  func.func @transform_24(%arg0: i32) -> (i32, i32) {
    %c0_i32 = arith.constant 0 : i32
    %c0_i32_0 = arith.constant 0 : i32
    %c0_i32_1 = arith.constant 0 : i32
    return %c0_i32, %c0_i32_0 : i32, i32
  }
  func.func @transform_25(%arg0: i32) -> (i32, i32) {
    %c0_i32 = arith.constant 0 : i32
    %c0_i32_0 = arith.constant 0 : i32
    %c0_i32_1 = arith.constant 0 : i32
    return %c0_i32, %c0_i32_0 : i32, i32
  }
  func.func @transform_26(%arg0: i32) -> (i32, i32, i32) {
    %c0_i32 = arith.constant 0 : i32
    %c0_i32_0 = arith.constant 0 : i32
    %c0_i32_1 = arith.constant 0 : i32
    return %arg0, %c0_i32, %c0_i32_0 : i32, i32, i32
  }
}

</mosaic_0001>

<llo_original>
// kernel: _lambda_.1
$region0: #{_lambda_.1}
  #allocation0 [shape = 'u32[]', space=smem, size = 0x4, offset = 0x4, fixed_abs, tag = 'smem constant byte address 0x4 - core index']
  #allocation1 [shape = 'u32[144,128]{1,0:T(1,128)}', space=vmem, size = 0x12000, scoped, tag = 'internal scratch']
  %s0 = inlined_call_operand.hbm [shape: f32[2,4,192], index: 0, kind: input, shape index: {}]
  %s1 = inlined_call_operand.hbm [shape: f32[4,32], index: 1, kind: input, shape index: {}]
  %s2 = inlined_call_operand.hbm [shape: bf16[192,32], index: 2, kind: input, shape index: {}]
  %s3 = inlined_call_operand.hbm [shape: f32[1,32], index: 3, kind: input, shape index: {}, may-alias: {3,5,13,15,19,23}]
  %s4 = inlined_call_operand.hbm [shape: f32[1,32], index: 4, kind: input, shape index: {}, may-alias: {4,14}]
  %s5 = inlined_call_operand.hbm [shape: f32[1,32], index: 5, kind: input, shape index: {}, may-alias: {3,5,13,15,19,23}]
  %s6 = inlined_call_operand.hbm [shape: bf16[2,32,16], index: 6, kind: input, shape index: {}]
  %s7 = inlined_call_operand.hbm [shape: f32[2,1,16], index: 7, kind: input, shape index: {}, may-alias: {7,9,11}]
  %s8 = inlined_call_operand.hbm [shape: bf16[2,32,16], index: 8, kind: input, shape index: {}]
  %s9 = inlined_call_operand.hbm [shape: f32[2,1,16], index: 9, kind: input, shape index: {}, may-alias: {7,9,11}]
  %s10 = inlined_call_operand.hbm [shape: bf16[2,32,16], index: 10, kind: input, shape index: {}]
  %s11 = inlined_call_operand.hbm [shape: f32[2,1,16], index: 11, kind: input, shape index: {}, may-alias: {7,9,11}]
  %s12 = inlined_call_operand.hbm [shape: bf16[2,16,32], index: 12, kind: input, shape index: {}]
  %s13 = inlined_call_operand.hbm [shape: f32[1,32], index: 13, kind: input, shape index: {}, may-alias: {3,5,13,15,19,23}]
  %s14 = inlined_call_operand.hbm [shape: f32[1,32], index: 14, kind: input, shape index: {}, may-alias: {4,14}]
  %s15 = inlined_call_operand.hbm [shape: f32[1,32], index: 15, kind: input, shape index: {}, may-alias: {3,5,13,15,19,23}]
  %s16 = inlined_call_operand.hbm [shape: bf16[32,64], index: 16, kind: input, shape index: {}]
  %s17 = inlined_call_operand.hbm [shape: f32[1,64], index: 17, kind: input, shape index: {}]
  %s18 = inlined_call_operand.hbm [shape: bf16[64,32], index: 18, kind: input, shape index: {}]
  %s19 = inlined_call_operand.hbm [shape: f32[1,32], index: 19, kind: input, shape index: {}, may-alias: {3,5,13,15,19,23}]
  %s20 = inlined_call_operand.hbm [shape: bf16[32,16], index: 20, kind: input, shape index: {}]
  %s21 = inlined_call_operand.hbm [shape: f32[1,16], index: 21, kind: input, shape index: {}, may-alias: {21,25}]
  %s22 = inlined_call_operand.hbm [shape: bf16[32,32], index: 22, kind: input, shape index: {}]
  %s23 = inlined_call_operand.hbm [shape: f32[1,32], index: 23, kind: input, shape index: {}, may-alias: {3,5,13,15,19,23}]
  %s24 = inlined_call_operand.hbm [shape: bf16[32,16], index: 24, kind: input, shape index: {}]
  %s25 = inlined_call_operand.hbm [shape: f32[1,16], index: 25, kind: input, shape index: {}, may-alias: {21,25}]
  %s26 = inlined_call_operand.hbm [shape: f32[2,16,4], index: 26, kind: output, shape index: {}]
  %s27 = sld [smem:[#allocation0]]
  $region241: #{_lambda_.1} parent=0
    _
  %s29 = ssub.s32 1, %s27
  %s30 = scalar_select 0, %s29, %s27
  $region1: #{_lambda_.1} parent=0
    #allocation2 [shape = 'u8[8192]{0}', space=vmem, size = 0x2000, scoped, tag = 'input window, operand 0']
    #allocation3 [shape = 's32[2]{0}', space=sflag, size = 0x8, scoped, tag = 'scoped memory for _lambda_.1']
    #allocation4 [shape = 's32[2]{0}', space=sflag, size = 0x8, scoped, tag = 'scoped memory for _lambda_.1']
    #allocation5 [shape = 'u8[2048]{0}', space=vmem, size = 0x800, scoped, tag = 'input window, operand 1, single buffered']
    #allocation6 [shape = 's32[1]{0}', space=sflag, size = 0x4, scoped, tag = 'scoped memory for _lambda_.1']
    #allocation7 [shape = 'u8[49152]{0}', space=vmem, size = 0xc000, scoped, tag = 'input window, operand 2, single buffered']
    #allocation8 [shape = 'u8[512]{0}', space=vmem, size = 0x400, scoped, tag = 'input window, operand 3, single buffered']
    #allocation9 [shape = 's32[1]{0}', space=sflag, size = 0x4, scoped, tag = 'scoped memory for _lambda_.1']
    #allocation10 [shape = 'u8[512]{0}', space=vmem, size = 0x400, scoped, tag = 'input window, operand 4, single buffered']
    #allocation11 [shape = 'u8[512]{0}', space=vmem, size = 0x400, scoped, tag = 'input window, operand 5, single buffered']
    #allocation12 [shape = 's32[1]{0}', space=sflag, size = 0x4, scoped, tag = 'scoped memory for _lambda_.1']
    #allocation13 [shape = 'u8[16384]{0}', space=vmem, size = 0x4000, scoped, tag = 'input window, operand 6, single buffered']
    #allocation14 [shape = 'u8[1024]{0}', space=vmem, size = 0x400, scoped, tag = 'input window, operand 7, single buffered']
    #allocation15 [shape = 's32[1]{0}', space=sflag, size = 0x4, scoped, tag = 'scoped memory for _lambda_.1']
    #allocation16 [shape = 'u8[16384]{0}', space=vmem, size = 0x4000, scoped, tag = 'input window, operand 8, single buffered']
    #allocation17 [shape = 'u8[1024]{0}', space=vmem, size = 0x400, scoped, tag = 'input window, operand 9, single buffered']
    #allocation18 [shape = 's32[1]{0}', space=sflag, size = 0x4, scoped, tag = 'scoped memory for _lambda_.1']
    #allocation19 [shape = 'u8[16384]{0}', space=vmem, size = 0x4000, scoped, tag = 'input window, operand 10, single buffered']
    #allocation20 [shape = 'u8[1024]{0}', space=vmem, size = 0x400, scoped, tag = 'input window, operand 11, single buffered']
    #allocation21 [shape = 's32[1]{0}', space=sflag, size = 0x4, scoped, tag = 'scoped memory for _lambda_.1']
    #allocation22 [shape = 'u8[8192]{0}', space=vmem, size = 0x2000, scoped, tag = 'input window, operand 12, single buffered']
    #allocation23 [shape = 'u8[512]{0}', space=vmem, size = 0x400, scoped, tag = 'input window, operand 13, single buffered']
    #allocation24 [shape = 's32[1]{0}', space=sflag, size = 0x4, scoped, tag = 'scoped memory for _lambda_.1']
    #allocation25 [shape = 'u8[512]{0}', space=vmem, size = 0x400, scoped, tag = 'input window, operand 14, single buffered']
    #allocation26 [shape = 'u8[512]{0}', space=vmem, size = 0x400, scoped, tag = 'input window, operand 15, single buffered']
    #allocation27 [shape = 's32[1]{0}', space=sflag, size = 0x4, scoped, tag = 'scoped memory for _lambda_.1']
    #allocation28 [shape = 'u8[8192]{0}', space=vmem, size = 0x2000, scoped, tag = 'input window, operand 16, single buffered']
    #allocation29 [shape = 'u8[512]{0}', space=vmem, size = 0x400, scoped, tag = 'input window, operand 17, single buffered']
    #allocation30 [shape = 's32[1]{0}', space=sflag, size = 0x4, scoped, tag = 'scoped memory for _lambda_.1']
    #allocation31 [shape = 'u8[16384]{0}', space=vmem, size = 0x4000, scoped, tag = 'input window, operand 18, single buffered']
    #allocation32 [shape = 'u8[512]{0}', space=vmem, size = 0x400, scoped, tag = 'input window, operand 19, single buffered']
    #allocation33 [shape = 's32[1]{0}', space=sflag, size = 0x4, scoped, tag = 'scoped memory for _lambda_.1']
    #allocation34 [shape = 'u8[8192]{0}', space=vmem, size = 0x2000, scoped, tag = 'input window, operand 20, single buffered']
    #allocation35 [shape = 'u8[512]{0}', space=vmem, size = 0x400, scoped, tag = 'input window, operand 21, single buffered']
    #allocation36 [shape = 's32[1]{0}', space=sflag, size = 0x4, scoped, tag = 'scoped memory for _lambda_.1']
    #allocation37 [shape = 'u8[8192]{0}', space=vmem, size = 0x2000, scoped, tag = 'input window, operand 22, single buffered']
    #allocation38 [shape = 'u8[512]{0}', space=vmem, size = 0x400, scoped, tag = 'input window, operand 23, single buffered']
    #allocation39 [shape = 's32[1]{0}', space=sflag, size = 0x4, scoped, tag = 'scoped memory for _lambda_.1']
    #allocation40 [shape = 'u8[8192]{0}', space=vmem, size = 0x2000, scoped, tag = 'input window, operand 24, single buffered']
    #allocation41 [shape = 'u8[512]{0}', space=vmem, size = 0x400, scoped, tag = 'input window, operand 25, single buffered']
    #allocation42 [shape = 's32[1]{0}', space=sflag, size = 0x4, scoped, tag = 'scoped memory for _lambda_.1']
    #allocation43 [shape = 'u8[16384]{0}', space=vmem, size = 0x4000, scoped, tag = 'output window, operand 0']
    %31 = vsyncpa [#allocation3], 0
    %s32 = scalar_lea.sflag [#allocation3], 1
    %33 = vsyncpa %s32, 0
    %34 = vsyncpa [#allocation6], 0
    %35 = vsyncpa [#allocation9], 0
    %36 = vsyncpa [#allocation12], 0
    %37 = vsyncpa [#allocation15], 0
    %38 = vsyncpa [#allocation18], 0
    %39 = vsyncpa [#allocation21], 0
    %40 = vsyncpa [#allocation24], 0
    %41 = vsyncpa [#allocation27], 0
    %42 = vsyncpa [#allocation30], 0
    %43 = vsyncpa [#allocation33], 0
    %44 = vsyncpa [#allocation36], 0
    %45 = vsyncpa [#allocation39], 0
    %46 = vsyncpa [#allocation42], 0
    %47 = vsyncpa [#allocation4], 0
    %s48 = scalar_lea.sflag [#allocation4], 1
    %49 = vsyncpa %s48, 0
    loop: start=0, step=1, limit=4
    $region2: #{_lambda_.1} parent=1 // loop_pre_header
      _
    $region3: #{_lambda_.1} parent=1 // loop_header
      %s51 = sphi 0, %s55
      %p52 = scmp.ge.s32.totalorder %s51, 4
      %s61 = sphi 0, %s63
      %s64 = sphi 0, %s61
      %s65 = sphi 0, %s64
      %s81 = sphi 0, %s65
      %s85 = sphi 0, %s85
      %s87 = sphi 0, %s85
      %s88 = sphi 0, %s87
      %s102 = sphi 0, %s88
      %s106 = sphi 0, %s106
      %s108 = sphi 0, %s106
      %s109 = sphi 0, %s108
      %s123 = sphi 0, %s109
      %s127 = sphi 0, %s127
      %s129 = sphi 0, %s127
      %s130 = sphi 0, %s129
      %s144 = sphi 0, %s130
      %s148 = sphi 0, %s148
      %s150 = sphi 0, %s148
      %s151 = sphi 0, %s150
      %s165 = sphi 0, %s151
      %s169 = sphi 0, %s169
      %s171 = sphi 0, %s169
      %s172 = sphi 0, %s171
      %s186 = sphi 0, %s172
      %s190 = sphi 0, %s190
      %s192 = sphi 0, %s190
      %s193 = sphi 0, %s192
      %s207 = sphi 0, %s193
      %s211 = sphi 0, %s211
      %s213 = sphi 0, %s211
      %s214 = sphi 0, %s213
      %s228 = sphi 0, %s214
      %s232 = sphi 0, %s232
      %s234 = sphi 0, %s232
      %s235 = sphi 0, %s234
      %s249 = sphi 0, %s235
      %s253 = sphi 0, %s253
      %s255 = sphi 0, %s253
      %s256 = sphi 0, %s255
      %s270 = sphi 0, %s256
      %s274 = sphi 0, %s274
      %s276 = sphi 0, %s274
      %s277 = sphi 0, %s276
      %s291 = sphi 0, %s277
      %s295 = sphi 0, %s295
      %s297 = sphi 0, %s295
      %s298 = sphi 0, %s297
      %s312 = sphi 0, %s298
      %s316 = sphi 0, %s316
      %s318 = sphi 0, %s316
      %s319 = sphi 0, %s318
      %s333 = sphi 0, %s319
      %s337 = sphi 0, %s337
      %s339 = sphi 0, %s337
      %s340 = sphi 0, %s339
      %s354 = sphi 0, %s340
      %s358 = sphi 0, %s358
      %s360 = sphi 0, %s358
      %s361 = sphi 0, %s360
      %s375 = sphi 0, %s361
      %s379 = sphi 0, %s379
      %s381 = sphi 0, %s379
      %s382 = sphi 0, %s381
      %s396 = sphi 0, %s382
      %s400 = sphi 0, %s400
      %s402 = sphi 0, %s400
      %s403 = sphi 0, %s402
      %s417 = sphi 0, %s403
      %s421 = sphi 0, %s421
      %s423 = sphi 0, %s421
      %s424 = sphi 0, %s423
      %s438 = sphi 0, %s424
      %s442 = sphi 0, %s442
      %s444 = sphi 0, %s442
      %s445 = sphi 0, %s444
      %s459 = sphi 0, %s445
      %s463 = sphi 0, %s463
      %s465 = sphi 0, %s463
      %s466 = sphi 0, %s465
      %s480 = sphi 0, %s466
      %s484 = sphi 0, %s484
      %s486 = sphi 0, %s484
      %s487 = sphi 0, %s486
      %s501 = sphi 0, %s487
      %s505 = sphi 0, %s505
      %s507 = sphi 0, %s505
      %s508 = sphi 0, %s507
      %s522 = sphi 0, %s508
      %s526 = sphi 0, %s526
      %s528 = sphi 0, %s526
      %s529 = sphi 0, %s528
      %s543 = sphi 0, %s529
      %s547 = sphi 0, %s547
      %s549 = sphi 0, %s547
      %s550 = sphi 0, %s549
      %s564 = sphi 0, %s550
      %s568 = sphi 0, %s568
      %s570 = sphi 0, %s568
      %s571 = sphi 0, %s570
      %s585 = sphi 0, %s571
      %s589 = sphi 0, %s589
      %s591 = sphi 0, %s589
      %s592 = sphi 0, %s591
      %s606 = sphi 0, %s592
      %s612 = sphi 0, %s614
      %s615 = sphi 0, %s612
      %s616 = sphi 0, %s615
      %s632 = sphi 0, %s616
    $region4: #{_lambda_.1} parent=1 // loop_header_branch
      %54 = sbr.rel (%p52) target = $region8
    $region5: #{_lambda_.1} parent=1 // loop_body
      %s56 = ssub.s32 %s51, 1
      %s57 = ssub.s32 %s51, 2
      %s58 = sadd.s32 %s51, 1
      %s59 = ssub.s32 %s51, %s58
      %p60 = scmp.eq.s32.totalorder %s59, 0
      %s62 = sadd.s32 %s61, 1
      %s63 = scalar_select %p60, %s61, %s62
      %p66 = pneg %p60
      %p67 = scmp.eq.s32.totalorder %s51, 1
      %p68 = por %p66, %p67
      %p69 = scmp.ne.s32.totalorder %s61, %s64
      %p70 = scmp.eq.s32.totalorder %s51, 0
      %p71 = por %p69, %p70
      %p72 = scmp.ne.s32.totalorder %s61, %s64
      %p73 = scmp.eq.s32.totalorder %s56, 1
      %p74 = por %p72, %p73
      %p75 = scmp.ne.s32.totalorder %s64, %s65
      %p76 = scmp.eq.s32.totalorder %s56, 0
      %p77 = por %p75, %p76
      %p78 = scmp.ne.s32.totalorder %s64, %s65
      %p79 = scmp.eq.s32.totalorder %s57, 1
      %p80 = por %p78, %p79
      %p82 = scmp.ne.s32.totalorder %s65, %s81
      %p83 = scmp.eq.s32.totalorder %s57, 0
      %p84 = por %p82, %p83
      %s86 = sadd.s32 %s85, 1
      %p89 = scmp.eq.s32.totalorder %s51, 1
      %p90 = scmp.ne.s32.totalorder %s85, %s87
      %p91 = scmp.eq.s32.totalorder %s51, 0
      %p92 = por %p90, %p91
      %p93 = scmp.ne.s32.totalorder %s85, %s87
      %p94 = scmp.eq.s32.totalorder %s56, 1
      %p95 = por %p93, %p94
      %p96 = scmp.ne.s32.totalorder %s87, %s88
      %p97 = scmp.eq.s32.totalorder %s56, 0
      %p98 = por %p96, %p97
      %p99 = scmp.ne.s32.totalorder %s87, %s88
      %p100 = scmp.eq.s32.totalorder %s57, 1
      %p101 = por %p99, %p100
      %p103 = scmp.ne.s32.totalorder %s88, %s102
      %p104 = scmp.eq.s32.totalorder %s57, 0
      %p105 = por %p103, %p104
      %s107 = sadd.s32 %s106, 1
      %p110 = scmp.eq.s32.totalorder %s51, 1
      %p111 = scmp.ne.s32.totalorder %s106, %s108
      %p112 = scmp.eq.s32.totalorder %s51, 0
      %p113 = por %p111, %p112
      %p114 = scmp.ne.s32.totalorder %s106, %s108
      %p115 = scmp.eq.s32.totalorder %s56, 1
      %p116 = por %p114, %p115
      %p117 = scmp.ne.s32.totalorder %s108, %s109
      %p118 = scmp.eq.s32.totalorder %s56, 0
      %p119 = por %p117, %p118
      %p120 = scmp.ne.s32.totalorder %s108, %s109
      %p121 = scmp.eq.s32.totalorder %s57, 1
      %p122 = por %p120, %p121
      %p124 = scmp.ne.s32.totalorder %s109, %s123
      %p125 = scmp.eq.s32.totalorder %s57, 0
      %p126 = por %p124, %p125
      %s128 = sadd.s32 %s127, 1
      %p131 = scmp.eq.s32.totalorder %s51, 1
      %p132 = scmp.ne.s32.totalorder %s127, %s129
      %p133 = scmp.eq.s32.totalorder %s51, 0
      %p134 = por %p132, %p133
      %p135 = scmp.ne.s32.totalorder %s127, %s129
      %p136 = scmp.eq.s32.totalorder %s56, 1
      %p137 = por %p135, %p136
      %p138 = scmp.ne.s32.totalorder %s129, %s130
      %p139 = scmp.eq.s32.totalorder %s56, 0
      %p140 = por %p138, %p139
      %p141 = scmp.ne.s32.totalorder %s129, %s130
      %p142 = scmp.eq.s32.totalorder %s57, 1
      %p143 = por %p141, %p142
      %p145 = scmp.ne.s32.totalorder %s130, %s144
      %p146 = scmp.eq.s32.totalorder %s57, 0
      %p147 = por %p145, %p146
      %s149 = sadd.s32 %s148, 1
      %p152 = scmp.eq.s32.totalorder %s51, 1
      %p153 = scmp.ne.s32.totalorder %s148, %s150
      %p154 = scmp.eq.s32.totalorder %s51, 0
      %p155 = por %p153, %p154
      %p156 = scmp.ne.s32.totalorder %s148, %s150
      %p157 = scmp.eq.s32.totalorder %s56, 1
      %p158 = por %p156, %p157
      %p159 = scmp.ne.s32.totalorder %s150, %s151
      %p160 = scmp.eq.s32.totalorder %s56, 0
      %p161 = por %p159, %p160
      %p162 = scmp.ne.s32.totalorder %s150, %s151
      %p163 = scmp.eq.s32.totalorder %s57, 1
      %p164 = por %p162, %p163
      %p166 = scmp.ne.s32.totalorder %s151, %s165
      %p167 = scmp.eq.s32.totalorder %s57, 0
      %p168 = por %p166, %p167
      %s170 = sadd.s32 %s169, 1
      %p173 = scmp.eq.s32.totalorder %s51, 1
      %p174 = scmp.ne.s32.totalorder %s169, %s171
      %p175 = scmp.eq.s32.totalorder %s51, 0
      %p176 = por %p174, %p175
      %p177 = scmp.ne.s32.totalorder %s169, %s171
      %p178 = scmp.eq.s32.totalorder %s56, 1
      %p179 = por %p177, %p178
      %p180 = scmp.ne.s32.totalorder %s171, %s172
      %p181 = scmp.eq.s32.totalorder %s56, 0
      %p182 = por %p180, %p181
      %p183 = scmp.ne.s32.totalorder %s171, %s172
      %p184 = scmp.eq.s32.totalorder %s57, 1
      %p185 = por %p183, %p184
      %p187 = scmp.ne.s32.totalorder %s172, %s186
      %p188 = scmp.eq.s32.totalorder %s57, 0
      %p189 = por %p187, %p188
      %s191 = sadd.s32 %s190, 1
      %p194 = scmp.eq.s32.totalorder %s51, 1
      %p195 = scmp.ne.s32.totalorder %s190, %s192
      %p196 = scmp.eq.s32.totalorder %s51, 0
      %p197 = por %p195, %p196
      %p198 = scmp.ne.s32.totalorder %s190, %s192
      %p199 = scmp.eq.s32.totalorder %s56, 1
      %p200 = por %p198, %p199
      %p201 = scmp.ne.s32.totalorder %s192, %s193
      %p202 = scmp.eq.s32.totalorder %s56, 0
      %p203 = por %p201, %p202
      %p204 = scmp.ne.s32.totalorder %s192, %s193
      %p205 = scmp.eq.s32.totalorder %s57, 1
      %p206 = por %p204, %p205
      %p208 = scmp.ne.s32.totalorder %s193, %s207
      %p209 = scmp.eq.s32.totalorder %s57, 0
      %p210 = por %p208, %p209
      %s212 = sadd.s32 %s211, 1
      %p215 = scmp.eq.s32.totalorder %s51, 1
      %p216 = scmp.ne.s32.totalorder %s211, %s213
      %p217 = scmp.eq.s32.totalorder %s51, 0
      %p218 = por %p216, %p217
      %p219 = scmp.ne.s32.totalorder %s211, %s213
      %p220 = scmp.eq.s32.totalorder %s56, 1
      %p221 = por %p219, %p220
      %p222 = scmp.ne.s32.totalorder %s213, %s214
      %p223 = scmp.eq.s32.totalorder %s56, 0
      %p224 = por %p222, %p223
      %p225 = scmp.ne.s32.totalorder %s213, %s214
      %p226 = scmp.eq.s32.totalorder %s57, 1
      %p227 = por %p225, %p226
      %p229 = scmp.ne.s32.totalorder %s214, %s228
      %p230 = scmp.eq.s32.totalorder %s57, 0
      %p231 = por %p229, %p230
      %s233 = sadd.s32 %s232, 1
      %p236 = scmp.eq.s32.totalorder %s51, 1
      %p237 = scmp.ne.s32.totalorder %s232, %s234
      %p238 = scmp.eq.s32.totalorder %s51, 0
      %p239 = por %p237, %p238
      %p240 = scmp.ne.s32.totalorder %s232, %s234
      %p241 = scmp.eq.s32.totalorder %s56, 1
      %p242 = por %p240, %p241
      %p243 = scmp.ne.s32.totalorder %s234, %s235
      %p244 = scmp.eq.s32.totalorder %s56, 0
      %p245 = por %p243, %p244
      %p246 = scmp.ne.s32.totalorder %s234, %s235
      %p247 = scmp.eq.s32.totalorder %s57, 1
      %p248 = por %p246, %p247
      %p250 = scmp.ne.s32.totalorder %s235, %s249
      %p251 = scmp.eq.s32.totalorder %s57, 0
      %p252 = por %p250, %p251
      %s254 = sadd.s32 %s253, 1
      %p257 = scmp.eq.s32.totalorder %s51, 1
      %p258 = scmp.ne.s32.totalorder %s253, %s255
      %p259 = scmp.eq.s32.totalorder %s51, 0
      %p260 = por %p258, %p259
      %p261 = scmp.ne.s32.totalorder %s253, %s255
      %p262 = scmp.eq.s32.totalorder %s56, 1
      %p263 = por %p261, %p262
      %p264 = scmp.ne.s32.totalorder %s255, %s256
      %p265 = scmp.eq.s32.totalorder %s56, 0
      %p266 = por %p264, %p265
      %p267 = scmp.ne.s32.totalorder %s255, %s256
      %p268 = scmp.eq.s32.totalorder %s57, 1
      %p269 = por %p267, %p268
      %p271 = scmp.ne.s32.totalorder %s256, %s270
      %p272 = scmp.eq.s32.totalorder %s57, 0
      %p273 = por %p271, %p272
      %s275 = sadd.s32 %s274, 1
      %p278 = scmp.eq.s32.totalorder %s51, 1
      %p279 = scmp.ne.s32.totalorder %s274, %s276
      %p280 = scmp.eq.s32.totalorder %s51, 0
      %p281 = por %p279, %p280
      %p282 = scmp.ne.s32.totalorder %s274, %s276
      %p283 = scmp.eq.s32.totalorder %s56, 1
      %p284 = por %p282, %p283
      %p285 = scmp.ne.s32.totalorder %s276, %s277
      %p286 = scmp.eq.s32.totalorder %s56, 0
      %p287 = por %p285, %p286
      %p288 = scmp.ne.s32.totalorder %s276, %s277
      %p289 = scmp.eq.s32.totalorder %s57, 1
      %p290 = por %p288, %p289
      %p292 = scmp.ne.s32.totalorder %s277, %s291
      %p293 = scmp.eq.s32.totalorder %s57, 0
      %p294 = por %p292, %p293
      %s296 = sadd.s32 %s295, 1
      %p299 = scmp.eq.s32.totalorder %s51, 1
      %p300 = scmp.ne.s32.totalorder %s295, %s297
      %p301 = scmp.eq.s32.totalorder %s51, 0
      %p302 = por %p300, %p301
      %p303 = scmp.ne.s32.totalorder %s295, %s297
      %p304 = scmp.eq.s32.totalorder %s56, 1
      %p305 = por %p303, %p304
      %p306 = scmp.ne.s32.totalorder %s297, %s298
      %p307 = scmp.eq.s32.totalorder %s56, 0
      %p308 = por %p306, %p307
      %p309 = scmp.ne.s32.totalorder %s297, %s298
      %p310 = scmp.eq.s32.totalorder %s57, 1
      %p311 = por %p309, %p310
      %p313 = scmp.ne.s32.totalorder %s298, %s312
      %p314 = scmp.eq.s32.totalorder %s57, 0
      %p315 = por %p313, %p314
      %s317 = sadd.s32 %s316, 1
      %p320 = scmp.eq.s32.totalorder %s51, 1
      %p321 = scmp.ne.s32.totalorder %s316, %s318
      %p322 = scmp.eq.s32.totalorder %s51, 0
      %p323 = por %p321, %p322
      %p324 = scmp.ne.s32.totalorder %s316, %s318
      %p325 = scmp.eq.s32.totalorder %s56, 1
      %p326 = por %p324, %p325
      %p327 = scmp.ne.s32.totalorder %s318, %s319
      %p328 = scmp.eq.s32.totalorder %s56, 0
      %p329 = por %p327, %p328
      %p330 = scmp.ne.s32.totalorder %s318, %s319
      %p331 = scmp.eq.s32.totalorder %s57, 1
      %p332 = por %p330, %p331
      %p334 = scmp.ne.s32.totalorder %s319, %s333
      %p335 = scmp.eq.s32.totalorder %s57, 0
      %p336 = por %p334, %p335
      %s338 = sadd.s32 %s337, 1
      %p341 = scmp.eq.s32.totalorder %s51, 1
      %p342 = scmp.ne.s32.totalorder %s337, %s339
      %p343 = scmp.eq.s32.totalorder %s51, 0
      %p344 = por %p342, %p343
      %p345 = scmp.ne.s32.totalorder %s337, %s339
      %p346 = scmp.eq.s32.totalorder %s56, 1
      %p347 = por %p345, %p346
      %p348 = scmp.ne.s32.totalorder %s339, %s340
      %p349 = scmp.eq.s32.totalorder %s56, 0
      %p350 = por %p348, %p349
      %p351 = scmp.ne.s32.totalorder %s339, %s340
      %p352 = scmp.eq.s32.totalorder %s57, 1
      %p353 = por %p351, %p352
      %p355 = scmp.ne.s32.totalorder %s340, %s354
      %p356 = scmp.eq.s32.totalorder %s57, 0
      %p357 = por %p355, %p356
      %s359 = sadd.s32 %s358, 1
      %p362 = scmp.eq.s32.totalorder %s51, 1
      %p363 = scmp.ne.s32.totalorder %s358, %s360
      %p364 = scmp.eq.s32.totalorder %s51, 0
      %p365 = por %p363, %p364
      %p366 = scmp.ne.s32.totalorder %s358, %s360
      %p367 = scmp.eq.s32.totalorder %s56, 1
      %p368 = por %p366, %p367
      %p369 = scmp.ne.s32.totalorder %s360, %s361
      %p370 = scmp.eq.s32.totalorder %s56, 0
      %p371 = por %p369, %p370
      %p372 = scmp.ne.s32.totalorder %s360, %s361
      %p373 = scmp.eq.s32.totalorder %s57, 1
      %p374 = por %p372, %p373
      %p376 = scmp.ne.s32.totalorder %s361, %s375
      %p377 = scmp.eq.s32.totalorder %s57, 0
      %p378 = por %p376, %p377
      %s380 = sadd.s32 %s379, 1
      %p383 = scmp.eq.s32.totalorder %s51, 1
      %p384 = scmp.ne.s32.totalorder %s379, %s381
      %p385 = scmp.eq.s32.totalorder %s51, 0
      %p386 = por %p384, %p385
      %p387 = scmp.ne.s32.totalorder %s379, %s381
      %p388 = scmp.eq.s32.totalorder %s56, 1
      %p389 = por %p387, %p388
      %p390 = scmp.ne.s32.totalorder %s381, %s382
      %p391 = scmp.eq.s32.totalorder %s56, 0
      %p392 = por %p390, %p391
      %p393 = scmp.ne.s32.totalorder %s381, %s382
      %p394 = scmp.eq.s32.totalorder %s57, 1
      %p395 = por %p393, %p394
      %p397 = scmp.ne.s32.totalorder %s382, %s396
      %p398 = scmp.eq.s32.totalorder %s57, 0
      %p399 = por %p397, %p398
      %s401 = sadd.s32 %s400, 1
      %p404 = scmp.eq.s32.totalorder %s51, 1
      %p405 = scmp.ne.s32.totalorder %s400, %s402
      %p406 = scmp.eq.s32.totalorder %s51, 0
      %p407 = por %p405, %p406
      %p408 = scmp.ne.s32.totalorder %s400, %s402
      %p409 = scmp.eq.s32.totalorder %s56, 1
      %p410 = por %p408, %p409
      %p411 = scmp.ne.s32.totalorder %s402, %s403
      %p412 = scmp.eq.s32.totalorder %s56, 0
      %p413 = por %p411, %p412
      %p414 = scmp.ne.s32.totalorder %s402, %s403
      %p415 = scmp.eq.s32.totalorder %s57, 1
      %p416 = por %p414, %p415
      %p418 = scmp.ne.s32.totalorder %s403, %s417
      %p419 = scmp.eq.s32.totalorder %s57, 0
      %p420 = por %p418, %p419
      %s422 = sadd.s32 %s421, 1
      %p425 = scmp.eq.s32.totalorder %s51, 1
      %p426 = scmp.ne.s32.totalorder %s421, %s423
      %p427 = scmp.eq.s32.totalorder %s51, 0
      %p428 = por %p426, %p427
      %p429 = scmp.ne.s32.totalorder %s421, %s423
      %p430 = scmp.eq.s32.totalorder %s56, 1
      %p431 = por %p429, %p430
      %p432 = scmp.ne.s32.totalorder %s423, %s424
      %p433 = scmp.eq.s32.totalorder %s56, 0
      %p434 = por %p432, %p433
      %p435 = scmp.ne.s32.totalorder %s423, %s424
      %p436 = scmp.eq.s32.totalorder %s57, 1
      %p437 = por %p435, %p436
      %p439 = scmp.ne.s32.totalorder %s424, %s438
      %p440 = scmp.eq.s32.totalorder %s57, 0
      %p441 = por %p439, %p440
      %s443 = sadd.s32 %s442, 1
      %p446 = scmp.eq.s32.totalorder %s51, 1
      %p447 = scmp.ne.s32.totalorder %s442, %s444
      %p448 = scmp.eq.s32.totalorder %s51, 0
      %p449 = por %p447, %p448
      %p450 = scmp.ne.s32.totalorder %s442, %s444
      %p451 = scmp.eq.s32.totalorder %s56, 1
      %p452 = por %p450, %p451
      %p453 = scmp.ne.s32.totalorder %s444, %s445
      %p454 = scmp.eq.s32.totalorder %s56, 0
      %p455 = por %p453, %p454
      %p456 = scmp.ne.s32.totalorder %s444, %s445
      %p457 = scmp.eq.s32.totalorder %s57, 1
      %p458 = por %p456, %p457
      %p460 = scmp.ne.s32.totalorder %s445, %s459
      %p461 = scmp.eq.s32.totalorder %s57, 0
      %p462 = por %p460, %p461
      %s464 = sadd.s32 %s463, 1
      %p467 = scmp.eq.s32.totalorder %s51, 1
      %p468 = scmp.ne.s32.totalorder %s463, %s465
      %p469 = scmp.eq.s32.totalorder %s51, 0
      %p470 = por %p468, %p469
      %p471 = scmp.ne.s32.totalorder %s463, %s465
      %p472 = scmp.eq.s32.totalorder %s56, 1
      %p473 = por %p471, %p472
      %p474 = scmp.ne.s32.totalorder %s465, %s466
      %p475 = scmp.eq.s32.totalorder %s56, 0
      %p476 = por %p474, %p475
      %p477 = scmp.ne.s32.totalorder %s465, %s466
      %p478 = scmp.eq.s32.totalorder %s57, 1
      %p479 = por %p477, %p478
      %p481 = scmp.ne.s32.totalorder %s466, %s480
      %p482 = scmp.eq.s32.totalorder %s57, 0
      %p483 = por %p481, %p482
      %s485 = sadd.s32 %s484, 1
      %p488 = scmp.eq.s32.totalorder %s51, 1
      %p489 = scmp.ne.s32.totalorder %s484, %s486
      %p490 = scmp.eq.s32.totalorder %s51, 0
      %p491 = por %p489, %p490
      %p492 = scmp.ne.s32.totalorder %s484, %s486
      %p493 = scmp.eq.s32.totalorder %s56, 1
      %p494 = por %p492, %p493
      %p495 = scmp.ne.s32.totalorder %s486, %s487
      %p496 = scmp.eq.s32.totalorder %s56, 0
      %p497 = por %p495, %p496
      %p498 = scmp.ne.s32.totalorder %s486, %s487
      %p499 = scmp.eq.s32.totalorder %s57, 1
      %p500 = por %p498, %p499
      %p502 = scmp.ne.s32.totalorder %s487, %s501
      %p503 = scmp.eq.s32.totalorder %s57, 0
      %p504 = por %p502, %p503
      %s506 = sadd.s32 %s505, 1
      %p509 = scmp.eq.s32.totalorder %s51, 1
      %p510 = scmp.ne.s32.totalorder %s505, %s507
      %p511 = scmp.eq.s32.totalorder %s51, 0
      %p512 = por %p510, %p511
      %p513 = scmp.ne.s32.totalorder %s505, %s507
      %p514 = scmp.eq.s32.totalorder %s56, 1
      %p515 = por %p513, %p514
      %p516 = scmp.ne.s32.totalorder %s507, %s508
      %p517 = scmp.eq.s32.totalorder %s56, 0
      %p518 = por %p516, %p517
      %p519 = scmp.ne.s32.totalorder %s507, %s508
      %p520 = scmp.eq.s32.totalorder %s57, 1
      %p521 = por %p519, %p520
      %p523 = scmp.ne.s32.totalorder %s508, %s522
      %p524 = scmp.eq.s32.totalorder %s57, 0
      %p525 = por %p523, %p524
      %s527 = sadd.s32 %s526, 1
      %p530 = scmp.eq.s32.totalorder %s51, 1
      %p531 = scmp.ne.s32.totalorder %s526, %s528
      %p532 = scmp.eq.s32.totalorder %s51, 0
      %p533 = por %p531, %p532
      %p534 = scmp.ne.s32.totalorder %s526, %s528
      %p535 = scmp.eq.s32.totalorder %s56, 1
      %p536 = por %p534, %p535
      %p537 = scmp.ne.s32.totalorder %s528, %s529
      %p538 = scmp.eq.s32.totalorder %s56, 0
      %p539 = por %p537, %p538
      %p540 = scmp.ne.s32.totalorder %s528, %s529
      %p541 = scmp.eq.s32.totalorder %s57, 1
      %p542 = por %p540, %p541
      %p544 = scmp.ne.s32.totalorder %s529, %s543
      %p545 = scmp.eq.s32.totalorder %s57, 0
      %p546 = por %p544, %p545
      %s548 = sadd.s32 %s547, 1
      %p551 = scmp.eq.s32.totalorder %s51, 1
      %p552 = scmp.ne.s32.totalorder %s547, %s549
      %p553 = scmp.eq.s32.totalorder %s51, 0
      %p554 = por %p552, %p553
      %p555 = scmp.ne.s32.totalorder %s547, %s549
      %p556 = scmp.eq.s32.totalorder %s56, 1
      %p557 = por %p555, %p556
      %p558 = scmp.ne.s32.totalorder %s549, %s550
      %p559 = scmp.eq.s32.totalorder %s56, 0
      %p560 = por %p558, %p559
      %p561 = scmp.ne.s32.totalorder %s549, %s550
      %p562 = scmp.eq.s32.totalorder %s57, 1
      %p563 = por %p561, %p562
      %p565 = scmp.ne.s32.totalorder %s550, %s564
      %p566 = scmp.eq.s32.totalorder %s57, 0
      %p567 = por %p565, %p566
      %s569 = sadd.s32 %s568, 1
      %p572 = scmp.eq.s32.totalorder %s51, 1
      %p573 = scmp.ne.s32.totalorder %s568, %s570
      %p574 = scmp.eq.s32.totalorder %s51, 0
      %p575 = por %p573, %p574
      %p576 = scmp.ne.s32.totalorder %s568, %s570
      %p577 = scmp.eq.s32.totalorder %s56, 1
      %p578 = por %p576, %p577
      %p579 = scmp.ne.s32.totalorder %s570, %s571
      %p580 = scmp.eq.s32.totalorder %s56, 0
      %p581 = por %p579, %p580
      %p582 = scmp.ne.s32.totalorder %s570, %s571
      %p583 = scmp.eq.s32.totalorder %s57, 1
      %p584 = por %p582, %p583
      %p586 = scmp.ne.s32.totalorder %s571, %s585
      %p587 = scmp.eq.s32.totalorder %s57, 0
      %p588 = por %p586, %p587
      %s590 = sadd.s32 %s589, 1
      %p593 = scmp.eq.s32.totalorder %s51, 1
      %p594 = scmp.ne.s32.totalorder %s589, %s591
      %p595 = scmp.eq.s32.totalorder %s51, 0
      %p596 = por %p594, %p595
      %p597 = scmp.ne.s32.totalorder %s589, %s591
      %p598 = scmp.eq.s32.totalorder %s56, 1
      %p599 = por %p597, %p598
      %p600 = scmp.ne.s32.totalorder %s591, %s592
      %p601 = scmp.eq.s32.totalorder %s56, 0
      %p602 = por %p600, %p601
      %p603 = scmp.ne.s32.totalorder %s591, %s592
      %p604 = scmp.eq.s32.totalorder %s57, 1
      %p605 = por %p603, %p604
      %p607 = scmp.ne.s32.totalorder %s592, %s606
      %p608 = scmp.eq.s32.totalorder %s57, 0
      %p609 = por %p607, %p608
      %s610 = ssub.s32 %s51, %s58
      %p611 = scmp.eq.s32.totalorder %s610, 0
      %s613 = sadd.s32 %s612, 1
      %s614 = scalar_select %p611, %s612, %s613
      %p617 = pneg %p611
      %p618 = scmp.eq.s32.totalorder %s51, 1
      %p619 = por %p617, %p618
      %p620 = scmp.ne.s32.totalorder %s612, %s615
      %p621 = scmp.eq.s32.totalorder %s51, 0
      %p622 = por %p620, %p621
      %p623 = scmp.ne.s32.totalorder %s612, %s615
      %p624 = scmp.eq.s32.totalorder %s56, 1
      %p625 = por %p623, %p624
      %p626 = scmp.ne.s32.totalorder %s615, %s616
      %p627 = scmp.eq.s32.totalorder %s56, 0
      %p628 = por %p626, %p627
      %p629 = scmp.ne.s32.totalorder %s615, %s616
      %p630 = scmp.eq.s32.totalorder %s57, 1
      %p631 = por %p629, %p630
      %p633 = scmp.ne.s32.totalorder %s616, %s632
      %p634 = scmp.eq.s32.totalorder %s57, 0
      %p635 = por %p633, %p634
      %p636 = scmp.le.s32.totalorder 1, %s51
      %p637 = scmp.lt.s32.totalorder %s51, 3
      %p638 = pnand %p636, %p637
      %p639 = pneg %p638
      // Predicated region
      $region9: #{_lambda_.1} parent=5 // pred_check
        _
      $region10: #{_lambda_.1} parent=5 // pred_check_branch
        %641 = sbr.rel (%p638) target = $region12
      $region11: #{_lambda_.1} parent=5 // pred_region
        %s642 = ssub.s32 %s51, 1
        // Predicated region
        $region13: #{_lambda_.1} parent=11 // pred_check
          %p643 = pneg %p98
        $region14: #{_lambda_.1} parent=11 // pred_check_branch
          %645 = sbr.rel (%p643) target = $region16
        $region15: #{_lambda_.1} parent=11 // pred_region
          %s647 = ssub.s32 64, 64
          %648 = vsyncadd [#allocation6], %s647
          %s650 = sshll.u32 [#allocation5], 4
          %s651 = int_to_ptr.vmem [resolvable:$true] %s650
          %653 = dma.hbm_to_vmem [thread:$0]  %s1, 64, %s651, [#allocation6]
        $region16: #{_lambda_.1} parent=11 // pred_fallthru
          _
        // Predicated region
        $region17: #{_lambda_.1} parent=11 // pred_check
          %p654 = pneg %p119
        $region18: #{_lambda_.1} parent=11 // pred_check_branch
          %656 = sbr.rel (%p654) target = $region20
        $region19: #{_lambda_.1} parent=11 // pred_region
          %s658 = ssub.s32 1536, 1536
          %659 = vsyncadd [#allocation6], %s658
          %s660 = sshll.u32 [#allocation7], 4
          %s661 = int_to_ptr.vmem [resolvable:$true] %s660
          %666 = dma.hbm_to_vmem [thread:$0]  %s2, 1536, %s661, [#allocation6], 64, 64, 4
        $region20: #{_lambda_.1} parent=11 // pred_fallthru
          _
        // Predicated region
        $region21: #{_lambda_.1} parent=11 // pred_check
          %p667 = pneg %p140
        $region22: #{_lambda_.1} parent=11 // pred_check_branch
          %669 = sbr.rel (%p667) target = $region24
        $region23: #{_lambda_.1} parent=11 // pred_region
          %s671 = ssub.s32 16, 16
          %672 = vsyncadd [#allocation9], %s671
          %s674 = sshll.u32 [#allocation8], 4
          %s675 = int_to_ptr.vmem [resolvable:$true] %s674
          %677 = dma.hbm_to_vmem [thread:$0]  %s3, 16, %s675, [#allocation9]
        $region24: #{_lambda_.1} parent=11 // pred_fallthru
          _
        // Predicated region
        $region25: #{_lambda_.1} parent=11 // pred_check
          %p678 = pneg %p161
        $region26: #{_lambda_.1} parent=11 // pred_check_branch
          %680 = sbr.rel (%p678) target = $region28
        $region27: #{_lambda_.1} parent=11 // pred_region
          %s682 = ssub.s32 16, 16
          %683 = vsyncadd [#allocation9], %s682
          %s685 = sshll.u32 [#allocation10], 4
          %s686 = int_to_ptr.vmem [resolvable:$true] %s685
          %688 = dma.hbm_to_vmem [thread:$0]  %s4, 16, %s686, [#allocation9]
        $region28: #{_lambda_.1} parent=11 // pred_fallthru
          _
        // Predicated region
        $region29: #{_lambda_.1} parent=11 // pred_check
          %p689 = pneg %p182
        $region30: #{_lambda_.1} parent=11 // pred_check_branch
          %691 = sbr.rel (%p689) target = $region32
        $region31: #{_lambda_.1} parent=11 // pred_region
          %s693 = ssub.s32 16, 16
          %694 = vsyncadd [#allocation12], %s693
          %s696 = sshll.u32 [#allocation11], 4
          %s697 = int_to_ptr.vmem [resolvable:$true] %s696
          %699 = dma.hbm_to_vmem [thread:$0]  %s5, 16, %s697, [#allocation12]
        $region32: #{_lambda_.1} parent=11 // pred_fallthru
          _
        // Predicated region
        $region33: #{_lambda_.1} parent=11 // pred_check
          %p700 = pneg %p203
        $region34: #{_lambda_.1} parent=11 // pred_check_branch
          %702 = sbr.rel (%p700) target = $region36
        $region35: #{_lambda_.1} parent=11 // pred_region
          %s704 = ssub.s32 512, 512
          %705 = vsyncadd [#allocation12], %s704
          %s706 = sshll.u32 [#allocation13], 4
          %s707 = int_to_ptr.vmem [resolvable:$true] %s706
          %712 = dma.hbm_to_vmem [thread:$0]  %s6, 512, %s707, [#allocation12], 64, 64, 4
        $region36: #{_lambda_.1} parent=11 // pred_fallthru
          _
        // Predicated region
        $region37: #{_lambda_.1} parent=11 // pred_check
          %p713 = pneg %p224
        $region38: #{_lambda_.1} parent=11 // pred_check_branch
          %715 = sbr.rel (%p713) target = $region40
        $region39: #{_lambda_.1} parent=11 // pred_region
          %s717 = ssub.s32 32, 32
          %718 = vsyncadd [#allocation15], %s717
          %s719 = sshll.u32 [#allocation14], 4
          %s720 = int_to_ptr.vmem [resolvable:$true] %s719
          %725 = dma.hbm_to_vmem [thread:$0]  %s7, 32, %s720, [#allocation15], 16, 16, 1
        $region40: #{_lambda_.1} parent=11 // pred_fallthru
          _
        // Predicated region
        $region41: #{_lambda_.1} parent=11 // pred_check
          %p726 = pneg %p245
        $region42: #{_lambda_.1} parent=11 // pred_check_branch
          %728 = sbr.rel (%p726) target = $region44
        $region43: #{_lambda_.1} parent=11 // pred_region
          %s730 = ssub.s32 512, 512
          %731 = vsyncadd [#allocation15], %s730
          %s732 = sshll.u32 [#allocation16], 4
          %s733 = int_to_ptr.vmem [resolvable:$true] %s732
          %738 = dma.hbm_to_vmem [thread:$0]  %s8, 512, %s733, [#allocation15], 64, 64, 4
        $region44: #{_lambda_.1} parent=11 // pred_fallthru
          _
        // Predicated region
        $region45: #{_lambda_.1} parent=11 // pred_check
          %p739 = pneg %p266
        $region46: #{_lambda_.1} parent=11 // pred_check_branch
          %741 = sbr.rel (%p739) target = $region48
        $region47: #{_lambda_.1} parent=11 // pred_region
          %s743 = ssub.s32 32, 32
          %744 = vsyncadd [#allocation18], %s743
          %s745 = sshll.u32 [#allocation17], 4
          %s746 = int_to_ptr.vmem [resolvable:$true] %s745
          %751 = dma.hbm_to_vmem [thread:$0]  %s9, 32, %s746, [#allocation18], 16, 16, 1
        $region48: #{_lambda_.1} parent=11 // pred_fallthru
          _
        // Predicated region
        $region49: #{_lambda_.1} parent=11 // pred_check
          %p752 = pneg %p287
        $region50: #{_lambda_.1} parent=11 // pred_check_branch
          %754 = sbr.rel (%p752) target = $region52
        $region51: #{_lambda_.1} parent=11 // pred_region
          %s756 = ssub.s32 512, 512
          %757 = vsyncadd [#allocation18], %s756
          %s758 = sshll.u32 [#allocation19], 4
          %s759 = int_to_ptr.vmem [resolvable:$true] %s758
          %764 = dma.hbm_to_vmem [thread:$0]  %s10, 512, %s759, [#allocation18], 64, 64, 4
        $region52: #{_lambda_.1} parent=11 // pred_fallthru
          _
        // Predicated region
        $region53: #{_lambda_.1} parent=11 // pred_check
          %p765 = pneg %p308
        $region54: #{_lambda_.1} parent=11 // pred_check_branch
          %767 = sbr.rel (%p765) target = $region56
        $region55: #{_lambda_.1} parent=11 // pred_region
          %s769 = ssub.s32 32, 32
          %770 = vsyncadd [#allocation21], %s769
          %s771 = sshll.u32 [#allocation20], 4
          %s772 = int_to_ptr.vmem [resolvable:$true] %s771
          %777 = dma.hbm_to_vmem [thread:$0]  %s11, 32, %s772, [#allocation21], 16, 16, 1
        $region56: #{_lambda_.1} parent=11 // pred_fallthru
          _
        // Predicated region
        $region57: #{_lambda_.1} parent=11 // pred_check
          %p778 = pneg %p329
        $region58: #{_lambda_.1} parent=11 // pred_check_branch
          %780 = sbr.rel (%p778) target = $region60
        $region59: #{_lambda_.1} parent=11 // pred_region
          %s782 = ssub.s32 256, 256
          %783 = vsyncadd [#allocation21], %s782
          %s784 = sshll.u32 [#allocation22], 4
          %s785 = int_to_ptr.vmem [resolvable:$true] %s784
          %790 = dma.hbm_to_vmem [thread:$0]  %s12, 256, %s785, [#allocation21], 64, 64, 4
        $region60: #{_lambda_.1} parent=11 // pred_fallthru
          _
        // Predicated region
        $region61: #{_lambda_.1} parent=11 // pred_check
          %p791 = pneg %p350
        $region62: #{_lambda_.1} parent=11 // pred_check_branch
          %793 = sbr.rel (%p791) target = $region64
        $region63: #{_lambda_.1} parent=11 // pred_region
          %s795 = ssub.s32 16, 16
          %796 = vsyncadd [#allocation24], %s795
          %s798 = sshll.u32 [#allocation23], 4
          %s799 = int_to_ptr.vmem [resolvable:$true] %s798
          %801 = dma.hbm_to_vmem [thread:$0]  %s13, 16, %s799, [#allocation24]
        $region64: #{_lambda_.1} parent=11 // pred_fallthru
          _
        // Predicated region
        $region65: #{_lambda_.1} parent=11 // pred_check
          %p802 = pneg %p371
        $region66: #{_lambda_.1} parent=11 // pred_check_branch
          %804 = sbr.rel (%p802) target = $region68
        $region67: #{_lambda_.1} parent=11 // pred_region
          %s806 = ssub.s32 16, 16
          %807 = vsyncadd [#allocation24], %s806
          %s809 = sshll.u32 [#allocation25], 4
          %s810 = int_to_ptr.vmem [resolvable:$true] %s809
          %812 = dma.hbm_to_vmem [thread:$0]  %s14, 16, %s810, [#allocation24]
        $region68: #{_lambda_.1} parent=11 // pred_fallthru
          _
        // Predicated region
        $region69: #{_lambda_.1} parent=11 // pred_check
          %p813 = pneg %p392
        $region70: #{_lambda_.1} parent=11 // pred_check_branch
          %815 = sbr.rel (%p813) target = $region72
        $region71: #{_lambda_.1} parent=11 // pred_region
          %s817 = ssub.s32 16, 16
          %818 = vsyncadd [#allocation27], %s817
          %s820 = sshll.u32 [#allocation26], 4
          %s821 = int_to_ptr.vmem [resolvable:$true] %s820
          %823 = dma.hbm_to_vmem [thread:$0]  %s15, 16, %s821, [#allocation27]
        $region72: #{_lambda_.1} parent=11 // pred_fallthru
          _
        // Predicated region
        $region73: #{_lambda_.1} parent=11 // pred_check
          %p824 = pneg %p413
        $region74: #{_lambda_.1} parent=11 // pred_check_branch
          %826 = sbr.rel (%p824) target = $region76
        $region75: #{_lambda_.1} parent=11 // pred_region
          %s828 = ssub.s32 256, 256
          %829 = vsyncadd [#allocation27], %s828
          %s830 = sshll.u32 [#allocation28], 4
          %s831 = int_to_ptr.vmem [resolvable:$true] %s830
          %836 = dma.hbm_to_vmem [thread:$0]  %s16, 256, %s831, [#allocation27], 64, 64, 4
        $region76: #{_lambda_.1} parent=11 // pred_fallthru
          _
        // Predicated region
        $region77: #{_lambda_.1} parent=11 // pred_check
          %p837 = pneg %p434
        $region78: #{_lambda_.1} parent=11 // pred_check_branch
          %839 = sbr.rel (%p837) target = $region80
        $region79: #{_lambda_.1} parent=11 // pred_region
          %s841 = ssub.s32 16, 16
          %842 = vsyncadd [#allocation30], %s841
          %s844 = sshll.u32 [#allocation29], 4
          %s845 = int_to_ptr.vmem [resolvable:$true] %s844
          %847 = dma.hbm_to_vmem [thread:$0]  %s17, 16, %s845, [#allocation30]
        $region80: #{_lambda_.1} parent=11 // pred_fallthru
          _
        // Predicated region
        $region81: #{_lambda_.1} parent=11 // pred_check
          %p848 = pneg %p455
        $region82: #{_lambda_.1} parent=11 // pred_check_branch
          %850 = sbr.rel (%p848) target = $region84
        $region83: #{_lambda_.1} parent=11 // pred_region
          %s852 = ssub.s32 512, 512
          %853 = vsyncadd [#allocation30], %s852
          %s854 = sshll.u32 [#allocation31], 4
          %s855 = int_to_ptr.vmem [resolvable:$true] %s854
          %860 = dma.hbm_to_vmem [thread:$0]  %s18, 512, %s855, [#allocation30], 64, 64, 4
        $region84: #{_lambda_.1} parent=11 // pred_fallthru
          _
        // Predicated region
        $region85: #{_lambda_.1} parent=11 // pred_check
          %p861 = pneg %p476
        $region86: #{_lambda_.1} parent=11 // pred_check_branch
          %863 = sbr.rel (%p861) target = $region88
        $region87: #{_lambda_.1} parent=11 // pred_region
          %s865 = ssub.s32 16, 16
          %866 = vsyncadd [#allocation33], %s865
          %s868 = sshll.u32 [#allocation32], 4
          %s869 = int_to_ptr.vmem [resolvable:$true] %s868
          %871 = dma.hbm_to_vmem [thread:$0]  %s19, 16, %s869, [#allocation33]
        $region88: #{_lambda_.1} parent=11 // pred_fallthru
          _
        // Predicated region
        $region89: #{_lambda_.1} parent=11 // pred_check
          %p872 = pneg %p497
        $region90: #{_lambda_.1} parent=11 // pred_check_branch
          %874 = sbr.rel (%p872) target = $region92
        $region91: #{_lambda_.1} parent=11 // pred_region
          %s876 = ssub.s32 256, 256
          %877 = vsyncadd [#allocation33], %s876
          %s878 = sshll.u32 [#allocation34], 4
          %s879 = int_to_ptr.vmem [resolvable:$true] %s878
          %884 = dma.hbm_to_vmem [thread:$0]  %s20, 256, %s879, [#allocation33], 64, 64, 4
        $region92: #{_lambda_.1} parent=11 // pred_fallthru
          _
        // Predicated region
        $region93: #{_lambda_.1} parent=11 // pred_check
          %p885 = pneg %p518
        $region94: #{_lambda_.1} parent=11 // pred_check_branch
          %887 = sbr.rel (%p885) target = $region96
        $region95: #{_lambda_.1} parent=11 // pred_region
          %s889 = ssub.s32 16, 16
          %890 = vsyncadd [#allocation36], %s889
          %s892 = sshll.u32 [#allocation35], 4
          %s893 = int_to_ptr.vmem [resolvable:$true] %s892
          %895 = dma.hbm_to_vmem [thread:$0]  %s21, 16, %s893, [#allocation36]
        $region96: #{_lambda_.1} parent=11 // pred_fallthru
          _
        // Predicated region
        $region97: #{_lambda_.1} parent=11 // pred_check
          %p896 = pneg %p539
        $region98: #{_lambda_.1} parent=11 // pred_check_branch
          %898 = sbr.rel (%p896) target = $region100
        $region99: #{_lambda_.1} parent=11 // pred_region
          %s900 = ssub.s32 256, 256
          %901 = vsyncadd [#allocation36], %s900
          %s902 = sshll.u32 [#allocation37], 4
          %s903 = int_to_ptr.vmem [resolvable:$true] %s902
          %908 = dma.hbm_to_vmem [thread:$0]  %s22, 256, %s903, [#allocation36], 64, 64, 4
        $region100: #{_lambda_.1} parent=11 // pred_fallthru
          _
        // Predicated region
        $region101: #{_lambda_.1} parent=11 // pred_check
          %p909 = pneg %p560
        $region102: #{_lambda_.1} parent=11 // pred_check_branch
          %911 = sbr.rel (%p909) target = $region104
        $region103: #{_lambda_.1} parent=11 // pred_region
          %s913 = ssub.s32 16, 16
          %914 = vsyncadd [#allocation39], %s913
          %s916 = sshll.u32 [#allocation38], 4
          %s917 = int_to_ptr.vmem [resolvable:$true] %s916
          %919 = dma.hbm_to_vmem [thread:$0]  %s23, 16, %s917, [#allocation39]
        $region104: #{_lambda_.1} parent=11 // pred_fallthru
          _
        // Predicated region
        $region105: #{_lambda_.1} parent=11 // pred_check
          %p920 = pneg %p581
        $region106: #{_lambda_.1} parent=11 // pred_check_branch
          %922 = sbr.rel (%p920) target = $region108
        $region107: #{_lambda_.1} parent=11 // pred_region
          %s924 = ssub.s32 256, 256
          %925 = vsyncadd [#allocation39], %s924
          %s926 = sshll.u32 [#allocation40], 4
          %s927 = int_to_ptr.vmem [resolvable:$true] %s926
          %932 = dma.hbm_to_vmem [thread:$0]  %s24, 256, %s927, [#allocation39], 64, 64, 4
        $region108: #{_lambda_.1} parent=11 // pred_fallthru
          _
        // Predicated region
        $region109: #{_lambda_.1} parent=11 // pred_check
          %p933 = pneg %p602
        $region110: #{_lambda_.1} parent=11 // pred_check_branch
          %935 = sbr.rel (%p933) target = $region112
        $region111: #{_lambda_.1} parent=11 // pred_region
          %s937 = ssub.s32 16, 16
          %938 = vsyncadd [#allocation42], %s937
          %s940 = sshll.u32 [#allocation41], 4
          %s941 = int_to_ptr.vmem [resolvable:$true] %s940
          %943 = dma.hbm_to_vmem [thread:$0]  %s25, 16, %s941, [#allocation42]
        $region112: #{_lambda_.1} parent=11 // pred_fallthru
          _
      $region12: #{_lambda_.1} parent=5 // pred_fallthru
        _
      %p944 = scmp.lt.s32.totalorder %s51, 2
      // Predicated region
      $region113: #{_lambda_.1} parent=5 // pred_check
        %p945 = pneg %p944
      $region114: #{_lambda_.1} parent=5 // pred_check_branch
        %947 = sbr.rel (%p945) target = $region116
      $region115: #{_lambda_.1} parent=5 // pred_region
        // Predicated region
        $region117: #{_lambda_.1} parent=115 // pred_check
          %p948 = pneg %p71
        $region118: #{_lambda_.1} parent=115 // pred_check_branch
          %950 = sbr.rel (%p948) target = $region120
        $region119: #{_lambda_.1} parent=115 // pred_region
          %s951 = sand.u32 %s61, 1
          %s952 = scalar_lea.sflag [#allocation3], %s951
          %s953 = sand.u32 %s61, 1
          %s954 = smul.addr %s953, 8
          %s955 = scalar_lea.vmem [#allocation2], %s954
          %s957 = ssub.s32 128, 128
          %958 = vsyncadd %s952, %s957
          %s959 = smul.addr %s51, 2
          %s960 = smul.addr %s959, 64
          %s961 = scalar_lea.hbm %s0, %s960
          %s963 = sshll.u32 %s955, 4
          %s964 = int_to_ptr.vmem [resolvable:$true] %s963
          %966 = dma.hbm_to_vmem [thread:$0]  %s961, 128, %s964, %s952
        $region120: #{_lambda_.1} parent=115 // pred_fallthru
          _
      $region116: #{_lambda_.1} parent=5 // pred_fallthru
        _
      %p967 = scmp.le.s32.totalorder 1, %s51
      %p968 = scmp.lt.s32.totalorder %s51, 3
      %p969 = pnand %p967, %p968
      %p970 = pneg %p969
      // Predicated region
      $region121: #{_lambda_.1} parent=5 // pred_check
        _
      $region122: #{_lambda_.1} parent=5 // pred_check_branch
        %972 = sbr.rel (%p969) target = $region124
      $region123: #{_lambda_.1} parent=5 // pred_region
        %s973 = ssub.s32 %s51, 1
        %s974 = sand.u32 %s64, 1
        %s975 = scalar_lea.sflag [#allocation3], %s974
        %s976 = sand.u32 %s64, 1
        %s977 = smul.addr %s976, 8
        %s978 = scalar_lea.vmem [#allocation2], %s977
        // Predicated region
        $region125: #{_lambda_.1} parent=123 // pred_check
          %p979 = pneg %p77
        $region126: #{_lambda_.1} parent=123 // pred_check_branch
          %981 = sbr.rel (%p979) target = $region128
        $region127: #{_lambda_.1} parent=123 // pred_region
          %982 = dma.done %s975, 128
        $region128: #{_lambda_.1} parent=123 // pred_fallthru
          _
        // Predicated region
        $region129: #{_lambda_.1} parent=123 // pred_check
          %p983 = pneg %p98
        $region130: #{_lambda_.1} parent=123 // pred_check_branch
          %985 = sbr.rel (%p983) target = $region132
        $region131: #{_lambda_.1} parent=123 // pred_region
          %986 = dma.done [#allocation6], 64
        $region132: #{_lambda_.1} parent=123 // pred_fallthru
          _
        // Predicated region
        $region133: #{_lambda_.1} parent=123 // pred_check
          %p987 = pneg %p119
        $region134: #{_lambda_.1} parent=123 // pred_check_branch
          %989 = sbr.rel (%p987) target = $region136
        $region135: #{_lambda_.1} parent=123 // pred_region
          %990 = dma.done [#allocation6], 1536
        $region136: #{_lambda_.1} parent=123 // pred_fallthru
          _
        // Predicated region
        $region137: #{_lambda_.1} parent=123 // pred_check
          %p991 = pneg %p140
        $region138: #{_lambda_.1} parent=123 // pred_check_branch
          %993 = sbr.rel (%p991) target = $region140
        $region139: #{_lambda_.1} parent=123 // pred_region
          %994 = dma.done [#allocation9], 16
        $region140: #{_lambda_.1} parent=123 // pred_fallthru
          _
        // Predicated region
        $region141: #{_lambda_.1} parent=123 // pred_check
          %p995 = pneg %p161
        $region142: #{_lambda_.1} parent=123 // pred_check_branch
          %997 = sbr.rel (%p995) target = $region144
        $region143: #{_lambda_.1} parent=123 // pred_region
          %998 = dma.done [#allocation9], 16
        $region144: #{_lambda_.1} parent=123 // pred_fallthru
          _
        // Predicated region
        $region145: #{_lambda_.1} parent=123 // pred_check
          %p999 = pneg %p182
        $region146: #{_lambda_.1} parent=123 // pred_check_branch
          %1001 = sbr.rel (%p999) target = $region148
        $region147: #{_lambda_.1} parent=123 // pred_region
          %1002 = dma.done [#allocation12], 16
        $region148: #{_lambda_.1} parent=123 // pred_fallthru
          _
        // Predicated region
        $region149: #{_lambda_.1} parent=123 // pred_check
          %p1003 = pneg %p203
        $region150: #{_lambda_.1} parent=123 // pred_check_branch
          %1005 = sbr.rel (%p1003) target = $region152
        $region151: #{_lambda_.1} parent=123 // pred_region
          %1006 = dma.done [#allocation12], 512
        $region152: #{_lambda_.1} parent=123 // pred_fallthru
          _
        // Predicated region
        $region153: #{_lambda_.1} parent=123 // pred_check
          %p1007 = pneg %p224
        $region154: #{_lambda_.1} parent=123 // pred_check_branch
          %1009 = sbr.rel (%p1007) target = $region156
        $region155: #{_lambda_.1} parent=123 // pred_region
          %1010 = dma.done [#allocation15], 32
        $region156: #{_lambda_.1} parent=123 // pred_fallthru
          _
        // Predicated region
        $region157: #{_lambda_.1} parent=123 // pred_check
          %p1011 = pneg %p245
        $region158: #{_lambda_.1} parent=123 // pred_check_branch
          %1013 = sbr.rel (%p1011) target = $region160
        $region159: #{_lambda_.1} parent=123 // pred_region
          %1014 = dma.done [#allocation15], 512
        $region160: #{_lambda_.1} parent=123 // pred_fallthru
          _
        // Predicated region
        $region161: #{_lambda_.1} parent=123 // pred_check
          %p1015 = pneg %p266
        $region162: #{_lambda_.1} parent=123 // pred_check_branch
          %1017 = sbr.rel (%p1015) target = $region164
        $region163: #{_lambda_.1} parent=123 // pred_region
          %1018 = dma.done [#allocation18], 32
        $region164: #{_lambda_.1} parent=123 // pred_fallthru
          _
        // Predicated region
        $region165: #{_lambda_.1} parent=123 // pred_check
          %p1019 = pneg %p287
        $region166: #{_lambda_.1} parent=123 // pred_check_branch
          %1021 = sbr.rel (%p1019) target = $region168
        $region167: #{_lambda_.1} parent=123 // pred_region
          %1022 = dma.done [#allocation18], 512
        $region168: #{_lambda_.1} parent=123 // pred_fallthru
          _
        // Predicated region
        $region169: #{_lambda_.1} parent=123 // pred_check
          %p1023 = pneg %p308
        $region170: #{_lambda_.1} parent=123 // pred_check_branch
          %1025 = sbr.rel (%p1023) target = $region172
        $region171: #{_lambda_.1} parent=123 // pred_region
          %1026 = dma.done [#allocation21], 32
        $region172: #{_lambda_.1} parent=123 // pred_fallthru
          _
        // Predicated region
        $region173: #{_lambda_.1} parent=123 // pred_check
          %p1027 = pneg %p329
        $region174: #{_lambda_.1} parent=123 // pred_check_branch
          %1029 = sbr.rel (%p1027) target = $region176
        $region175: #{_lambda_.1} parent=123 // pred_region
          %1030 = dma.done [#allocation21], 256
        $region176: #{_lambda_.1} parent=123 // pred_fallthru
          _
        // Predicated region
        $region177: #{_lambda_.1} parent=123 // pred_check
          %p1031 = pneg %p350
        $region178: #{_lambda_.1} parent=123 // pred_check_branch
          %1033 = sbr.rel (%p1031) target = $region180
        $region179: #{_lambda_.1} parent=123 // pred_region
          %1034 = dma.done [#allocation24], 16
        $region180: #{_lambda_.1} parent=123 // pred_fallthru
          _
        // Predicated region
        $region181: #{_lambda_.1} parent=123 // pred_check
          %p1035 = pneg %p371
        $region182: #{_lambda_.1} parent=123 // pred_check_branch
          %1037 = sbr.rel (%p1035) target = $region184
        $region183: #{_lambda_.1} parent=123 // pred_region
          %1038 = dma.done [#allocation24], 16
        $region184: #{_lambda_.1} parent=123 // pred_fallthru
          _
        // Predicated region
        $region185: #{_lambda_.1} parent=123 // pred_check
          %p1039 = pneg %p392
        $region186: #{_lambda_.1} parent=123 // pred_check_branch
          %1041 = sbr.rel (%p1039) target = $region188
        $region187: #{_lambda_.1} parent=123 // pred_region
          %1042 = dma.done [#allocation27], 16
        $region188: #{_lambda_.1} parent=123 // pred_fallthru
          _
        // Predicated region
        $region189: #{_lambda_.1} parent=123 // pred_check
          %p1043 = pneg %p413
        $region190: #{_lambda_.1} parent=123 // pred_check_branch
          %1045 = sbr.rel (%p1043) target = $region192
        $region191: #{_lambda_.1} parent=123 // pred_region
          %1046 = dma.done [#allocation27], 256
        $region192: #{_lambda_.1} parent=123 // pred_fallthru
          _
        // Predicated region
        $region193: #{_lambda_.1} parent=123 // pred_check
          %p1047 = pneg %p434
        $region194: #{_lambda_.1} parent=123 // pred_check_branch
          %1049 = sbr.rel (%p1047) target = $region196
        $region195: #{_lambda_.1} parent=123 // pred_region
          %1050 = dma.done [#allocation30], 16
        $region196: #{_lambda_.1} parent=123 // pred_fallthru
          _
        // Predicated region
        $region197: #{_lambda_.1} parent=123 // pred_check
          %p1051 = pneg %p455
        $region198: #{_lambda_.1} parent=123 // pred_check_branch
          %1053 = sbr.rel (%p1051) target = $region200
        $region199: #{_lambda_.1} parent=123 // pred_region
          %1054 = dma.done [#allocation30], 512
        $region200: #{_lambda_.1} parent=123 // pred_fallthru
          _
        // Predicated region
        $region201: #{_lambda_.1} parent=123 // pred_check
          %p1055 = pneg %p476
        $region202: #{_lambda_.1} parent=123 // pred_check_branch
          %1057 = sbr.rel (%p1055) target = $region204
        $region203: #{_lambda_.1} parent=123 // pred_region
          %1058 = dma.done [#allocation33], 16
        $region204: #{_lambda_.1} parent=123 // pred_fallthru
          _
        // Predicated region
        $region205: #{_lambda_.1} parent=123 // pred_check
          %p1059 = pneg %p497
        $region206: #{_lambda_.1} parent=123 // pred_check_branch
          %1061 = sbr.rel (%p1059) target = $region208
        $region207: #{_lambda_.1} parent=123 // pred_region
          %1062 = dma.done [#allocation33], 256
        $region208: #{_lambda_.1} parent=123 // pred_fallthru
          _
        // Predicated region
        $region209: #{_lambda_.1} parent=123 // pred_check
          %p1063 = pneg %p518
        $region210: #{_lambda_.1} parent=123 // pred_check_branch
          %1065 = sbr.rel (%p1063) target = $region212
        $region211: #{_lambda_.1} parent=123 // pred_region
          %1066 = dma.done [#allocation36], 16
        $region212: #{_lambda_.1} parent=123 // pred_fallthru
          _
        // Predicated region
        $region213: #{_lambda_.1} parent=123 // pred_check
          %p1067 = pneg %p539
        $region214: #{_lambda_.1} parent=123 // pred_check_branch
          %1069 = sbr.rel (%p1067) target = $region216
        $region215: #{_lambda_.1} parent=123 // pred_region
          %1070 = dma.done [#allocation36], 256
        $region216: #{_lambda_.1} parent=123 // pred_fallthru
          _
        // Predicated region
        $region217: #{_lambda_.1} parent=123 // pred_check
          %p1071 = pneg %p560
        $region218: #{_lambda_.1} parent=123 // pred_check_branch
          %1073 = sbr.rel (%p1071) target = $region220
        $region219: #{_lambda_.1} parent=123 // pred_region
          %1074 = dma.done [#allocation39], 16
        $region220: #{_lambda_.1} parent=123 // pred_fallthru
          _
        // Predicated region
        $region221: #{_lambda_.1} parent=123 // pred_check
          %p1075 = pneg %p581
        $region222: #{_lambda_.1} parent=123 // pred_check_branch
          %1077 = sbr.rel (%p1075) target = $region224
        $region223: #{_lambda_.1} parent=123 // pred_region
          %1078 = dma.done [#allocation39], 256
        $region224: #{_lambda_.1} parent=123 // pred_fallthru
          _
        // Predicated region
        $region225: #{_lambda_.1} parent=123 // pred_check
          %p1079 = pneg %p602
        $region226: #{_lambda_.1} parent=123 // pred_check_branch
          %1081 = sbr.rel (%p1079) target = $region228
        $region227: #{_lambda_.1} parent=123 // pred_region
          %1082 = dma.done [#allocation42], 16
        $region228: #{_lambda_.1} parent=123 // pred_fallthru
          _
        %s1083 = sand.u32 %s64, 1
        %s1084 = scalar_lea.sflag [#allocation3], %s1083
        %s1085 = sand.u32 %s64, 1
        %s1086 = smul.addr %s1085, 8
        %s1087 = scalar_lea.vmem [#allocation2], %s1086
        %p1088 = pneg %p77
        %p1089 = pneg %p74
        %p1090 = pneg %p98
        %p1091 = pneg %p95
        %p1092 = pneg %p119
        %p1093 = pneg %p116
        %p1094 = pneg %p140
        %p1095 = pneg %p137
        %p1096 = pneg %p161
        %p1097 = pneg %p158
        %p1098 = pneg %p182
        %p1099 = pneg %p179
        %p1100 = pneg %p203
        %p1101 = pneg %p200
        %p1102 = pneg %p224
        %p1103 = pneg %p221
        %p1104 = pneg %p245
        %p1105 = pneg %p242
        %p1106 = pneg %p266
        %p1107 = pneg %p263
        %p1108 = pneg %p287
        %p1109 = pneg %p284
        %p1110 = pneg %p308
        %p1111 = pneg %p305
        %p1112 = pneg %p329
        %p1113 = pneg %p326
        %p1114 = pneg %p350
        %p1115 = pneg %p347
        %p1116 = pneg %p371
        %p1117 = pneg %p368
        %p1118 = pneg %p392
        %p1119 = pneg %p389
        %p1120 = pneg %p413
        %p1121 = pneg %p410
        %p1122 = pneg %p434
        %p1123 = pneg %p431
        %p1124 = pneg %p455
        %p1125 = pneg %p452
        %p1126 = pneg %p476
        %p1127 = pneg %p473
        %p1128 = pneg %p497
        %p1129 = pneg %p494
        %p1130 = pneg %p518
        %p1131 = pneg %p515
        %p1132 = pneg %p539
        %p1133 = pneg %p536
        %p1134 = pneg %p560
        %p1135 = pneg %p557
        %p1136 = pneg %p581
        %p1137 = pneg %p578
        %p1138 = pneg %p602
        %p1139 = pneg %p599
        %p1140 = pneg %p628
        %p1141 = pneg %p625
        %s1142 = sand.u32 %s615, 1
        %s1143 = scalar_lea.sflag [#allocation4], %s1142
        %s1144 = sand.u32 %s615, 1
        %s1145 = smul.addr %s1144, 16
        %s1146 = scalar_lea.vmem [#allocation43], %s1145
        %v1148 = vld [vmem:[%s978] sm:$0xff]
        %v1149 = vld [vmem:[#allocation7] sm:$0xf]
        %v1150 = vld [vmem:[#allocation7 + $0x4] sm:$0xf]
        %v1151 = vld [vmem:[#allocation7 + $0x8] sm:$0xf]
        %v1152 = vld [vmem:[#allocation7 + $0xc] sm:$0xf]
        %v1153 = vld [vmem:[#allocation7 + $0x10] sm:$0xf]
        %v1154 = vld [vmem:[#allocation7 + $0x14] sm:$0xf]
        %v1155 = vld [vmem:[#allocation7 + $0x18] sm:$0xf]
        %v1156 = vld [vmem:[#allocation7 + $0x1c] sm:$0xf]
        %v1157 = vld [vmem:[#allocation7 + $0x20] sm:$0xf]
        %v1158 = vld [vmem:[#allocation7 + $0x24] sm:$0xf]
        %v1159 = vld [vmem:[#allocation7 + $0x28] sm:$0xf]
        %v1160 = vld [vmem:[#allocation7 + $0x2c] sm:$0xf]
        %v1161 = vld [vmem:[#allocation7 + $0x30] sm:$0xf]
        %v1162 = vld [vmem:[#allocation7 + $0x34] sm:$0xf]
        %v1163 = vld [vmem:[#allocation7 + $0x38] sm:$0xf]
        %v1164 = vld [vmem:[#allocation7 + $0x3c] sm:$0xf]
        %v1165 = vld [vmem:[#allocation7 + $0x40] sm:$0xf]
        %v1166 = vld [vmem:[#allocation7 + $0x44] sm:$0xf]
        %v1167 = vld [vmem:[#allocation7 + $0x48] sm:$0xf]
        %v1168 = vld [vmem:[#allocation7 + $0x4c] sm:$0xf]
        %v1169 = vld [vmem:[#allocation7 + $0x50] sm:$0xf]
        %v1170 = vld [vmem:[#allocation7 + $0x54] sm:$0xf]
        %v1171 = vld [vmem:[#allocation7 + $0x58] sm:$0xf]
        %v1172 = vld [vmem:[#allocation7 + $0x5c] sm:$0xf]
        %v1174 = vcombine.high %v1148, %v1148
        %v1176 = vpack.c.bf16 %v1148, %v1148
        %v1177 = vpack.c.bf16 %v1174, %v1174
        %v1178 = vld [vmem:[#allocation8] sm:$0x1]
        %v1180 = vlaneseq
        %v1181 = vshrl.u32 %v1180, 7
        %v1182 = vsub.s32 0, %v1181
        %v1183 = vrot.slane %v1178, %v1182
        %v1209 = vunpack.c.l.b16 %v1149
        %v1210 = vunpack.c.l.b16 %v1150
        %v1211 = vunpack.c.l.b16 %v1151
        %v1212 = vunpack.c.l.b16 %v1152
        %v1213 = vunpack.c.l.b16 %v1153
        %v1214 = vunpack.c.l.b16 %v1154
        %v1215 = vunpack.c.l.b16 %v1155
        %v1216 = vunpack.c.l.b16 %v1156
        %v1217 = vunpack.c.l.b16 %v1157
        %v1218 = vunpack.c.l.b16 %v1158
        %v1219 = vunpack.c.l.b16 %v1159
        %v1220 = vunpack.c.l.b16 %v1160
        %v1221 = vunpack.c.l.b16 %v1161
        %v1222 = vunpack.c.l.b16 %v1162
        %v1223 = vunpack.c.l.b16 %v1163
        %v1224 = vunpack.c.l.b16 %v1164
        %v1225 = vunpack.c.l.b16 %v1165
        %v1226 = vunpack.c.l.b16 %v1166
        %v1227 = vunpack.c.l.b16 %v1167
        %v1228 = vunpack.c.l.b16 %v1168
        %v1229 = vunpack.c.l.b16 %v1169
        %v1230 = vunpack.c.l.b16 %v1170
        %v1231 = vunpack.c.l.b16 %v1171
        %v1232 = vunpack.c.l.b16 %v1172
        %v1233 = vpack.c.b16 %v1210, %v1209
        %v1234 = vpack.c.b16 %v1212, %v1211
        %v1235 = vpack.c.b16 %v1214, %v1213
        %v1236 = vpack.c.b16 %v1216, %v1215
        %v1237 = vpack.c.b16 %v1218, %v1217
        %v1238 = vpack.c.b16 %v1220, %v1219
        %v1239 = vpack.c.b16 %v1222, %v1221
        %v1240 = vpack.c.b16 %v1224, %v1223
        %v1241 = vpack.c.b16 %v1226, %v1225
        %v1242 = vpack.c.b16 %v1228, %v1227
        %v1243 = vpack.c.b16 %v1230, %v1229
        %v1244 = vpack.c.b16 %v1232, %v1231
        %vm1257 = vcmask 523264
        %v1259 = vsel %vm1257, %v1177, 0
        %1261 = vmatprep.subr.bf16.mxu0 0
        %1262 = vmatpush1.bf16.msra.mxu0 %v1233
        %1263 = vmatprep.subr.bf16.mxu0 0
        %1264 = vmatpush1.bf16.msra.mxu0 %v1234
        %1265 = vmatprep.subr.bf16.mxu0 0
        %1266 = vmatpush1.bf16.msra.mxu0 %v1235
        %1267 = vmatprep.subr.bf16.mxu0 0
        %1268 = vmatpush1.bf16.msra.mxu0 %v1236
        %1269 = vmatprep.subr.bf16.mxu0 0
        %1270 = vmatpush1.bf16.msra.mxu0 %v1237
        %1271 = vmatprep.subr.bf16.mxu0 0
        %1272 = vmatpush1.bf16.msra.mxu0 %v1238
        %1273 = vmatprep.subr.bf16.mxu0 0
        %1274 = vmatpush1.bf16.msra.mxu0 %v1239
        %1275 = vmatprep.subr.bf16.mxu0 0
        %1276 = vmatpush1.bf16.msra.mxu0 %v1240
        %1277 = vmatprep.subr.bf16.mxu0 0
        %1278 = vmatpush1.bf16.msra.mxu0 %v1241
        %1279 = vmatprep.subr.bf16.mxu0 0
        %1280 = vmatpush1.bf16.msra.mxu0 %v1242
        %1281 = vmatprep.subr.bf16.mxu0 0
        %1282 = vmatpush1.bf16.msra.mxu0 %v1243
        %1283 = vmatprep.subr.bf16.mxu0 0
        %1284 = vmatpush1.bf16.msra.mxu0 %v1244
        %1285 = vmatprep.subr.bf16.mxu0 0
        %1286 = vmatpush1.bf16.msra.mxu0 0
        %1287 = vmatprep.subr.bf16.mxu0 0
        %1288 = vmatpush1.bf16.msra.mxu0 0
        %1289 = vmatprep.subr.bf16.mxu0 0
        %1290 = vmatpush1.bf16.msra.mxu0 0
        %1291 = vmatprep.subr.bf16.mxu0 0
        %1292 = vmatpush1.bf16.msra.mxu0 0
        %1293 = vmatprep.mubr.bf16.mxu0 %v1259
        %1294 = vmatmul.mubr.bf16.gmra.mrb[0].mxu0 %v1176
        %v1295 = vpop.f32.mrb[0].mxu0
        %v1296 = vadd.f32 %v1183, %v1295
        %v1297 = vpop.f32.mrb[0].mxu0
        %v1298 = vpop.f32.mrb[0].mxu0
        %v1299 = vpop.f32.mrb[0].mxu0
        %1300 = vdwg.mxu0
        %v1301 = vld [vmem:[#allocation5] sm:$0xf]
        %v1302 = vadd.f32 %v1296, %v1301
        %v1303 = vld [vmem:[#allocation10] sm:$0x1]
        %v1304 = vld [vmem:[#allocation11] sm:$0x1]
        %vm1305 = vcmask 257024
        %v1306 = vsel %vm1305, %v1302, 0.0
        %1307 = vadd.xlane.f32.xlu0 %v1306
        %v1308 = vpop.xlane.xlu0 %1307
        %v1309 = vrcp.pop 32.0
        %v1310 = vmul.f32 %v1308, %v1309
        %v1311 = vsub.f32 %v1302, %v1310
        %v1312 = vmul.f32 %v1311, %v1311
        %v1313 = vsel %vm1305, %v1312, 0.0
        %1314 = vadd.xlane.f32.xlu0 %v1313
        %v1315 = vpop.xlane.xlu0 %1314
        %v1316 = vmul.f32 %v1315, %v1309
        %v1317 = vadd.f32 %v1316, 1e-06
        %v1318 = vrsqrt.pop %v1317
        %v1319 = vmul.f32 %v1311, %v1318
        %v1321 = vlaneseq
        %v1322 = vshrl.u32 %v1321, 7
        %v1323 = vsub.s32 0, %v1322
        %v1324 = vrot.slane %v1303, %v1323
        %v1326 = vmul.f32 %v1319, %v1324
        %v1328 = vlaneseq
        %v1329 = vshrl.u32 %v1328, 7
        %v1330 = vsub.s32 0, %v1329
        %v1331 = vrot.slane %v1304, %v1330
        %v1333 = vadd.f32 %v1326, %v1331
        %v1334 = vld [vmem:[#allocation13] sm:$0xf]
        %v1335 = vld [vmem:[#allocation13 + $0x4] sm:$0xf]
        %v1336 = vld [vmem:[#allocation13 + $0x8] sm:$0xf]
        %v1337 = vld [vmem:[#allocation13 + $0xc] sm:$0xf]
        %v1338 = vpack.c.bf16 %v1333, %v1333
        %v1339 = vld [vmem:[#allocation14] sm:$0x1]
        %v1341 = vlaneseq
        %v1342 = vshrl.u32 %v1341, 7
        %v1343 = vsub.s32 0, %v1342
        %v1344 = vrot.slane %v1339, %v1343
        %v1350 = vunpack.c.l.b16 %v1334
        %v1351 = vunpack.c.l.b16 %v1335
        %v1352 = vunpack.c.l.b16 %v1336
        %v1353 = vunpack.c.l.b16 %v1337
        %v1354 = vpack.c.b16 %v1351, %v1350
        %v1355 = vpack.c.b16 %v1353, %v1352
        %vm1358 = vcmask 261120
        %v1360 = vsel %vm1358, %v1338, 0
        %1362 = vmatprep.subr.bf16.mxu0 0
        %1363 = vmatpush1.bf16.msra.mxu0 %v1354
        %1364 = vmatprep.subr.bf16.mxu0 0
        %1365 = vmatpush1.bf16.msra.mxu0 %v1355
        %1366 = vmatprep.subr.bf16.mxu0 0
        %1367 = vmatpush1.bf16.msra.mxu0 0
        %1368 = vmatprep.subr.bf16.mxu0 0
        %1369 = vmatpush1.bf16.msra.mxu0 0
        %1370 = vmatprep.subr.bf16.mxu0 0
        %1371 = vmatpush1.bf16.msra.mxu0 0
        %1372 = vmatprep.subr.bf16.mxu0 0
        %1373 = vmatpush1.bf16.msra.mxu0 0
        %1374 = vmatprep.subr.bf16.mxu0 0
        %1375 = vmatpush1.bf16.msra.mxu0 0
        %1376 = vmatprep.subr.bf16.mxu0 0
        %1377 = vmatpush1.bf16.msra.mxu0 0
        %1378 = vmatprep.subr.bf16.mxu0 0
        %1379 = vmatpush1.bf16.msra.mxu0 0
        %1380 = vmatprep.subr.bf16.mxu0 0
        %1381 = vmatpush1.bf16.msra.mxu0 0
        %1382 = vmatprep.subr.bf16.mxu0 0
        %1383 = vmatpush1.bf16.msra.mxu0 0
        %1384 = vmatprep.subr.bf16.mxu0 0
        %1385 = vmatpush1.bf16.msra.mxu0 0
        %1386 = vmatprep.subr.bf16.mxu0 0
        %1387 = vmatpush1.bf16.msra.mxu0 0
        %1388 = vmatprep.subr.bf16.mxu0 0
        %1389 = vmatpush1.bf16.msra.mxu0 0
        %1390 = vmatprep.subr.bf16.mxu0 0
        %1391 = vmatpush1.bf16.msra.mxu0 0
        %1392 = vmatprep.subr.bf16.mxu0 0
        %1393 = vmatpush1.bf16.msra.mxu0 0
        %1394 = vmatprep.mubr.bf16.mxu0 0
        %1395 = vmatmul.mubr.bf16.gmra.mrb[0].mxu0 %v1360
        %v1396 = vpop.f32.mrb[0].mxu0
        %v1397 = vadd.f32 %v1344, %v1396
        %v1398 = vpop.f32.mrb[0].mxu0
        %v1399 = vpop.f32.mrb[0].mxu0
        %v1400 = vpop.f32.mrb[0].mxu0
        %1401 = vdwg.mxu0
        %v1402 = vld [vmem:[#allocation16] sm:$0xf]
        %v1403 = vld [vmem:[#allocation16 + $0x4] sm:$0xf]
        %v1404 = vld [vmem:[#allocation16 + $0x8] sm:$0xf]
        %v1405 = vld [vmem:[#allocation16 + $0xc] sm:$0xf]
        %v1406 = vld [vmem:[#allocation17] sm:$0x1]
        %v1408 = vlaneseq
        %v1409 = vshrl.u32 %v1408, 7
        %v1410 = vsub.s32 0, %v1409
        %v1411 = vrot.slane %v1406, %v1410
        %v1417 = vunpack.c.l.b16 %v1402
        %v1418 = vunpack.c.l.b16 %v1403
        %v1419 = vunpack.c.l.b16 %v1404
        %v1420 = vunpack.c.l.b16 %v1405
        %v1421 = vpack.c.b16 %v1418, %v1417
        %v1422 = vpack.c.b16 %v1420, %v1419
        %1425 = vmatprep.subr.bf16.mxu0 0
        %1426 = vmatpush1.bf16.msra.mxu0 %v1421
        %1427 = vmatprep.subr.bf16.mxu0 0
        %1428 = vmatpush1.bf16.msra.mxu0 %v1422
        %1429 = vmatprep.subr.bf16.mxu0 0
        %1430 = vmatpush1.bf16.msra.mxu0 0
        %1431 = vmatprep.subr.bf16.mxu0 0
        %1432 = vmatpush1.bf16.msra.mxu0 0
        %1433 = vmatprep.subr.bf16.mxu0 0
        %1434 = vmatpush1.bf16.msra.mxu0 0
        %1435 = vmatprep.subr.bf16.mxu0 0
        %1436 = vmatpush1.bf16.msra.mxu0 0
        %1437 = vmatprep.subr.bf16.mxu0 0
        %1438 = vmatpush1.bf16.msra.mxu0 0
        %1439 = vmatprep.subr.bf16.mxu0 0
        %1440 = vmatpush1.bf16.msra.mxu0 0
        %1441 = vmatprep.subr.bf16.mxu0 0
        %1442 = vmatpush1.bf16.msra.mxu0 0
        %1443 = vmatprep.subr.bf16.mxu0 0
        %1444 = vmatpush1.bf16.msra.mxu0 0
        %1445 = vmatprep.subr.bf16.mxu0 0
        %1446 = vmatpush1.bf16.msra.mxu0 0
        %1447 = vmatprep.subr.bf16.mxu0 0
        %1448 = vmatpush1.bf16.msra.mxu0 0
        %1449 = vmatprep.subr.bf16.mxu0 0
        %1450 = vmatpush1.bf16.msra.mxu0 0
        %1451 = vmatprep.subr.bf16.mxu0 0
        %1452 = vmatpush1.bf16.msra.mxu0 0
        %1453 = vmatprep.subr.bf16.mxu0 0
        %1454 = vmatpush1.bf16.msra.mxu0 0
        %1455 = vmatprep.subr.bf16.mxu0 0
        %1456 = vmatpush1.bf16.msra.mxu0 0
        %1457 = vmatprep.mubr.bf16.mxu0 0
        %1458 = vmatmul.mubr.bf16.gmra.mrb[0].mxu0 %v1360
        %v1459 = vpop.f32.mrb[0].mxu0
        %v1460 = vadd.f32 %v1411, %v1459
        %v1461 = vpop.f32.mrb[0].mxu0
        %v1462 = vpop.f32.mrb[0].mxu0
        %v1463 = vpop.f32.mrb[0].mxu0
        %1464 = vdwg.mxu0
        %v1465 = vld [vmem:[#allocation19] sm:$0xf]
        %v1466 = vld [vmem:[#allocation19 + $0x4] sm:$0xf]
        %v1467 = vld [vmem:[#allocation19 + $0x8] sm:$0xf]
        %v1468 = vld [vmem:[#allocation19 + $0xc] sm:$0xf]
        %v1469 = vld [vmem:[#allocation20] sm:$0x1]
        %v1471 = vlaneseq
        %v1472 = vshrl.u32 %v1471, 7
        %v1473 = vsub.s32 0, %v1472
        %v1474 = vrot.slane %v1469, %v1473
        %v1480 = vunpack.c.l.b16 %v1465
        %v1481 = vunpack.c.l.b16 %v1466
        %v1482 = vunpack.c.l.b16 %v1467
        %v1483 = vunpack.c.l.b16 %v1468
        %v1484 = vpack.c.b16 %v1481, %v1480
        %v1485 = vpack.c.b16 %v1483, %v1482
        %1488 = vmatprep.subr.bf16.mxu0 0
        %1489 = vmatpush1.bf16.msra.mxu0 %v1484
        %1490 = vmatprep.subr.bf16.mxu0 0
        %1491 = vmatpush1.bf16.msra.mxu0 %v1485
        %1492 = vmatprep.subr.bf16.mxu0 0
        %1493 = vmatpush1.bf16.msra.mxu0 0
        %1494 = vmatprep.subr.bf16.mxu0 0
        %1495 = vmatpush1.bf16.msra.mxu0 0
        %1496 = vmatprep.subr.bf16.mxu0 0
        %1497 = vmatpush1.bf16.msra.mxu0 0
        %1498 = vmatprep.subr.bf16.mxu0 0
        %1499 = vmatpush1.bf16.msra.mxu0 0
        %1500 = vmatprep.subr.bf16.mxu0 0
        %1501 = vmatpush1.bf16.msra.mxu0 0
        %1502 = vmatprep.subr.bf16.mxu0 0
        %1503 = vmatpush1.bf16.msra.mxu0 0
        %1504 = vmatprep.subr.bf16.mxu0 0
        %1505 = vmatpush1.bf16.msra.mxu0 0
        %1506 = vmatprep.subr.bf16.mxu0 0
        %1507 = vmatpush1.bf16.msra.mxu0 0
        %1508 = vmatprep.subr.bf16.mxu0 0
        %1509 = vmatpush1.bf16.msra.mxu0 0
        %1510 = vmatprep.subr.bf16.mxu0 0
        %1511 = vmatpush1.bf16.msra.mxu0 0
        %1512 = vmatprep.subr.bf16.mxu0 0
        %1513 = vmatpush1.bf16.msra.mxu0 0
        %1514 = vmatprep.subr.bf16.mxu0 0
        %1515 = vmatpush1.bf16.msra.mxu0 0
        %1516 = vmatprep.subr.bf16.mxu0 0
        %1517 = vmatpush1.bf16.msra.mxu0 0
        %1518 = vmatprep.subr.bf16.mxu0 0
        %1519 = vmatpush1.bf16.msra.mxu0 0
        %1520 = vmatprep.mubr.bf16.mxu0 0
        %1521 = vmatmul.mubr.bf16.gmra.mrb[0].mxu0 %v1360
        %v1522 = vpop.f32.mrb[0].mxu0
        %v1523 = vadd.f32 %v1474, %v1522
        %v1524 = vpop.f32.mrb[0].mxu0
        %v1525 = vpop.f32.mrb[0].mxu0
        %v1526 = vpop.f32.mrb[0].mxu0
        %1527 = vdwg.mxu0
        %v1528 = vpack.c.bf16 %v1397, %v1397
        %v1529 = vpack.c.bf16 %v1460, %v1460
        %vm1530 = vcmask 130048
        %v1532 = vsel %vm1530, %v1528, 0
        %v1535 = vsel %vm1530, %v1529, 0
        %1537 = vmatprep.subr.bf16.mxu0 0
        %1538 = vmatpush1.bf16.xpose.msra.mxu0 %v1535
        %1539 = vmatprep.subr.bf16.mxu0 0
        %1540 = vmatpush1.bf16.xpose.msra.mxu0 0
        %1541 = vmatprep.subr.bf16.mxu0 0
        %1542 = vmatpush1.bf16.xpose.msra.mxu0 0
        %1543 = vmatprep.subr.bf16.mxu0 0
        %1544 = vmatpush1.bf16.xpose.msra.mxu0 0
        %1545 = vmatprep.subr.bf16.mxu0 0
        %1546 = vmatpush1.bf16.xpose.msra.mxu0 0
        %1547 = vmatprep.subr.bf16.mxu0 0
        %1548 = vmatpush1.bf16.xpose.msra.mxu0 0
        %1549 = vmatprep.subr.bf16.mxu0 0
        %1550 = vmatpush1.bf16.xpose.msra.mxu0 0
        %1551 = vmatprep.subr.bf16.mxu0 0
        %1552 = vmatpush1.bf16.xpose.msra.mxu0 0
        %1553 = vmatprep.subr.bf16.mxu0 0
        %1554 = vmatpush1.bf16.xpose.msra.mxu0 0
        %1555 = vmatprep.subr.bf16.mxu0 0
        %1556 = vmatpush1.bf16.xpose.msra.mxu0 0
        %1557 = vmatprep.subr.bf16.mxu0 0
        %1558 = vmatpush1.bf16.xpose.msra.mxu0 0
        %1559 = vmatprep.subr.bf16.mxu0 0
        %1560 = vmatpush1.bf16.xpose.msra.mxu0 0
        %1561 = vmatprep.subr.bf16.mxu0 0
        %1562 = vmatpush1.bf16.xpose.msra.mxu0 0
        %1563 = vmatprep.subr.bf16.mxu0 0
        %1564 = vmatpush1.bf16.xpose.msra.mxu0 0
        %1565 = vmatprep.subr.bf16.mxu0 0
        %1566 = vmatpush1.bf16.xpose.msra.mxu0 0
        %1567 = vmatprep.subr.bf16.mxu0 0
        %1568 = vmatpush1.bf16.xpose.msra.mxu0 0
        %1569 = vmatprep.mubr.bf16.mxu0 0
        %1570 = vmatmul.mubr.bf16.gmra.mrb[0].mxu0 %v1532
        %v1571 = vpop.f32.mrb[0].mxu0
        %v1572 = vadd.f32 0.0, %v1571
        %v1573 = vpop.f32.mrb[0].mxu0
        %v1574 = vpop.f32.mrb[0].mxu0
        %v1575 = vpop.f32.mrb[0].mxu0
        %1576 = vdwg.mxu0
        %vm1577 = vcmask 27648
        %v1578 = vsel %vm1577, %v1572, -inf
        %1579 = vmax.xlane.f32.xlu0 %v1578
        %v1580 = vpop.xlane.xlu0 %1579
        %v1581 = vsub.f32 %v1572, %v1580
        %v1582 = vmul.f32 %v1581, 1.442695
        %v1583 = vpow.pop %v1582
        %v1584 = vsel %vm1577, %v1583, 0.0
        %1585 = vadd.xlane.f32.xlu0 %v1584
        %v1586 = vpop.xlane.xlu0 %1585
        %v1587 = vrcp.pop %v1586
        %v1588 = vpack.c.bf16 %v1583, %v1583
        %v1589 = vpack.c.bf16 %v1523, %v1523
        %vm1590 = vcmask 31744
        %v1592 = vsel %vm1590, %v1588, 0
        %vm1594 = vcmask 1041408
        %v1596 = vsel %vm1594, %v1589, 0
        %1598 = vmatprep.subr.bf16.mxu0 0
        %1599 = vmatpush1.bf16.msra.mxu0 %v1596
        %1600 = vmatprep.subr.bf16.mxu0 0
        %1601 = vmatpush1.bf16.msra.mxu0 0
        %1602 = vmatprep.subr.bf16.mxu0 0
        %1603 = vmatpush1.bf16.msra.mxu0 0
        %1604 = vmatprep.subr.bf16.mxu0 0
        %1605 = vmatpush1.bf16.msra.mxu0 0
        %1606 = vmatprep.subr.bf16.mxu0 0
        %1607 = vmatpush1.bf16.msra.mxu0 0
        %1608 = vmatprep.subr.bf16.mxu0 0
        %1609 = vmatpush1.bf16.msra.mxu0 0
        %1610 = vmatprep.subr.bf16.mxu0 0
        %1611 = vmatpush1.bf16.msra.mxu0 0
        %1612 = vmatprep.subr.bf16.mxu0 0
        %1613 = vmatpush1.bf16.msra.mxu0 0
        %1614 = vmatprep.subr.bf16.mxu0 0
        %1615 = vmatpush1.bf16.msra.mxu0 0
        %1616 = vmatprep.subr.bf16.mxu0 0
        %1617 = vmatpush1.bf16.msra.mxu0 0
        %1618 = vmatprep.subr.bf16.mxu0 0
        %1619 = vmatpush1.bf16.msra.mxu0 0
        %1620 = vmatprep.subr.bf16.mxu0 0
        %1621 = vmatpush1.bf16.msra.mxu0 0
        %1622 = vmatprep.subr.bf16.mxu0 0
        %1623 = vmatpush1.bf16.msra.mxu0 0
        %1624 = vmatprep.subr.bf16.mxu0 0
        %1625 = vmatpush1.bf16.msra.mxu0 0
        %1626 = vmatprep.subr.bf16.mxu0 0
        %1627 = vmatpush1.bf16.msra.mxu0 0
        %1628 = vmatprep.subr.bf16.mxu0 0
        %1629 = vmatpush1.bf16.msra.mxu0 0
        %1630 = vmatprep.mubr.bf16.mxu0 0
        %1631 = vmatmul.mubr.bf16.gmra.mrb[0].mxu0 %v1592
        %v1632 = vpop.f32.mrb[0].mxu0
        %v1633 = vadd.f32 0.0, %v1632
        %v1634 = vpop.f32.mrb[0].mxu0
        %v1635 = vpop.f32.mrb[0].mxu0
        %v1636 = vpop.f32.mrb[0].mxu0
        %1637 = vdwg.mxu0
        %v1638 = vmul.f32 %v1633, %v1587
        %v1639 = vld [vmem:[#allocation22] sm:$0xf]
        %v1640 = vld [vmem:[#allocation22 + $0x4] sm:$0xf]
        %v1641 = vpack.c.bf16 %v1638, %v1638
        %s1642 = scalar_lea.vmem [#allocation13], 16
        %v1643 = vld [vmem:[%s1642] sm:$0xf]
        %v1644 = vld [vmem:[%s1642 + $0x4] sm:$0xf]
        %v1645 = vld [vmem:[%s1642 + $0x8] sm:$0xf]
        %v1646 = vld [vmem:[%s1642 + $0xc] sm:$0xf]
        %s1647 = scalar_lea.vmem [#allocation14], 1
        %v1648 = vld [vmem:[%s1647] sm:$0x1]
        %v1650 = vlaneseq
        %v1651 = vshrl.u32 %v1650, 7
        %v1652 = vsub.s32 0, %v1651
        %v1653 = vrot.slane %v1648, %v1652
        %v1659 = vunpack.c.l.b16 %v1643
        %v1660 = vunpack.c.l.b16 %v1644
        %v1661 = vunpack.c.l.b16 %v1645
        %v1662 = vunpack.c.l.b16 %v1646
        %v1663 = vpack.c.b16 %v1660, %v1659
        %v1664 = vpack.c.b16 %v1662, %v1661
        %1667 = vmatprep.subr.bf16.mxu0 0
        %1668 = vmatpush1.bf16.msra.mxu0 %v1663
        %1669 = vmatprep.subr.bf16.mxu0 0
        %1670 = vmatpush1.bf16.msra.mxu0 %v1664
        %1671 = vmatprep.subr.bf16.mxu0 0
        %1672 = vmatpush1.bf16.msra.mxu0 0
        %1673 = vmatprep.subr.bf16.mxu0 0
        %1674 = vmatpush1.bf16.msra.mxu0 0
        %1675 = vmatprep.subr.bf16.mxu0 0
        %1676 = vmatpush1.bf16.msra.mxu0 0
        %1677 = vmatprep.subr.bf16.mxu0 0
        %1678 = vmatpush1.bf16.msra.mxu0 0
        %1679 = vmatprep.subr.bf16.mxu0 0
        %1680 = vmatpush1.bf16.msra.mxu0 0
        %1681 = vmatprep.subr.bf16.mxu0 0
        %1682 = vmatpush1.bf16.msra.mxu0 0
        %1683 = vmatprep.subr.bf16.mxu0 0
        %1684 = vmatpush1.bf16.msra.mxu0 0
        %1685 = vmatprep.subr.bf16.mxu0 0
        %1686 = vmatpush1.bf16.msra.mxu0 0
        %1687 = vmatprep.subr.bf16.mxu0 0
        %1688 = vmatpush1.bf16.msra.mxu0 0
        %1689 = vmatprep.subr.bf16.mxu0 0
        %1690 = vmatpush1.bf16.msra.mxu0 0
        %1691 = vmatprep.subr.bf16.mxu0 0
        %1692 = vmatpush1.bf16.msra.mxu0 0
        %1693 = vmatprep.subr.bf16.mxu0 0
        %1694 = vmatpush1.bf16.msra.mxu0 0
        %1695 = vmatprep.subr.bf16.mxu0 0
        %1696 = vmatpush1.bf16.msra.mxu0 0
        %1697 = vmatprep.subr.bf16.mxu0 0
        %1698 = vmatpush1.bf16.msra.mxu0 0
        %1699 = vmatprep.mubr.bf16.mxu0 0
        %1700 = vmatmul.mubr.bf16.gmra.mrb[0].mxu0 %v1360
        %v1701 = vpop.f32.mrb[0].mxu0
        %v1702 = vadd.f32 %v1653, %v1701
        %v1703 = vpop.f32.mrb[0].mxu0
        %v1704 = vpop.f32.mrb[0].mxu0
        %v1705 = vpop.f32.mrb[0].mxu0
        %1706 = vdwg.mxu0
        %s1707 = scalar_lea.vmem [#allocation16], 16
        %v1708 = vld [vmem:[%s1707] sm:$0xf]
        %v1709 = vld [vmem:[%s1707 + $0x4] sm:$0xf]
        %v1710 = vld [vmem:[%s1707 + $0x8] sm:$0xf]
        %v1711 = vld [vmem:[%s1707 + $0xc] sm:$0xf]
        %s1712 = scalar_lea.vmem [#allocation17], 1
        %v1713 = vld [vmem:[%s1712] sm:$0x1]
        %v1715 = vlaneseq
        %v1716 = vshrl.u32 %v1715, 7
        %v1717 = vsub.s32 0, %v1716
        %v1718 = vrot.slane %v1713, %v1717
        %v1724 = vunpack.c.l.b16 %v1708
        %v1725 = vunpack.c.l.b16 %v1709
        %v1726 = vunpack.c.l.b16 %v1710
        %v1727 = vunpack.c.l.b16 %v1711
        %v1728 = vpack.c.b16 %v1725, %v1724
        %v1729 = vpack.c.b16 %v1727, %v1726
        %1732 = vmatprep.subr.bf16.mxu0 0
        %1733 = vmatpush1.bf16.msra.mxu0 %v1728
        %1734 = vmatprep.subr.bf16.mxu0 0
        %1735 = vmatpush1.bf16.msra.mxu0 %v1729
        %1736 = vmatprep.subr.bf16.mxu0 0
        %1737 = vmatpush1.bf16.msra.mxu0 0
        %1738 = vmatprep.subr.bf16.mxu0 0
        %1739 = vmatpush1.bf16.msra.mxu0 0
        %1740 = vmatprep.subr.bf16.mxu0 0
        %1741 = vmatpush1.bf16.msra.mxu0 0
        %1742 = vmatprep.subr.bf16.mxu0 0
        %1743 = vmatpush1.bf16.msra.mxu0 0
        %1744 = vmatprep.subr.bf16.mxu0 0
        %1745 = vmatpush1.bf16.msra.mxu0 0
        %1746 = vmatprep.subr.bf16.mxu0 0
        %1747 = vmatpush1.bf16.msra.mxu0 0
        %1748 = vmatprep.subr.bf16.mxu0 0
        %1749 = vmatpush1.bf16.msra.mxu0 0
        %1750 = vmatprep.subr.bf16.mxu0 0
        %1751 = vmatpush1.bf16.msra.mxu0 0
        %1752 = vmatprep.subr.bf16.mxu0 0
        %1753 = vmatpush1.bf16.msra.mxu0 0
        %1754 = vmatprep.subr.bf16.mxu0 0
        %1755 = vmatpush1.bf16.msra.mxu0 0
        %1756 = vmatprep.subr.bf16.mxu0 0
        %1757 = vmatpush1.bf16.msra.mxu0 0
        %1758 = vmatprep.subr.bf16.mxu0 0
        %1759 = vmatpush1.bf16.msra.mxu0 0
        %1760 = vmatprep.subr.bf16.mxu0 0
        %1761 = vmatpush1.bf16.msra.mxu0 0
        %1762 = vmatprep.subr.bf16.mxu0 0
        %1763 = vmatpush1.bf16.msra.mxu0 0
        %1764 = vmatprep.mubr.bf16.mxu0 0
        %1765 = vmatmul.mubr.bf16.gmra.mrb[0].mxu0 %v1360
        %v1766 = vpop.f32.mrb[0].mxu0
        %v1767 = vadd.f32 %v1718, %v1766
        %v1768 = vpop.f32.mrb[0].mxu0
        %v1769 = vpop.f32.mrb[0].mxu0
        %v1770 = vpop.f32.mrb[0].mxu0
        %1771 = vdwg.mxu0
        %s1772 = scalar_lea.vmem [#allocation19], 16
        %v1773 = vld [vmem:[%s1772] sm:$0xf]
        %v1774 = vld [vmem:[%s1772 + $0x4] sm:$0xf]
        %v1775 = vld [vmem:[%s1772 + $0x8] sm:$0xf]
        %v1776 = vld [vmem:[%s1772 + $0xc] sm:$0xf]
        %s1777 = scalar_lea.vmem [#allocation20], 1
        %v1778 = vld [vmem:[%s1777] sm:$0x1]
        %v1780 = vlaneseq
        %v1781 = vshrl.u32 %v1780, 7
        %v1782 = vsub.s32 0, %v1781
        %v1783 = vrot.slane %v1778, %v1782
        %v1789 = vunpack.c.l.b16 %v1773
        %v1790 = vunpack.c.l.b16 %v1774
        %v1791 = vunpack.c.l.b16 %v1775
        %v1792 = vunpack.c.l.b16 %v1776
        %v1793 = vpack.c.b16 %v1790, %v1789
        %v1794 = vpack.c.b16 %v1792, %v1791
        %1797 = vmatprep.subr.bf16.mxu0 0
        %1798 = vmatpush1.bf16.msra.mxu0 %v1793
        %1799 = vmatprep.subr.bf16.mxu0 0
        %1800 = vmatpush1.bf16.msra.mxu0 %v1794
        %1801 = vmatprep.subr.bf16.mxu0 0
        %1802 = vmatpush1.bf16.msra.mxu0 0
        %1803 = vmatprep.subr.bf16.mxu0 0
        %1804 = vmatpush1.bf16.msra.mxu0 0
        %1805 = vmatprep.subr.bf16.mxu0 0
        %1806 = vmatpush1.bf16.msra.mxu0 0
        %1807 = vmatprep.subr.bf16.mxu0 0
        %1808 = vmatpush1.bf16.msra.mxu0 0
        %1809 = vmatprep.subr.bf16.mxu0 0
        %1810 = vmatpush1.bf16.msra.mxu0 0
        %1811 = vmatprep.subr.bf16.mxu0 0
        %1812 = vmatpush1.bf16.msra.mxu0 0
        %1813 = vmatprep.subr.bf16.mxu0 0
        %1814 = vmatpush1.bf16.msra.mxu0 0
        %1815 = vmatprep.subr.bf16.mxu0 0
        %1816 = vmatpush1.bf16.msra.mxu0 0
        %1817 = vmatprep.subr.bf16.mxu0 0
        %1818 = vmatpush1.bf16.msra.mxu0 0
        %1819 = vmatprep.subr.bf16.mxu0 0
        %1820 = vmatpush1.bf16.msra.mxu0 0
        %1821 = vmatprep.subr.bf16.mxu0 0
        %1822 = vmatpush1.bf16.msra.mxu0 0
        %1823 = vmatprep.subr.bf16.mxu0 0
        %1824 = vmatpush1.bf16.msra.mxu0 0
        %1825 = vmatprep.subr.bf16.mxu0 0
        %1826 = vmatpush1.bf16.msra.mxu0 0
        %1827 = vmatprep.subr.bf16.mxu0 0
        %1828 = vmatpush1.bf16.msra.mxu0 0
        %1829 = vmatprep.mubr.bf16.mxu0 0
        %1830 = vmatmul.mubr.bf16.gmra.mrb[0].mxu0 %v1360
        %v1831 = vpop.f32.mrb[0].mxu0
        %v1832 = vadd.f32 %v1783, %v1831
        %v1833 = vpop.f32.mrb[0].mxu0
        %v1834 = vpop.f32.mrb[0].mxu0
        %v1835 = vpop.f32.mrb[0].mxu0
        %1836 = vdwg.mxu0
        %v1837 = vpack.c.bf16 %v1702, %v1702
        %v1838 = vpack.c.bf16 %v1767, %v1767
        %v1840 = vsel %vm1530, %v1837, 0
        %v1843 = vsel %vm1530, %v1838, 0
        %1845 = vmatprep.subr.bf16.mxu0 0
        %1846 = vmatpush1.bf16.xpose.msra.mxu0 %v1843
        %1847 = vmatprep.subr.bf16.mxu0 0
        %1848 = vmatpush1.bf16.xpose.msra.mxu0 0
        %1849 = vmatprep.subr.bf16.mxu0 0
        %1850 = vmatpush1.bf16.xpose.msra.mxu0 0
        %1851 = vmatprep.subr.bf16.mxu0 0
        %1852 = vmatpush1.bf16.xpose.msra.mxu0 0
        %1853 = vmatprep.subr.bf16.mxu0 0
        %1854 = vmatpush1.bf16.xpose.msra.mxu0 0
        %1855 = vmatprep.subr.bf16.mxu0 0
        %1856 = vmatpush1.bf16.xpose.msra.mxu0 0
        %1857 = vmatprep.subr.bf16.mxu0 0
        %1858 = vmatpush1.bf16.xpose.msra.mxu0 0
        %1859 = vmatprep.subr.bf16.mxu0 0
        %1860 = vmatpush1.bf16.xpose.msra.mxu0 0
        %1861 = vmatprep.subr.bf16.mxu0 0
        %1862 = vmatpush1.bf16.xpose.msra.mxu0 0
        %1863 = vmatprep.subr.bf16.mxu0 0
        %1864 = vmatpush1.bf16.xpose.msra.mxu0 0
        %1865 = vmatprep.subr.bf16.mxu0 0
        %1866 = vmatpush1.bf16.xpose.msra.mxu0 0
        %1867 = vmatprep.subr.bf16.mxu0 0
        %1868 = vmatpush1.bf16.xpose.msra.mxu0 0
        %1869 = vmatprep.subr.bf16.mxu0 0
        %1870 = vmatpush1.bf16.xpose.msra.mxu0 0
        %1871 = vmatprep.subr.bf16.mxu0 0
        %1872 = vmatpush1.bf16.xpose.msra.mxu0 0
        %1873 = vmatprep.subr.bf16.mxu0 0
        %1874 = vmatpush1.bf16.xpose.msra.mxu0 0
        %1875 = vmatprep.subr.bf16.mxu0 0
        %1876 = vmatpush1.bf16.xpose.msra.mxu0 0
        %1877 = vmatprep.mubr.bf16.mxu0 0
        %1878 = vmatmul.mubr.bf16.gmra.mrb[0].mxu0 %v1840
        %v1879 = vpop.f32.mrb[0].mxu0
        %v1880 = vadd.f32 0.0, %v1879
        %v1881 = vpop.f32.mrb[0].mxu0
        %v1882 = vpop.f32.mrb[0].mxu0
        %v1883 = vpop.f32.mrb[0].mxu0
        %1884 = vdwg.mxu0
        %v1885 = vsel %vm1577, %v1880, -inf
        %1886 = vmax.xlane.f32.xlu0 %v1885
        %v1887 = vpop.xlane.xlu0 %1886
        %v1888 = vsub.f32 %v1880, %v1887
        %v1889 = vmul.f32 %v1888, 1.442695
        %v1890 = vpow.pop %v1889
        %v1891 = vsel %vm1577, %v1890, 0.0
        %1892 = vadd.xlane.f32.xlu0 %v1891
        %v1893 = vpop.xlane.xlu0 %1892
        %v1894 = vrcp.pop %v1893
        %v1895 = vpack.c.bf16 %v1890, %v1890
        %v1896 = vpack.c.bf16 %v1832, %v1832
        %v1898 = vsel %vm1590, %v1895, 0
        %v1901 = vsel %vm1594, %v1896, 0
        %1903 = vmatprep.subr.bf16.mxu0 0
        %1904 = vmatpush1.bf16.msra.mxu0 %v1901
        %1905 = vmatprep.subr.bf16.mxu0 0
        %1906 = vmatpush1.bf16.msra.mxu0 0
        %1907 = vmatprep.subr.bf16.mxu0 0
        %1908 = vmatpush1.bf16.msra.mxu0 0
        %1909 = vmatprep.subr.bf16.mxu0 0
        %1910 = vmatpush1.bf16.msra.mxu0 0
        %1911 = vmatprep.subr.bf16.mxu0 0
        %1912 = vmatpush1.bf16.msra.mxu0 0
        %1913 = vmatprep.subr.bf16.mxu0 0
        %1914 = vmatpush1.bf16.msra.mxu0 0
        %1915 = vmatprep.subr.bf16.mxu0 0
        %1916 = vmatpush1.bf16.msra.mxu0 0
        %1917 = vmatprep.subr.bf16.mxu0 0
        %1918 = vmatpush1.bf16.msra.mxu0 0
        %1919 = vmatprep.subr.bf16.mxu0 0
        %1920 = vmatpush1.bf16.msra.mxu0 0
        %1921 = vmatprep.subr.bf16.mxu0 0
        %1922 = vmatpush1.bf16.msra.mxu0 0
        %1923 = vmatprep.subr.bf16.mxu0 0
        %1924 = vmatpush1.bf16.msra.mxu0 0
        %1925 = vmatprep.subr.bf16.mxu0 0
        %1926 = vmatpush1.bf16.msra.mxu0 0
        %1927 = vmatprep.subr.bf16.mxu0 0
        %1928 = vmatpush1.bf16.msra.mxu0 0
        %1929 = vmatprep.subr.bf16.mxu0 0
        %1930 = vmatpush1.bf16.msra.mxu0 0
        %1931 = vmatprep.subr.bf16.mxu0 0
        %1932 = vmatpush1.bf16.msra.mxu0 0
        %1933 = vmatprep.subr.bf16.mxu0 0
        %1934 = vmatpush1.bf16.msra.mxu0 0
        %1935 = vmatprep.mubr.bf16.mxu0 0
        %1936 = vmatmul.mubr.bf16.gmra.mrb[0].mxu0 %v1898
        %v1937 = vpop.f32.mrb[0].mxu0
        %v1938 = vadd.f32 0.0, %v1937
        %v1939 = vpop.f32.mrb[0].mxu0
        %v1940 = vpop.f32.mrb[0].mxu0
        %v1941 = vpop.f32.mrb[0].mxu0
        %1942 = vdwg.mxu0
        %v1943 = vmul.f32 %v1938, %v1894
        %s1944 = scalar_lea.vmem [#allocation22], 8
        %v1945 = vld [vmem:[%s1944] sm:$0xf]
        %v1946 = vld [vmem:[%s1944 + $0x4] sm:$0xf]
        %v1947 = vpack.c.bf16 %v1943, %v1943
        %v1950 = vunpack.c.l.b16 %v1945
        %v1951 = vunpack.c.l.b16 %v1946
        %v1952 = vpack.c.b16 %v1951, %v1950
        %v1955 = vsel %vm1530, %v1947, 0
        %1957 = vmatprep.subr.bf16.mxu0 0
        %1958 = vmatpush1.bf16.msra.mxu0 %v1952
        %1959 = vmatprep.subr.bf16.mxu0 0
        %1960 = vmatpush1.bf16.msra.mxu0 0
        %1961 = vmatprep.subr.bf16.mxu0 0
        %1962 = vmatpush1.bf16.msra.mxu0 0
        %1963 = vmatprep.subr.bf16.mxu0 0
        %1964 = vmatpush1.bf16.msra.mxu0 0
        %1965 = vmatprep.subr.bf16.mxu0 0
        %1966 = vmatpush1.bf16.msra.mxu0 0
        %1967 = vmatprep.subr.bf16.mxu0 0
        %1968 = vmatpush1.bf16.msra.mxu0 0
        %1969 = vmatprep.subr.bf16.mxu0 0
        %1970 = vmatpush1.bf16.msra.mxu0 0
        %1971 = vmatprep.subr.bf16.mxu0 0
        %1972 = vmatpush1.bf16.msra.mxu0 0
        %1973 = vmatprep.subr.bf16.mxu0 0
        %1974 = vmatpush1.bf16.msra.mxu0 0
        %1975 = vmatprep.subr.bf16.mxu0 0
        %1976 = vmatpush1.bf16.msra.mxu0 0
        %1977 = vmatprep.subr.bf16.mxu0 0
        %1978 = vmatpush1.bf16.msra.mxu0 0
        %1979 = vmatprep.subr.bf16.mxu0 0
        %1980 = vmatpush1.bf16.msra.mxu0 0
        %1981 = vmatprep.subr.bf16.mxu0 0
        %1982 = vmatpush1.bf16.msra.mxu0 0
        %1983 = vmatprep.subr.bf16.mxu0 0
        %1984 = vmatpush1.bf16.msra.mxu0 0
        %1985 = vmatprep.subr.bf16.mxu0 0
        %1986 = vmatpush1.bf16.msra.mxu0 0
        %1987 = vmatprep.subr.bf16.mxu0 0
        %1988 = vmatpush1.bf16.msra.mxu0 0
        %1989 = vmatprep.mubr.bf16.mxu0 0
        %1990 = vmatmul.mubr.bf16.gmra.mrb[0].mxu0 %v1955
        %v1991 = vpop.f32.mrb[0].mxu0
        %v1992 = vadd.f32 0.0, %v1991
        %v1993 = vpop.f32.mrb[0].mxu0
        %v1994 = vpop.f32.mrb[0].mxu0
        %v1995 = vpop.f32.mrb[0].mxu0
        %1996 = vdwg.mxu0
        %v1999 = vunpack.c.l.b16 %v1639
        %v2000 = vunpack.c.l.b16 %v1640
        %v2001 = vpack.c.b16 %v2000, %v1999
        %v2004 = vsel %vm1530, %v1641, 0
        %2006 = vmatprep.subr.bf16.mxu0 0
        %2007 = vmatpush1.bf16.msra.mxu0 %v2001
        %2008 = vmatprep.subr.bf16.mxu0 0
        %2009 = vmatpush1.bf16.msra.mxu0 0
        %2010 = vmatprep.subr.bf16.mxu0 0
        %2011 = vmatpush1.bf16.msra.mxu0 0
        %2012 = vmatprep.subr.bf16.mxu0 0
        %2013 = vmatpush1.bf16.msra.mxu0 0
        %2014 = vmatprep.subr.bf16.mxu0 0
        %2015 = vmatpush1.bf16.msra.mxu0 0
        %2016 = vmatprep.subr.bf16.mxu0 0
        %2017 = vmatpush1.bf16.msra.mxu0 0
        %2018 = vmatprep.subr.bf16.mxu0 0
        %2019 = vmatpush1.bf16.msra.mxu0 0
        %2020 = vmatprep.subr.bf16.mxu0 0
        %2021 = vmatpush1.bf16.msra.mxu0 0
        %2022 = vmatprep.subr.bf16.mxu0 0
        %2023 = vmatpush1.bf16.msra.mxu0 0
        %2024 = vmatprep.subr.bf16.mxu0 0
        %2025 = vmatpush1.bf16.msra.mxu0 0
        %2026 = vmatprep.subr.bf16.mxu0 0
        %2027 = vmatpush1.bf16.msra.mxu0 0
        %2028 = vmatprep.subr.bf16.mxu0 0
        %2029 = vmatpush1.bf16.msra.mxu0 0
        %2030 = vmatprep.subr.bf16.mxu0 0
        %2031 = vmatpush1.bf16.msra.mxu0 0
        %2032 = vmatprep.subr.bf16.mxu0 0
        %2033 = vmatpush1.bf16.msra.mxu0 0
        %2034 = vmatprep.subr.bf16.mxu0 0
        %2035 = vmatpush1.bf16.msra.mxu0 0
        %2036 = vmatprep.subr.bf16.mxu0 0
        %2037 = vmatpush1.bf16.msra.mxu0 0
        %2038 = vmatprep.mubr.bf16.mxu0 0
        %2039 = vmatmul.mubr.bf16.gmra.mrb[0].mxu0 %v2004
        %v2040 = vpop.f32.mrb[0].mxu0
        %v2041 = vadd.f32 %v1992, %v2040
        %v2042 = vpop.f32.mrb[0].mxu0
        %v2043 = vpop.f32.mrb[0].mxu0
        %v2044 = vpop.f32.mrb[0].mxu0
        %2045 = vdwg.mxu0
        %v2046 = vadd.f32 %v1302, %v2041
        %v2047 = vld [vmem:[#allocation23] sm:$0x1]
        %v2049 = vlaneseq
        %v2050 = vshrl.u32 %v2049, 7
        %v2051 = vsub.s32 0, %v2050
        %v2052 = vrot.slane %v2047, %v2051
        %v2054 = vadd.f32 %v2046, %v2052
        %v2055 = vld [vmem:[#allocation25] sm:$0x1]
        %v2056 = vld [vmem:[#allocation26] sm:$0x1]
        %v2057 = vsel %vm1305, %v2054, 0.0
        %2058 = vadd.xlane.f32.xlu0 %v2057
        %v2059 = vpop.xlane.xlu0 %2058
        %v2060 = vmul.f32 %v2059, %v1309
        %v2061 = vsub.f32 %v2054, %v2060
        %v2062 = vmul.f32 %v2061, %v2061
        %v2063 = vsel %vm1305, %v2062, 0.0
        %2064 = vadd.xlane.f32.xlu0 %v2063
        %v2065 = vpop.xlane.xlu0 %2064
        %v2066 = vmul.f32 %v2065, %v1309
        %v2067 = vadd.f32 %v2066, 1e-06
        %v2068 = vrsqrt.pop %v2067
        %v2069 = vmul.f32 %v2061, %v2068
        %v2071 = vlaneseq
        %v2072 = vshrl.u32 %v2071, 7
        %v2073 = vsub.s32 0, %v2072
        %v2074 = vrot.slane %v2055, %v2073
        %v2076 = vmul.f32 %v2069, %v2074
        %v2078 = vlaneseq
        %v2079 = vshrl.u32 %v2078, 7
        %v2080 = vsub.s32 0, %v2079
        %v2081 = vrot.slane %v2056, %v2080
        %v2083 = vadd.f32 %v2076, %v2081
        %v2084 = vld [vmem:[#allocation28] sm:$0xf]
        %v2085 = vld [vmem:[#allocation28 + $0x4] sm:$0xf]
        %v2086 = vld [vmem:[#allocation28 + $0x8] sm:$0xf]
        %v2087 = vld [vmem:[#allocation28 + $0xc] sm:$0xf]
        %v2088 = vpack.c.bf16 %v2083, %v2083
        %v2089 = vld [vmem:[#allocation29] sm:$0x1]
        %v2091 = vlaneseq
        %v2092 = vshrl.u32 %v2091, 7
        %v2093 = vsub.s32 0, %v2092
        %v2094 = vrot.slane %v2089, %v2093
        %v2100 = vunpack.c.l.b16 %v2084
        %v2101 = vunpack.c.l.b16 %v2085
        %v2102 = vunpack.c.l.b16 %v2086
        %v2103 = vunpack.c.l.b16 %v2087
        %v2104 = vpack.c.b16 %v2101, %v2100
        %v2105 = vpack.c.b16 %v2103, %v2102
        %v2109 = vsel %vm1358, %v2088, 0
        %2111 = vmatprep.subr.bf16.mxu0 0
        %2112 = vmatpush1.bf16.msra.mxu0 %v2104
        %2113 = vmatprep.subr.bf16.mxu0 0
        %2114 = vmatpush1.bf16.msra.mxu0 %v2105
        %2115 = vmatprep.subr.bf16.mxu0 0
        %2116 = vmatpush1.bf16.msra.mxu0 0
        %2117 = vmatprep.subr.bf16.mxu0 0
        %2118 = vmatpush1.bf16.msra.mxu0 0
        %2119 = vmatprep.subr.bf16.mxu0 0
        %2120 = vmatpush1.bf16.msra.mxu0 0
        %2121 = vmatprep.subr.bf16.mxu0 0
        %2122 = vmatpush1.bf16.msra.mxu0 0
        %2123 = vmatprep.subr.bf16.mxu0 0
        %2124 = vmatpush1.bf16.msra.mxu0 0
        %2125 = vmatprep.subr.bf16.mxu0 0
        %2126 = vmatpush1.bf16.msra.mxu0 0
        %2127 = vmatprep.subr.bf16.mxu0 0
        %2128 = vmatpush1.bf16.msra.mxu0 0
        %2129 = vmatprep.subr.bf16.mxu0 0
        %2130 = vmatpush1.bf16.msra.mxu0 0
        %2131 = vmatprep.subr.bf16.mxu0 0
        %2132 = vmatpush1.bf16.msra.mxu0 0
        %2133 = vmatprep.subr.bf16.mxu0 0
        %2134 = vmatpush1.bf16.msra.mxu0 0
        %2135 = vmatprep.subr.bf16.mxu0 0
        %2136 = vmatpush1.bf16.msra.mxu0 0
        %2137 = vmatprep.subr.bf16.mxu0 0
        %2138 = vmatpush1.bf16.msra.mxu0 0
        %2139 = vmatprep.subr.bf16.mxu0 0
        %2140 = vmatpush1.bf16.msra.mxu0 0
        %2141 = vmatprep.subr.bf16.mxu0 0
        %2142 = vmatpush1.bf16.msra.mxu0 0
        %2143 = vmatprep.mubr.bf16.mxu0 0
        %2144 = vmatmul.mubr.bf16.gmra.mrb[0].mxu0 %v2109
        %v2145 = vpop.f32.mrb[0].mxu0
        %v2146 = vadd.f32 %v2094, %v2145
        %v2147 = vpop.f32.mrb[0].mxu0
        %v2148 = vpop.f32.mrb[0].mxu0
        %v2149 = vpop.f32.mrb[0].mxu0
        %2150 = vdwg.mxu0
        %v2151 = vmul.f32 %v2146, 0.5
        %v2152 = vmul.f32 %v2146, 0.044715
        %v2153 = vmul.f32 %v2152, %v2146
        %v2154 = vmul.f32 %v2153, %v2146
        %v2155 = vadd.f32 %v2146, %v2154
        %v2156 = vmul.f32 %v2155, 0.7978846
        %v2157 = vtanh.pop %v2156
        %v2158 = vadd.f32 %v2157, 1.0
        %v2159 = vmul.f32 %v2151, %v2158
        %v2160 = vld [vmem:[#allocation31] sm:$0xf]
        %v2161 = vld [vmem:[#allocation31 + $0x4] sm:$0xf]
        %v2162 = vld [vmem:[#allocation31 + $0x8] sm:$0xf]
        %v2163 = vld [vmem:[#allocation31 + $0xc] sm:$0xf]
        %v2164 = vld [vmem:[#allocation31 + $0x10] sm:$0xf]
        %v2165 = vld [vmem:[#allocation31 + $0x14] sm:$0xf]
        %v2166 = vld [vmem:[#allocation31 + $0x18] sm:$0xf]
        %v2167 = vld [vmem:[#allocation31 + $0x1c] sm:$0xf]
        %v2168 = vpack.c.bf16 %v2159, %v2159
        %v2177 = vunpack.c.l.b16 %v2160
        %v2178 = vunpack.c.l.b16 %v2161
        %v2179 = vunpack.c.l.b16 %v2162
        %v2180 = vunpack.c.l.b16 %v2163
        %v2181 = vunpack.c.l.b16 %v2164
        %v2182 = vunpack.c.l.b16 %v2165
        %v2183 = vunpack.c.l.b16 %v2166
        %v2184 = vunpack.c.l.b16 %v2167
        %v2185 = vpack.c.b16 %v2178, %v2177
        %v2186 = vpack.c.b16 %v2180, %v2179
        %v2187 = vpack.c.b16 %v2182, %v2181
        %v2188 = vpack.c.b16 %v2184, %v2183
        %v2194 = vsel %vm1257, %v2168, 0
        %2196 = vmatprep.subr.bf16.mxu0 0
        %2197 = vmatpush1.bf16.msra.mxu0 %v2185
        %2198 = vmatprep.subr.bf16.mxu0 0
        %2199 = vmatpush1.bf16.msra.mxu0 %v2186
        %2200 = vmatprep.subr.bf16.mxu0 0
        %2201 = vmatpush1.bf16.msra.mxu0 %v2187
        %2202 = vmatprep.subr.bf16.mxu0 0
        %2203 = vmatpush1.bf16.msra.mxu0 %v2188
        %2204 = vmatprep.subr.bf16.mxu0 0
        %2205 = vmatpush1.bf16.msra.mxu0 0
        %2206 = vmatprep.subr.bf16.mxu0 0
        %2207 = vmatpush1.bf16.msra.mxu0 0
        %2208 = vmatprep.subr.bf16.mxu0 0
        %2209 = vmatpush1.bf16.msra.mxu0 0
        %2210 = vmatprep.subr.bf16.mxu0 0
        %2211 = vmatpush1.bf16.msra.mxu0 0
        %2212 = vmatprep.subr.bf16.mxu0 0
        %2213 = vmatpush1.bf16.msra.mxu0 0
        %2214 = vmatprep.subr.bf16.mxu0 0
        %2215 = vmatpush1.bf16.msra.mxu0 0
        %2216 = vmatprep.subr.bf16.mxu0 0
        %2217 = vmatpush1.bf16.msra.mxu0 0
        %2218 = vmatprep.subr.bf16.mxu0 0
        %2219 = vmatpush1.bf16.msra.mxu0 0
        %2220 = vmatprep.subr.bf16.mxu0 0
        %2221 = vmatpush1.bf16.msra.mxu0 0
        %2222 = vmatprep.subr.bf16.mxu0 0
        %2223 = vmatpush1.bf16.msra.mxu0 0
        %2224 = vmatprep.subr.bf16.mxu0 0
        %2225 = vmatpush1.bf16.msra.mxu0 0
        %2226 = vmatprep.subr.bf16.mxu0 0
        %2227 = vmatpush1.bf16.msra.mxu0 0
        %2228 = vmatprep.mubr.bf16.mxu0 0
        %2229 = vmatmul.mubr.bf16.gmra.mrb[0].mxu0 %v2194
        %v2230 = vpop.f32.mrb[0].mxu0
        %v2231 = vadd.f32 0.0, %v2230
        %v2232 = vpop.f32.mrb[0].mxu0
        %v2233 = vpop.f32.mrb[0].mxu0
        %v2234 = vpop.f32.mrb[0].mxu0
        %2235 = vdwg.mxu0
        %v2236 = vadd.f32 %v2054, %v2231
        %v2237 = vld [vmem:[#allocation32] sm:$0x1]
        %v2239 = vlaneseq
        %v2240 = vshrl.u32 %v2239, 7
        %v2241 = vsub.s32 0, %v2240
        %v2242 = vrot.slane %v2237, %v2241
        %v2244 = vadd.f32 %v2236, %v2242
        %v2245 = vld [vmem:[#allocation34] sm:$0xf]
        %v2246 = vld [vmem:[#allocation34 + $0x4] sm:$0xf]
        %v2247 = vld [vmem:[#allocation34 + $0x8] sm:$0xf]
        %v2248 = vld [vmem:[#allocation34 + $0xc] sm:$0xf]
        %v2249 = vpack.c.bf16 %v2244, %v2244
        %v2250 = vld [vmem:[#allocation35] sm:$0x1]
        %v2252 = vlaneseq
        %v2253 = vshrl.u32 %v2252, 7
        %v2254 = vsub.s32 0, %v2253
        %v2255 = vrot.slane %v2250, %v2254
        %v2261 = vunpack.c.l.b16 %v2245
        %v2262 = vunpack.c.l.b16 %v2246
        %v2263 = vunpack.c.l.b16 %v2247
        %v2264 = vunpack.c.l.b16 %v2248
        %v2265 = vpack.c.b16 %v2262, %v2261
        %v2266 = vpack.c.b16 %v2264, %v2263
        %v2270 = vsel %vm1358, %v2249, 0
        %2272 = vmatprep.subr.bf16.mxu0 0
        %2273 = vmatpush1.bf16.msra.mxu0 %v2265
        %2274 = vmatprep.subr.bf16.mxu0 0
        %2275 = vmatpush1.bf16.msra.mxu0 %v2266
        %2276 = vmatprep.subr.bf16.mxu0 0
        %2277 = vmatpush1.bf16.msra.mxu0 0
        %2278 = vmatprep.subr.bf16.mxu0 0
        %2279 = vmatpush1.bf16.msra.mxu0 0
        %2280 = vmatprep.subr.bf16.mxu0 0
        %2281 = vmatpush1.bf16.msra.mxu0 0
        %2282 = vmatprep.subr.bf16.mxu0 0
        %2283 = vmatpush1.bf16.msra.mxu0 0
        %2284 = vmatprep.subr.bf16.mxu0 0
        %2285 = vmatpush1.bf16.msra.mxu0 0
        %2286 = vmatprep.subr.bf16.mxu0 0
        %2287 = vmatpush1.bf16.msra.mxu0 0
        %2288 = vmatprep.subr.bf16.mxu0 0
        %2289 = vmatpush1.bf16.msra.mxu0 0
        %2290 = vmatprep.subr.bf16.mxu0 0
        %2291 = vmatpush1.bf16.msra.mxu0 0
        %2292 = vmatprep.subr.bf16.mxu0 0
        %2293 = vmatpush1.bf16.msra.mxu0 0
        %2294 = vmatprep.subr.bf16.mxu0 0
        %2295 = vmatpush1.bf16.msra.mxu0 0
        %2296 = vmatprep.subr.bf16.mxu0 0
        %2297 = vmatpush1.bf16.msra.mxu0 0
        %2298 = vmatprep.subr.bf16.mxu0 0
        %2299 = vmatpush1.bf16.msra.mxu0 0
        %2300 = vmatprep.subr.bf16.mxu0 0
        %2301 = vmatpush1.bf16.msra.mxu0 0
        %2302 = vmatprep.subr.bf16.mxu0 0
        %2303 = vmatpush1.bf16.msra.mxu0 0
        %2304 = vmatprep.mubr.bf16.mxu0 0
        %2305 = vmatmul.mubr.bf16.gmra.mrb[0].mxu0 %v2270
        %v2306 = vpop.f32.mrb[0].mxu0
        %v2307 = vadd.f32 %v2255, %v2306
        %v2308 = vpop.f32.mrb[0].mxu0
        %v2309 = vpop.f32.mrb[0].mxu0
        %v2310 = vpop.f32.mrb[0].mxu0
        %2311 = vdwg.mxu0
        %v2312 = vld [vmem:[#allocation37] sm:$0xf]
        %v2313 = vld [vmem:[#allocation37 + $0x4] sm:$0xf]
        %v2314 = vld [vmem:[#allocation37 + $0x8] sm:$0xf]
        %v2315 = vld [vmem:[#allocation37 + $0xc] sm:$0xf]
        %v2316 = vld [vmem:[#allocation38] sm:$0x1]
        %v2318 = vlaneseq
        %v2319 = vshrl.u32 %v2318, 7
        %v2320 = vsub.s32 0, %v2319
        %v2321 = vrot.slane %v2316, %v2320
        %v2327 = vunpack.c.l.b16 %v2312
        %v2328 = vunpack.c.l.b16 %v2313
        %v2329 = vunpack.c.l.b16 %v2314
        %v2330 = vunpack.c.l.b16 %v2315
        %v2331 = vpack.c.b16 %v2328, %v2327
        %v2332 = vpack.c.b16 %v2330, %v2329
        %2335 = vmatprep.subr.bf16.mxu0 0
        %2336 = vmatpush1.bf16.msra.mxu0 %v2331
        %2337 = vmatprep.subr.bf16.mxu0 0
        %2338 = vmatpush1.bf16.msra.mxu0 %v2332
        %2339 = vmatprep.subr.bf16.mxu0 0
        %2340 = vmatpush1.bf16.msra.mxu0 0
        %2341 = vmatprep.subr.bf16.mxu0 0
        %2342 = vmatpush1.bf16.msra.mxu0 0
        %2343 = vmatprep.subr.bf16.mxu0 0
        %2344 = vmatpush1.bf16.msra.mxu0 0
        %2345 = vmatprep.subr.bf16.mxu0 0
        %2346 = vmatpush1.bf16.msra.mxu0 0
        %2347 = vmatprep.subr.bf16.mxu0 0
        %2348 = vmatpush1.bf16.msra.mxu0 0
        %2349 = vmatprep.subr.bf16.mxu0 0
        %2350 = vmatpush1.bf16.msra.mxu0 0
        %2351 = vmatprep.subr.bf16.mxu0 0
        %2352 = vmatpush1.bf16.msra.mxu0 0
        %2353 = vmatprep.subr.bf16.mxu0 0
        %2354 = vmatpush1.bf16.msra.mxu0 0
        %2355 = vmatprep.subr.bf16.mxu0 0
        %2356 = vmatpush1.bf16.msra.mxu0 0
        %2357 = vmatprep.subr.bf16.mxu0 0
        %2358 = vmatpush1.bf16.msra.mxu0 0
        %2359 = vmatprep.subr.bf16.mxu0 0
        %2360 = vmatpush1.bf16.msra.mxu0 0
        %2361 = vmatprep.subr.bf16.mxu0 0
        %2362 = vmatpush1.bf16.msra.mxu0 0
        %2363 = vmatprep.subr.bf16.mxu0 0
        %2364 = vmatpush1.bf16.msra.mxu0 0
        %2365 = vmatprep.subr.bf16.mxu0 0
        %2366 = vmatpush1.bf16.msra.mxu0 0
        %2367 = vmatprep.mubr.bf16.mxu0 0
        %2368 = vmatmul.mubr.bf16.gmra.mrb[0].mxu0 %v2270
        %v2369 = vpop.f32.mrb[0].mxu0
        %v2370 = vadd.f32 %v2321, %v2369
        %v2371 = vpop.f32.mrb[0].mxu0
        %v2372 = vpop.f32.mrb[0].mxu0
        %v2373 = vpop.f32.mrb[0].mxu0
        %2374 = vdwg.mxu0
        %v2375 = vmax.f32 %v2370, 0.0
        %v2376 = vld [vmem:[#allocation40] sm:$0xf]
        %v2377 = vld [vmem:[#allocation40 + $0x4] sm:$0xf]
        %v2378 = vld [vmem:[#allocation40 + $0x8] sm:$0xf]
        %v2379 = vld [vmem:[#allocation40 + $0xc] sm:$0xf]
        %v2380 = vpack.c.bf16 %v2375, %v2375
        %v2381 = vld [vmem:[#allocation41] sm:$0x1]
        %v2383 = vlaneseq
        %v2384 = vshrl.u32 %v2383, 7
        %v2385 = vsub.s32 0, %v2384
        %v2386 = vrot.slane %v2381, %v2385
        %v2392 = vunpack.c.l.b16 %v2376
        %v2393 = vunpack.c.l.b16 %v2377
        %v2394 = vunpack.c.l.b16 %v2378
        %v2395 = vunpack.c.l.b16 %v2379
        %v2396 = vpack.c.b16 %v2393, %v2392
        %v2397 = vpack.c.b16 %v2395, %v2394
        %v2401 = vsel %vm1358, %v2380, 0
        %2403 = vmatprep.subr.bf16.mxu0 0
        %2404 = vmatpush1.bf16.msra.mxu0 %v2396
        %2405 = vmatprep.subr.bf16.mxu0 0
        %2406 = vmatpush1.bf16.msra.mxu0 %v2397
        %2407 = vmatprep.subr.bf16.mxu0 0
        %2408 = vmatpush1.bf16.msra.mxu0 0
        %2409 = vmatprep.subr.bf16.mxu0 0
        %2410 = vmatpush1.bf16.msra.mxu0 0
        %2411 = vmatprep.subr.bf16.mxu0 0
        %2412 = vmatpush1.bf16.msra.mxu0 0
        %2413 = vmatprep.subr.bf16.mxu0 0
        %2414 = vmatpush1.bf16.msra.mxu0 0
        %2415 = vmatprep.subr.bf16.mxu0 0
        %2416 = vmatpush1.bf16.msra.mxu0 0
        %2417 = vmatprep.subr.bf16.mxu0 0
        %2418 = vmatpush1.bf16.msra.mxu0 0
        %2419 = vmatprep.subr.bf16.mxu0 0
        %2420 = vmatpush1.bf16.msra.mxu0 0
        %2421 = vmatprep.subr.bf16.mxu0 0
        %2422 = vmatpush1.bf16.msra.mxu0 0
        %2423 = vmatprep.subr.bf16.mxu0 0
        %2424 = vmatpush1.bf16.msra.mxu0 0
        %2425 = vmatprep.subr.bf16.mxu0 0
        %2426 = vmatpush1.bf16.msra.mxu0 0
        %2427 = vmatprep.subr.bf16.mxu0 0
        %2428 = vmatpush1.bf16.msra.mxu0 0
        %2429 = vmatprep.subr.bf16.mxu0 0
        %2430 = vmatpush1.bf16.msra.mxu0 0
        %2431 = vmatprep.subr.bf16.mxu0 0
        %2432 = vmatpush1.bf16.msra.mxu0 0
        %2433 = vmatprep.subr.bf16.mxu0 0
        %2434 = vmatpush1.bf16.msra.mxu0 0
        %2435 = vmatprep.mubr.bf16.mxu0 0
        %2436 = vmatmul.mubr.bf16.gmra.mrb[0].mxu0 %v2401
        %v2437 = vpop.f32.mrb[0].mxu0
        %v2438 = vadd.f32 %v2386, %v2437
        %v2439 = vpop.f32.mrb[0].mxu0
        %v2440 = vpop.f32.mrb[0].mxu0
        %v2441 = vpop.f32.mrb[0].mxu0
        %2442 = vdwg.mxu0
        %v2443 = vadd.f32 %v2307, %v2438
        %2444 = vxpose.xlu0.b32.start [1/16] %v2443, 128
        %2445 = vxpose.xlu0.b32.cont [2/16] 0.0, 128
        %2446 = vxpose.xlu0.b32.cont [3/16] 0.0, 128
        %2447 = vxpose.xlu0.b32.cont [4/16] 0.0, 128
        %2448 = vxpose.xlu0.b32.cont [5/16] 0.0, 128
        %2449 = vxpose.xlu0.b32.cont [6/16] 0.0, 128
        %2450 = vxpose.xlu0.b32.cont [7/16] 0.0, 128
        %2451 = vxpose.xlu0.b32.cont [8/16] 0.0, 128
        %2452 = vxpose.xlu0.b32.cont [9/16] 0.0, 128
        %2453 = vxpose.xlu0.b32.cont [10/16] 0.0, 128
        %2454 = vxpose.xlu0.b32.cont [11/16] 0.0, 128
        %2455 = vxpose.xlu0.b32.cont [12/16] 0.0, 128
        %2456 = vxpose.xlu0.b32.cont [13/16] 0.0, 128
        %2457 = vxpose.xlu0.b32.cont [14/16] 0.0, 128
        %2458 = vxpose.xlu0.b32.cont [15/16] 0.0, 128
        %2459 = vxpose.xlu0.b32.end [16/16] 0.0, 128
        %v2460 = vpop.trf.xlu0
        %v2461 = vpop.trf.xlu0
        %v2462 = vpop.trf.xlu0
        %v2463 = vpop.trf.xlu0
        %v2464 = vpop.trf.xlu0
        %v2465 = vpop.trf.xlu0
        %v2466 = vpop.trf.xlu0
        %v2467 = vpop.trf.xlu0
        %v2468 = vpop.trf.xlu0
        %v2469 = vpop.trf.xlu0
        %v2470 = vpop.trf.xlu0
        %v2471 = vpop.trf.xlu0
        %v2472 = vpop.trf.xlu0
        %v2473 = vpop.trf.xlu0
        %v2474 = vpop.trf.xlu0
        %v2475 = vpop.trf.xlu0
        %2476 = vst.msk [vmem:[%s1146] sm:$0xff] %vm1590, %v2460
        %2477 = vst.msk [vmem:[%s1146 + $0x8] sm:$0xff] %vm1590, %v2461
        %s2478 = sand.u32 %s615, 1
        %s2479 = scalar_lea.sflag [#allocation4], %s2478
        %s2480 = sand.u32 %s615, 1
        %s2481 = smul.addr %s2480, 16
        %s2482 = scalar_lea.vmem [#allocation43], %s2481
        // Predicated region
        $region229: #{_lambda_.1} parent=123 // pred_check
          %p2483 = pneg %p625
        $region230: #{_lambda_.1} parent=123 // pred_check_branch
          %2485 = sbr.rel (%p2483) target = $region232
        $region231: #{_lambda_.1} parent=123 // pred_region
          %s2487 = ssub.s32 256, 256
          %2488 = vsyncadd %s2479, %s2487
          %s2489 = smul.addr %s56, 2
          %s2490 = smul.addr %s2489, 128
          %s2491 = scalar_lea.hbm %s26, %s2490
          %s2492 = sshll.u32 %s2482, 4
          %s2493 = int_to_ptr.vmem [resolvable:$true] %s2492
          %2498 = dma.vmem_to_hbm [thread:$0]  %s2493, 256, %s2491, %s2479, 128, 128, 8
        $region232: #{_lambda_.1} parent=123 // pred_fallthru
          _
      $region124: #{_lambda_.1} parent=5 // pred_fallthru
        _
      %p2499 = scmp.le.s32.totalorder 2, %s51
      // Predicated region
      $region233: #{_lambda_.1} parent=5 // pred_check
        %p2500 = pneg %p2499
      $region234: #{_lambda_.1} parent=5 // pred_check_branch
        %2502 = sbr.rel (%p2500) target = $region236
      $region235: #{_lambda_.1} parent=5 // pred_region
        %s2503 = ssub.s32 %s51, 2
        // Predicated region
        $region237: #{_lambda_.1} parent=235 // pred_check
          %p2504 = pneg %p631
        $region238: #{_lambda_.1} parent=235 // pred_check_branch
          %2506 = sbr.rel (%p2504) target = $region240
        $region239: #{_lambda_.1} parent=235 // pred_region
          %s2507 = sand.u32 %s616, 1
          %s2508 = scalar_lea.sflag [#allocation4], %s2507
          %s2509 = sand.u32 %s616, 1
          %s2510 = smul.addr %s2509, 16
          %s2511 = scalar_lea.vmem [#allocation43], %s2510
          %2512 = dma.done %s2508, 256
        $region240: #{_lambda_.1} parent=235 // pred_fallthru
          _
      $region236: #{_lambda_.1} parent=5 // pred_fallthru
        _
    $region6: #{_lambda_.1} parent=1 // loop_footer
      %s55 = sadd.s32 1, %s51
    $region7: #{_lambda_.1} parent=1 // loop_footer_branch
      %50 = sbr.rel target = $region3
    $region8: #{_lambda_.1} parent=1 // loop_exit
      _
    %2513 = vsyncpa [#allocation3], 1
    %s2514 = scalar_lea.sflag [#allocation3], 1
    %2515 = vsyncpa %s2514, 1
    %2516 = vsyncpa [#allocation6], 1
    %2517 = vsyncpa [#allocation9], 1
    %2518 = vsyncpa [#allocation12], 1
    %2519 = vsyncpa [#allocation15], 1
    %2520 = vsyncpa [#allocation18], 1
    %2521 = vsyncpa [#allocation21], 1
    %2522 = vsyncpa [#allocation24], 1
    %2523 = vsyncpa [#allocation27], 1
    %2524 = vsyncpa [#allocation30], 1
    %2525 = vsyncpa [#allocation33], 1
    %2526 = vsyncpa [#allocation36], 1
    %2527 = vsyncpa [#allocation39], 1
    %2528 = vsyncpa [#allocation42], 1
    %2529 = vsyncpa [#allocation4], 1
    %s2530 = scalar_lea.sflag [#allocation4], 1
    %2531 = vsyncpa %s2530, 1

</llo_original>
